<compile_context>
chip_gen: v7x
topology: tpu7x:2x2x1
jax: 0.10.0
libtpu: 0.0.40
codegen_flags: <defaults>
</compile_context>

<pallas_src>
import functools

import jax
import jax.numpy as jnp
from jax import lax
from jax.experimental import pallas as pl
from jax.experimental.pallas import tpu as pltpu


# ------------------------------ Pallas kernel ------------------------------ #

def _bottleneck_kernel(x_ref, w1_ref, w2_ref, w3_ref, sb1_ref, sb2_ref, sb3_ref,
                       o_ref, pad_scr, slab_scr, *, W, pad_rows):
    f32 = jnp.float32
    bf16 = jnp.bfloat16
    HW = x_ref.shape[0]
    P = w1_ref.shape[1]

    # ---- conv1 (1x1) + bn1 + relu ----------------------------------------- #
    y1 = jnp.dot(x_ref[...], w1_ref[...], preferred_element_type=f32)  # (HW,P)
    y1 = jnp.maximum(y1 * sb1_ref[0:1, :] + sb1_ref[1:2, :], 0.0)

    # Zero ONLY the top/bottom halo rows (interior is fully overwritten),
    # then stash conv1's output (bf16) so every 3x3 tap is a statically
    # shifted row slice (flat shift = dy*W + dx).
    pad_scr[0:pad_rows, :] = jnp.zeros((pad_rows, P), bf16)
    pad_scr[pad_rows + HW:pad_rows + HW + pad_rows, :] = jnp.zeros(
        (pad_rows, P), bf16)
    pad_scr[pl.ds(pad_rows, HW), :] = y1.astype(bf16)

    # Horizontal-wrap validity as cheap (HW, 1) 0/1 bf16 multipliers.
    col = lax.broadcasted_iota(jnp.int32, (HW, 1), 0) % W
    mask_l = (col >= 1).astype(bf16)        # dx = -1 valid
    mask_r = (col <= W - 2).astype(bf16)    # dx = +1 valid

    # ---- conv2 (3x3, stride=1, pad=1): pack 9 taps -> single K=9P matmul --- #
    for ky in range(3):
        for kx in range(3):
            t = ky * 3 + kx
            shift = (ky - 1) * W + (kx - 1)
            v = pad_scr[pl.ds(pad_rows + shift, HW), :]          # (HW, P) bf16
            if kx == 0:
                v = v * mask_l
            elif kx == 2:
                v = v * mask_r
            slab_scr[:, t * P:(t + 1) * P] = v
    y2 = jnp.dot(slab_scr[...], w2_ref[...], preferred_element_type=f32)
    y2 = jnp.maximum(y2 * sb2_ref[0:1, :] + sb2_ref[1:2, :], 0.0).astype(bf16)

    # ---- conv3 (1x1) + bn3 + residual + relu ------------------------------- #
    y3 = jnp.dot(y2, w3_ref[...], preferred_element_type=f32)     # (HW, 4P)
    # Re-read x here (instead of reusing a value loaded before conv1) to keep
    # its live range short.
    y3 = y3 * sb3_ref[0:1, :] + sb3_ref[1:2, :] + x_ref[...].astype(f32)
    o_ref[...] = jnp.maximum(y3, 0.0).astype(o_ref.dtype)


# ------------------------------ wrapper / glue ------------------------------ #

def fold_bn(gamma, beta, mean, var, eps=1e-5):
    s = gamma / jnp.sqrt(var + eps)
    return s, beta - mean * s


def bottleneck_forward(x_nhwc, params):
    """x_nhwc: (N, H, W, Cin) with Cin == planes*4 (stride=1, no downsample)."""
    N, H, W, Cin = x_nhwc.shape
    P = params["w1_mat"].shape[1]
    Cout = params["w3_mat"].shape[1]
    assert Cout == Cin, "identity residual requires inplanes == planes*4"
    HW = H * W
    # Halo must cover |shift| <= W+1; 16-aligned for bf16 sublane packing.
    pad_rows = ((W + 1 + 15) // 16) * 16

    x2d = x_nhwc.reshape(N, HW, Cin).astype(jnp.bfloat16)
    kernel = functools.partial(_bottleneck_kernel, W=W, pad_rows=pad_rows)

    def const(shape):
        return pl.BlockSpec(shape, lambda n: (0,) * len(shape))

    out = pl.pallas_call(
        kernel,
        grid=(N,),
        in_specs=[
            pl.BlockSpec((None, HW, Cin), lambda n: (n, 0, 0)),   # x (per image)
            const((Cin, P)),                                      # w1
            const((9 * P, P)),                                    # w2 packed taps
            const((P, Cout)),                                     # w3
            const((2, P)),                                        # bn1 scale/bias
            const((2, P)),                                        # bn2 scale/bias
            const((2, Cout)),                                     # bn3 scale/bias
        ],
        out_specs=pl.BlockSpec((None, HW, Cout), lambda n: (n, 0, 0)),
        out_shape=jax.ShapeDtypeStruct((N, HW, Cout), jnp.bfloat16),
        scratch_shapes=[
            pltpu.VMEM((HW + 2 * pad_rows, P), jnp.bfloat16),     # padded conv1 out
            pltpu.VMEM((HW, 9 * P), jnp.bfloat16),                # packed 9-tap slab
        ],
        compiler_params=pltpu.CompilerParams(
            dimension_semantics=("parallel",),
            vmem_limit_bytes=48 * 1024 * 1024),
    )(x2d, params["w1_mat"], params["w2_packed"], params["w3_mat"],
      params["sb1"], params["sb2"], params["sb3"])
    return out.reshape(N, H, W, Cout)


# -------------------------------- reference -------------------------------- #

def reference_forward(x_nhwc, tparams, eps=1e-5):
    def conv(x, w_oihw, pad):
        w_hwio = jnp.transpose(w_oihw, (2, 3, 1, 0))
        return lax.conv_general_dilated(
            x, w_hwio, window_strides=(1, 1),
            padding=[(pad, pad), (pad, pad)],
            dimension_numbers=("NHWC", "HWIO", "NHWC"))

    def bn(x, stats):
        gamma, beta, mean, var = stats
        return (x - mean) / jnp.sqrt(var + eps) * gamma + beta

    out = jax.nn.relu(bn(conv(x_nhwc, tparams["w1"], 0), tparams["bn1"]))
    out = jax.nn.relu(bn(conv(out,     tparams["w2"], 1), tparams["bn2"]))
    out = bn(conv(out, tparams["w3"], 0), tparams["bn3"])
    return jax.nn.relu(out + x_nhwc)


# ---------------------------------- main ------------------------------------ #

def make_params(key, inplanes, planes):
    ks = jax.random.split(key, 8)
    # PyTorch-layout (OIHW) conv weights, deterministic synthetic init.
    w1 = 0.1 * jax.random.normal(ks[0], (planes, inplanes, 1, 1), jnp.float32)
    w2 = 0.1 * jax.random.normal(ks[1], (planes, planes, 3, 3), jnp.float32)
    w3 = 0.1 * jax.random.normal(ks[2], (planes * 4, planes, 1, 1), jnp.float32)

    def bn_stats(k, c):
        k1, k2, k3, k4 = jax.random.split(k, 4)
        gamma = jax.random.uniform(k1, (c,), jnp.float32, 0.5, 1.5)
        beta = 0.1 * jax.random.normal(k2, (c,), jnp.float32)
        mean = 0.1 * jax.random.normal(k3, (c,), jnp.float32)
        var = jax.random.uniform(k4, (c,), jnp.float32, 0.5, 1.5)
        return (gamma, beta, mean, var)

    bn1 = bn_stats(ks[3], planes)
    bn2 = bn_stats(ks[4], planes)
    bn3 = bn_stats(ks[5], planes * 4)

    torch_params = {"w1": w1, "w2": w2, "w3": w3,
                    "bn1": bn1, "bn2": bn2, "bn3": bn3}
    kernel_params = {
        # matmul layouts (Cin, Cout); conv2 packed as (tap*cin, cout) with
        # tap = ky*3+kx major, matching the in-kernel slab column order.
        "w1_mat": jnp.transpose(w1[:, :, 0, 0], (1, 0)).astype(jnp.bfloat16),
        "w2_packed": jnp.transpose(w2, (2, 3, 1, 0)).reshape(
            9 * planes, planes).astype(jnp.bfloat16),
        "w3_mat": jnp.transpose(w3[:, :, 0, 0], (1, 0)).astype(jnp.bfloat16),
        "sb1": jnp.stack(fold_bn(*bn1), axis=0).astype(jnp.float32),
        "sb2": jnp.stack(fold_bn(*bn2), axis=0).astype(jnp.float32),
        "sb3": jnp.stack(fold_bn(*bn3), axis=0).astype(jnp.float32),
    }
    return torch_params, kernel_params


if __name__ == "__main__":
    planes = 4
    inplanes = planes * 4            # required for identity residual (no downsample)
    N, H, W = 2, 16, 16

    key = jax.random.PRNGKey(0)
    k_x, k_p = jax.random.split(key)
    torch_params, kernel_params = make_params(k_p, inplanes, planes)

    # PyTorch semantics are NCHW; build x as NCHW and convert to NHWC.
    x_nchw = jax.random.normal(k_x, (N, inplanes, H, W), jnp.float32)
    x_nhwc = jnp.transpose(x_nchw, (0, 2, 3, 1))

    out = bottleneck_forward(x_nhwc, kernel_params)
    out = jax.block_until_ready(out)

    ref = reference_forward(x_nhwc, torch_params)
    ref = jax.block_until_ready(ref)

    assert out.shape == (N, H, W, inplanes)
    # bf16 matmuls / bf16 stores vs f32 reference -> looser tolerance.
    if not jnp.allclose(out.astype(jnp.float32), ref, rtol=2e-2, atol=2e-2):
        raise AssertionError("Pallas Bottleneck output mismatch vs reference")
    print("KERNEL_OK")
</pallas_src>

<mosaic_0001>
module attributes {stable_mosaic.version = 11 : i64} {
  func.func @_bottleneck_kernel(%arg0: i32, %arg1: memref<1x256x16xbf16, #tpu.memory_space<vmem>>, %arg2: memref<16x4xbf16, #tpu.memory_space<vmem>>, %arg3: memref<36x4xbf16, #tpu.memory_space<vmem>>, %arg4: memref<4x16xbf16, #tpu.memory_space<vmem>>, %arg5: memref<2x4xf32, #tpu.memory_space<vmem>>, %arg6: memref<2x4xf32, #tpu.memory_space<vmem>>, %arg7: memref<2x16xf32, #tpu.memory_space<vmem>>, %arg8: memref<1x256x16xbf16, #tpu.memory_space<vmem>>, %arg9: memref<320x4xbf16, #tpu.memory_space<vmem>>, %arg10: memref<256x36xbf16, #tpu.memory_space<vmem>>) attributes {dimension_semantics = [#tpu.dimension_semantics<parallel>], iteration_bounds = array<i64: 2>, scalar_prefetch = 0 : i64, scratch_operands = 2 : i64, tpu.core_type = #tpu.core_type<tc>, window_params = [{transform_indices = @transform_0, window_bounds = array<i64: 1, 256, 16>}, {pipeline_mode = #tpu.pipeline_mode<synchronous>, transform_indices = @transform_1, window_bounds = array<i64: 16, 4>}, {pipeline_mode = #tpu.pipeline_mode<synchronous>, transform_indices = @transform_2, window_bounds = array<i64: 36, 4>}, {pipeline_mode = #tpu.pipeline_mode<synchronous>, transform_indices = @transform_3, window_bounds = array<i64: 4, 16>}, {pipeline_mode = #tpu.pipeline_mode<synchronous>, transform_indices = @transform_4, window_bounds = array<i64: 2, 4>}, {pipeline_mode = #tpu.pipeline_mode<synchronous>, transform_indices = @transform_5, window_bounds = array<i64: 2, 4>}, {pipeline_mode = #tpu.pipeline_mode<synchronous>, transform_indices = @transform_6, window_bounds = array<i64: 2, 16>}, {transform_indices = @transform_7, window_bounds = array<i64: 1, 256, 16>}]} {
    %c0 = arith.constant 0 : index
    %c0_0 = arith.constant 0 : index
    %c0_1 = arith.constant 0 : index
    %0 = vector.load %arg1[%c0, %c0_0, %c0_1] : memref<1x256x16xbf16, #tpu.memory_space<vmem>>, vector<1x256x16xbf16>
    %1 = vector.shape_cast %0 : vector<1x256x16xbf16> to vector<256x16xbf16>
    %c0_2 = arith.constant 0 : index
    %c0_3 = arith.constant 0 : index
    %2 = vector.load %arg2[%c0_2, %c0_3] : memref<16x4xbf16, #tpu.memory_space<vmem>>, vector<16x4xbf16>
    %cst = arith.constant dense<0.000000e+00> : vector<256x4xf32>
    %3 = tpu.matmul %1, %2, %cst {dimension_numbers = #tpu.dot_dimension_numbers<[1], [0], [0], [1], [0, 0, 1, 1], [], []>} : vector<256x16xbf16>, vector<16x4xbf16>, vector<256x4xf32> -> vector<256x4xf32>
    %c0_4 = arith.constant 0 : index
    %c0_5 = arith.constant 0 : index
    %4 = vector.load %arg5[%c0_4, %c0_5] : memref<2x4xf32, #tpu.memory_space<vmem>>, vector<1x4xf32>
    %5 = vector.broadcast %4 : vector<1x4xf32> to vector<256x4xf32>
    %6 = arith.mulf %3, %5 : vector<256x4xf32>
    %c1 = arith.constant 1 : index
    %c0_6 = arith.constant 0 : index
    %7 = vector.load %arg5[%c1, %c0_6] : memref<2x4xf32, #tpu.memory_space<vmem>>, vector<1x4xf32>
    %8 = vector.broadcast %7 : vector<1x4xf32> to vector<256x4xf32>
    %9 = arith.addf %6, %8 : vector<256x4xf32>
    %cst_7 = arith.constant 0.000000e+00 : f32
    %10 = vector.broadcast %cst_7 : f32 to vector<256x4xf32>
    %11 = arith.maximumf %9, %10 : vector<256x4xf32>
    %cst_8 = arith.constant 0.000000e+00 : bf16
    %12 = vector.broadcast %cst_8 : bf16 to vector<32x4xbf16>
    %c0_9 = arith.constant 0 : index
    %c0_10 = arith.constant 0 : index
    %13 = vector.load %arg9[%c0_9, %c0_10] : memref<320x4xbf16, #tpu.memory_space<vmem>>, vector<32x4xbf16>
    tpu.vector_store %arg9[%c0_9, %c0_10], %12 {strides = array<i32>} : memref<320x4xbf16, #tpu.memory_space<vmem>>, vector<32x4xbf16>,
    %cst_11 = arith.constant 0.000000e+00 : bf16
    %14 = vector.broadcast %cst_11 : bf16 to vector<32x4xbf16>
    %c288 = arith.constant 288 : index
    %c0_12 = arith.constant 0 : index
    %15 = vector.load %arg9[%c288, %c0_12] : memref<320x4xbf16, #tpu.memory_space<vmem>>, vector<32x4xbf16>
    tpu.vector_store %arg9[%c288, %c0_12], %14 {strides = array<i32>} : memref<320x4xbf16, #tpu.memory_space<vmem>>, vector<32x4xbf16>,
    %16 = arith.truncf %11 : vector<256x4xf32> to vector<256x4xbf16>
    %c32 = arith.constant 32 : index
    %c0_13 = arith.constant 0 : index
    %17 = vector.load %arg9[%c32, %c0_13] : memref<320x4xbf16, #tpu.memory_space<vmem>>, vector<256x4xbf16>
    tpu.vector_store %arg9[%c32, %c0_13], %16 {strides = array<i32>} : memref<320x4xbf16, #tpu.memory_space<vmem>>, vector<256x4xbf16>,
    %18 = tpu.iota {dimensions = array<i32: 0>} : vector<256x1xi32>
    %c16_i32 = arith.constant 16 : i32
    %c0_i32 = arith.constant 0 : i32
    %19 = arith.cmpi eq, %c16_i32, %c0_i32 : i32
    %c1_i32 = arith.constant 1 : i32
    %20 = arith.select %19, %c1_i32, %c16_i32 : i32
    %21 = vector.broadcast %20 : i32 to vector<256x1xi32>
    %22 = arith.remsi %18, %21 : vector<256x1xi32>
    %c0_i32_14 = arith.constant 0 : i32
    %23 = vector.broadcast %c0_i32_14 : i32 to vector<256x1xi32>
    %24 = arith.cmpi ne, %22, %23 : vector<256x1xi32>
    %c0_i32_15 = arith.constant 0 : i32
    %25 = vector.broadcast %c0_i32_15 : i32 to vector<256x1xi32>
    %26 = arith.cmpi slt, %22, %25 : vector<256x1xi32>
    %c0_i32_16 = arith.constant 0 : i32
    %27 = arith.cmpi slt, %20, %c0_i32_16 : i32
    %28 = vector.broadcast %27 : i1 to vector<256x1xi1>
    %29 = vector.broadcast %28 : vector<256x1xi1> to vector<256x1xi1>
    %30 = arith.xori %26, %29 : vector<256x1xi1>
    %31 = arith.andi %30, %24 : vector<256x1xi1>
    %32 = vector.broadcast %20 : i32 to vector<256x1xi32>
    %33 = arith.addi %22, %32 : vector<256x1xi32>
    %34 = arith.select %31, %33, %22 : vector<256x1xi1>, vector<256x1xi32>
    %c1_i32_17 = arith.constant 1 : i32
    %35 = vector.broadcast %c1_i32_17 : i32 to vector<256x1xi32>
    %36 = arith.cmpi sge, %34, %35 : vector<256x1xi32>
    %37 = arith.extui %36 : vector<256x1xi1> to vector<256x1xi32>
    %38 = arith.sitofp %37 : vector<256x1xi32> to vector<256x1xf32>
    %39 = arith.truncf %38 : vector<256x1xf32> to vector<256x1xbf16>
    %c14_i32 = arith.constant 14 : i32
    %40 = vector.broadcast %c14_i32 : i32 to vector<256x1xi32>
    %41 = arith.cmpi sle, %34, %40 : vector<256x1xi32>
    %42 = arith.extui %41 : vector<256x1xi1> to vector<256x1xi32>
    %43 = arith.sitofp %42 : vector<256x1xi32> to vector<256x1xf32>
    %44 = arith.truncf %43 : vector<256x1xf32> to vector<256x1xbf16>
    %c15 = arith.constant 15 : index
    %c0_18 = arith.constant 0 : index
    %45 = vector.load %arg9[%c15, %c0_18] : memref<320x4xbf16, #tpu.memory_space<vmem>>, vector<256x4xbf16>
    %46 = vector.broadcast %39 : vector<256x1xbf16> to vector<256x4xbf16>
    %47 = arith.mulf %45, %46 : vector<256x4xbf16>
    %c0_19 = arith.constant 0 : index
    %c0_20 = arith.constant 0 : index
    %48 = vector.load %arg10[%c0_19, %c0_20] : memref<256x36xbf16, #tpu.memory_space<vmem>>, vector<256x4xbf16>
    tpu.vector_store %arg10[%c0_19, %c0_20], %47 {strides = array<i32>} : memref<256x36xbf16, #tpu.memory_space<vmem>>, vector<256x4xbf16>,
    %c16 = arith.constant 16 : index
    %c0_21 = arith.constant 0 : index
    %49 = vector.load %arg9[%c16, %c0_21] : memref<320x4xbf16, #tpu.memory_space<vmem>>, vector<256x4xbf16>
    %c0_22 = arith.constant 0 : index
    %c4 = arith.constant 4 : index
    %50 = vector.load %arg10[%c0_22, %c4] : memref<256x36xbf16, #tpu.memory_space<vmem>>, vector<256x4xbf16>
    tpu.vector_store %arg10[%c0_22, %c4], %49 {strides = array<i32>} : memref<256x36xbf16, #tpu.memory_space<vmem>>, vector<256x4xbf16>,
    %c17 = arith.constant 17 : index
    %c0_23 = arith.constant 0 : index
    %51 = vector.load %arg9[%c17, %c0_23] : memref<320x4xbf16, #tpu.memory_space<vmem>>, vector<256x4xbf16>
    %52 = vector.broadcast %44 : vector<256x1xbf16> to vector<256x4xbf16>
    %53 = arith.mulf %51, %52 : vector<256x4xbf16>
    %c0_24 = arith.constant 0 : index
    %c8 = arith.constant 8 : index
    %54 = vector.load %arg10[%c0_24, %c8] : memref<256x36xbf16, #tpu.memory_space<vmem>>, vector<256x4xbf16>
    tpu.vector_store %arg10[%c0_24, %c8], %53 {strides = array<i32>} : memref<256x36xbf16, #tpu.memory_space<vmem>>, vector<256x4xbf16>,
    %c31 = arith.constant 31 : index
    %c0_25 = arith.constant 0 : index
    %55 = vector.load %arg9[%c31, %c0_25] : memref<320x4xbf16, #tpu.memory_space<vmem>>, vector<256x4xbf16>
    %56 = vector.broadcast %39 : vector<256x1xbf16> to vector<256x4xbf16>
    %57 = arith.mulf %55, %56 : vector<256x4xbf16>
    %c0_26 = arith.constant 0 : index
    %c12 = arith.constant 12 : index
    %58 = vector.load %arg10[%c0_26, %c12] : memref<256x36xbf16, #tpu.memory_space<vmem>>, vector<256x4xbf16>
    tpu.vector_store %arg10[%c0_26, %c12], %57 {strides = array<i32>} : memref<256x36xbf16, #tpu.memory_space<vmem>>, vector<256x4xbf16>,
    %c32_27 = arith.constant 32 : index
    %c0_28 = arith.constant 0 : index
    %59 = vector.load %arg9[%c32_27, %c0_28] : memref<320x4xbf16, #tpu.memory_space<vmem>>, vector<256x4xbf16>
    %c0_29 = arith.constant 0 : index
    %c16_30 = arith.constant 16 : index
    %60 = vector.load %arg10[%c0_29, %c16_30] : memref<256x36xbf16, #tpu.memory_space<vmem>>, vector<256x4xbf16>
    tpu.vector_store %arg10[%c0_29, %c16_30], %59 {strides = array<i32>} : memref<256x36xbf16, #tpu.memory_space<vmem>>, vector<256x4xbf16>,
    %c33 = arith.constant 33 : index
    %c0_31 = arith.constant 0 : index
    %61 = vector.load %arg9[%c33, %c0_31] : memref<320x4xbf16, #tpu.memory_space<vmem>>, vector<256x4xbf16>
    %62 = vector.broadcast %44 : vector<256x1xbf16> to vector<256x4xbf16>
    %63 = arith.mulf %61, %62 : vector<256x4xbf16>
    %c0_32 = arith.constant 0 : index
    %c20 = arith.constant 20 : index
    %64 = vector.load %arg10[%c0_32, %c20] : memref<256x36xbf16, #tpu.memory_space<vmem>>, vector<256x4xbf16>
    tpu.vector_store %arg10[%c0_32, %c20], %63 {strides = array<i32>} : memref<256x36xbf16, #tpu.memory_space<vmem>>, vector<256x4xbf16>,
    %c47 = arith.constant 47 : index
    %c0_33 = arith.constant 0 : index
    %65 = vector.load %arg9[%c47, %c0_33] : memref<320x4xbf16, #tpu.memory_space<vmem>>, vector<256x4xbf16>
    %66 = vector.broadcast %39 : vector<256x1xbf16> to vector<256x4xbf16>
    %67 = arith.mulf %65, %66 : vector<256x4xbf16>
    %c0_34 = arith.constant 0 : index
    %c24 = arith.constant 24 : index
    %68 = vector.load %arg10[%c0_34, %c24] : memref<256x36xbf16, #tpu.memory_space<vmem>>, vector<256x4xbf16>
    tpu.vector_store %arg10[%c0_34, %c24], %67 {strides = array<i32>} : memref<256x36xbf16, #tpu.memory_space<vmem>>, vector<256x4xbf16>,
    %c48 = arith.constant 48 : index
    %c0_35 = arith.constant 0 : index
    %69 = vector.load %arg9[%c48, %c0_35] : memref<320x4xbf16, #tpu.memory_space<vmem>>, vector<256x4xbf16>
    %c0_36 = arith.constant 0 : index
    %c28 = arith.constant 28 : index
    %70 = vector.load %arg10[%c0_36, %c28] : memref<256x36xbf16, #tpu.memory_space<vmem>>, vector<256x4xbf16>
    tpu.vector_store %arg10[%c0_36, %c28], %69 {strides = array<i32>} : memref<256x36xbf16, #tpu.memory_space<vmem>>, vector<256x4xbf16>,
    %c49 = arith.constant 49 : index
    %c0_37 = arith.constant 0 : index
    %71 = vector.load %arg9[%c49, %c0_37] : memref<320x4xbf16, #tpu.memory_space<vmem>>, vector<256x4xbf16>
    %72 = vector.broadcast %44 : vector<256x1xbf16> to vector<256x4xbf16>
    %73 = arith.mulf %71, %72 : vector<256x4xbf16>
    %c0_38 = arith.constant 0 : index
    %c32_39 = arith.constant 32 : index
    %74 = vector.load %arg10[%c0_38, %c32_39] : memref<256x36xbf16, #tpu.memory_space<vmem>>, vector<256x4xbf16>
    tpu.vector_store %arg10[%c0_38, %c32_39], %73 {strides = array<i32>} : memref<256x36xbf16, #tpu.memory_space<vmem>>, vector<256x4xbf16>,
    %c0_40 = arith.constant 0 : index
    %c0_41 = arith.constant 0 : index
    %75 = vector.load %arg10[%c0_40, %c0_41] : memref<256x36xbf16, #tpu.memory_space<vmem>>, vector<256x36xbf16>
    %c0_42 = arith.constant 0 : index
    %c0_43 = arith.constant 0 : index
    %76 = vector.load %arg3[%c0_42, %c0_43] : memref<36x4xbf16, #tpu.memory_space<vmem>>, vector<36x4xbf16>
    %cst_44 = arith.constant dense<0.000000e+00> : vector<256x4xf32>
    %77 = tpu.matmul %75, %76, %cst_44 {dimension_numbers = #tpu.dot_dimension_numbers<[1], [0], [0], [1], [0, 0, 1, 1], [], []>} : vector<256x36xbf16>, vector<36x4xbf16>, vector<256x4xf32> -> vector<256x4xf32>
    %c0_45 = arith.constant 0 : index
    %c0_46 = arith.constant 0 : index
    %78 = vector.load %arg6[%c0_45, %c0_46] : memref<2x4xf32, #tpu.memory_space<vmem>>, vector<1x4xf32>
    %79 = vector.broadcast %78 : vector<1x4xf32> to vector<256x4xf32>
    %80 = arith.mulf %77, %79 : vector<256x4xf32>
    %c1_47 = arith.constant 1 : index
    %c0_48 = arith.constant 0 : index
    %81 = vector.load %arg6[%c1_47, %c0_48] : memref<2x4xf32, #tpu.memory_space<vmem>>, vector<1x4xf32>
    %82 = vector.broadcast %81 : vector<1x4xf32> to vector<256x4xf32>
    %83 = arith.addf %80, %82 : vector<256x4xf32>
    %cst_49 = arith.constant 0.000000e+00 : f32
    %84 = vector.broadcast %cst_49 : f32 to vector<256x4xf32>
    %85 = arith.maximumf %83, %84 : vector<256x4xf32>
    %86 = arith.truncf %85 : vector<256x4xf32> to vector<256x4xbf16>
    %c0_50 = arith.constant 0 : index
    %c0_51 = arith.constant 0 : index
    %87 = vector.load %arg4[%c0_50, %c0_51] : memref<4x16xbf16, #tpu.memory_space<vmem>>, vector<4x16xbf16>
    %cst_52 = arith.constant dense<0.000000e+00> : vector<256x16xf32>
    %88 = tpu.matmul %86, %87, %cst_52 {dimension_numbers = #tpu.dot_dimension_numbers<[1], [0], [0], [1], [0, 0, 1, 1], [], []>} : vector<256x4xbf16>, vector<4x16xbf16>, vector<256x16xf32> -> vector<256x16xf32>
    %c0_53 = arith.constant 0 : index
    %c0_54 = arith.constant 0 : index
    %89 = vector.load %arg7[%c0_53, %c0_54] : memref<2x16xf32, #tpu.memory_space<vmem>>, vector<1x16xf32>
    %90 = vector.broadcast %89 : vector<1x16xf32> to vector<256x16xf32>
    %91 = arith.mulf %88, %90 : vector<256x16xf32>
    %c1_55 = arith.constant 1 : index
    %c0_56 = arith.constant 0 : index
    %92 = vector.load %arg7[%c1_55, %c0_56] : memref<2x16xf32, #tpu.memory_space<vmem>>, vector<1x16xf32>
    %93 = vector.broadcast %92 : vector<1x16xf32> to vector<256x16xf32>
    %94 = arith.addf %91, %93 : vector<256x16xf32>
    %c0_57 = arith.constant 0 : index
    %c0_58 = arith.constant 0 : index
    %c0_59 = arith.constant 0 : index
    %95 = vector.load %arg1[%c0_57, %c0_58, %c0_59] : memref<1x256x16xbf16, #tpu.memory_space<vmem>>, vector<1x256x16xbf16>
    %96 = vector.shape_cast %95 : vector<1x256x16xbf16> to vector<256x16xbf16>
    %97 = arith.extf %96 : vector<256x16xbf16> to vector<256x16xf32>
    %98 = arith.addf %94, %97 : vector<256x16xf32>
    %cst_60 = arith.constant 0.000000e+00 : f32
    %99 = vector.broadcast %cst_60 : f32 to vector<256x16xf32>
    %100 = arith.maximumf %98, %99 : vector<256x16xf32>
    %101 = arith.truncf %100 : vector<256x16xf32> to vector<256x16xbf16>
    %c0_61 = arith.constant 0 : index
    %c0_62 = arith.constant 0 : index
    %c0_63 = arith.constant 0 : index
    %102 = vector.load %arg8[%c0_61, %c0_62, %c0_63] : memref<1x256x16xbf16, #tpu.memory_space<vmem>>, vector<1x256x16xbf16>
    %103 = vector.shape_cast %102 : vector<1x256x16xbf16> to vector<256x16xbf16>
    %104 = vector.shape_cast %101 : vector<256x16xbf16> to vector<1x256x16xbf16>
    tpu.vector_store %arg8[%c0_61, %c0_62, %c0_63], %104 {strides = array<i32>} : memref<1x256x16xbf16, #tpu.memory_space<vmem>>, vector<1x256x16xbf16>,
    return
  }
  func.func @transform_0(%arg0: i32) -> (i32, i32, i32) {
    %c0_i32 = arith.constant 0 : i32
    %c0_i32_0 = arith.constant 0 : i32
    %c0_i32_1 = arith.constant 0 : i32
    return %arg0, %c0_i32, %c0_i32_0 : i32, i32, i32
  }
  func.func @transform_1(%arg0: i32) -> (i32, i32) {
    %c0_i32 = arith.constant 0 : i32
    %c0_i32_0 = arith.constant 0 : i32
    %c0_i32_1 = arith.constant 0 : i32
    return %c0_i32, %c0_i32_0 : i32, i32
  }
  func.func @transform_2(%arg0: i32) -> (i32, i32) {
    %c0_i32 = arith.constant 0 : i32
    %c0_i32_0 = arith.constant 0 : i32
    %c0_i32_1 = arith.constant 0 : i32
    return %c0_i32, %c0_i32_0 : i32, i32
  }
  func.func @transform_3(%arg0: i32) -> (i32, i32) {
    %c0_i32 = arith.constant 0 : i32
    %c0_i32_0 = arith.constant 0 : i32
    %c0_i32_1 = arith.constant 0 : i32
    return %c0_i32, %c0_i32_0 : i32, i32
  }
  func.func @transform_4(%arg0: i32) -> (i32, i32) {
    %c0_i32 = arith.constant 0 : i32
    %c0_i32_0 = arith.constant 0 : i32
    %c0_i32_1 = arith.constant 0 : i32
    return %c0_i32, %c0_i32_0 : i32, i32
  }
  func.func @transform_5(%arg0: i32) -> (i32, i32) {
    %c0_i32 = arith.constant 0 : i32
    %c0_i32_0 = arith.constant 0 : i32
    %c0_i32_1 = arith.constant 0 : i32
    return %c0_i32, %c0_i32_0 : i32, i32
  }
  func.func @transform_6(%arg0: i32) -> (i32, i32) {
    %c0_i32 = arith.constant 0 : i32
    %c0_i32_0 = arith.constant 0 : i32
    %c0_i32_1 = arith.constant 0 : i32
    return %c0_i32, %c0_i32_0 : i32, i32
  }
  func.func @transform_7(%arg0: i32) -> (i32, i32, i32) {
    %c0_i32 = arith.constant 0 : i32
    %c0_i32_0 = arith.constant 0 : i32
    %c0_i32_1 = arith.constant 0 : i32
    return %arg0, %c0_i32, %c0_i32_0 : i32, i32, i32
  }
}

</mosaic_0001>

<llo_original>
// kernel: tpu_custom_call.1
$region0: #{tpu_custom_call.1}
  #allocation0 [shape = 'u32[]', space=smem, size = 0x4, offset = 0x4, fixed_abs, tag = 'smem constant byte address 0x4 - core index']
  #allocation1 [shape = 'u32[144,128]{1,0:T(1,128)}', space=vmem, size = 0x12000, scoped, tag = 'internal scratch']
  #allocation2 [shape = 'bf16[320,4]{1,0:T(16,128)(2,1)}', space=vmem, size = 0x14000, scoped, tag = 'scratch operand']
  #allocation3 [shape = 'bf16[256,36]{1,0:T(16,128)(2,1)}', space=vmem, size = 0x10000, scoped, tag = 'scratch operand']
  %s0 = inlined_call_operand.vmem [shape: bf16[2,256,16], index: 0, kind: input, shape index: {}]
  %s1 = inlined_call_operand.vmem [shape: bf16[16,4], index: 1, kind: input, shape index: {}]
  %s2 = inlined_call_operand.vmem [shape: bf16[36,4], index: 2, kind: input, shape index: {}]
  %s3 = inlined_call_operand.vmem [shape: bf16[4,16], index: 3, kind: input, shape index: {}]
  %s4 = inlined_call_operand.vmem [shape: f32[2,4], index: 4, kind: input, shape index: {}]
  %s5 = inlined_call_operand.vmem [shape: f32[2,4], index: 5, kind: input, shape index: {}]
  %s6 = inlined_call_operand.vmem [shape: f32[2,16], index: 6, kind: input, shape index: {}]
  %s7 = inlined_call_operand.vmem [shape: bf16[2,256,16], index: 7, kind: output, shape index: {}]
  %s8 = sld [smem:[#allocation0]]
  $region61: #{tpu_custom_call.1} parent=0
    _
  %s10 = ssub.s32 1, %s8
  %s11 = scalar_select 0, %s10, %s8
  loop: start=0, step=1, limit=4
  $region2: #{tpu_custom_call.1} parent=0 // loop_pre_header
    _
  $region3: #{tpu_custom_call.1} parent=0 // loop_header
    %s13 = sphi 0, %s17
    %p14 = scmp.ge.s32.totalorder %s13, 4
    %s23 = sphi 0, %s25
    %s26 = sphi 0, %s23
    %s27 = sphi 0, %s26
    %s43 = sphi 0, %s27
    %s47 = sphi 0, %s47
    %s49 = sphi 0, %s47
    %s50 = sphi 0, %s49
    %s64 = sphi 0, %s50
    %s68 = sphi 0, %s68
    %s70 = sphi 0, %s68
    %s71 = sphi 0, %s70
    %s85 = sphi 0, %s71
    %s89 = sphi 0, %s89
    %s91 = sphi 0, %s89
    %s92 = sphi 0, %s91
    %s106 = sphi 0, %s92
    %s110 = sphi 0, %s110
    %s112 = sphi 0, %s110
    %s113 = sphi 0, %s112
    %s127 = sphi 0, %s113
    %s131 = sphi 0, %s131
    %s133 = sphi 0, %s131
    %s134 = sphi 0, %s133
    %s148 = sphi 0, %s134
    %s152 = sphi 0, %s152
    %s154 = sphi 0, %s152
    %s155 = sphi 0, %s154
    %s169 = sphi 0, %s155
    %s175 = sphi 0, %s177
    %s178 = sphi 0, %s175
    %s179 = sphi 0, %s178
    %s195 = sphi 0, %s179
  $region4: #{tpu_custom_call.1} parent=0 // loop_header_branch
    %16 = sbr.rel (%p14) target = $region8
  $region5: #{tpu_custom_call.1} parent=0 // loop_body
    %s18 = ssub.s32 %s13, 1
    %s19 = ssub.s32 %s13, 2
    %s20 = sadd.s32 %s13, 1
    %s21 = ssub.s32 %s13, %s20
    %p22 = scmp.eq.s32.totalorder %s21, 0
    %s24 = sadd.s32 %s23, 1
    %s25 = scalar_select %p22, %s23, %s24
    %p28 = pneg %p22
    %p29 = scmp.eq.s32.totalorder %s13, 1
    %p30 = por %p28, %p29
    %p31 = scmp.ne.s32.totalorder %s23, %s26
    %p32 = scmp.eq.s32.totalorder %s13, 0
    %p33 = por %p31, %p32
    %p34 = scmp.ne.s32.totalorder %s23, %s26
    %p35 = scmp.eq.s32.totalorder %s18, 1
    %p36 = por %p34, %p35
    %p37 = scmp.ne.s32.totalorder %s26, %s27
    %p38 = scmp.eq.s32.totalorder %s18, 0
    %p39 = por %p37, %p38
    %p40 = scmp.ne.s32.totalorder %s26, %s27
    %p41 = scmp.eq.s32.totalorder %s19, 1
    %p42 = por %p40, %p41
    %p44 = scmp.ne.s32.totalorder %s27, %s43
    %p45 = scmp.eq.s32.totalorder %s19, 0
    %p46 = por %p44, %p45
    %s48 = sadd.s32 %s47, 1
    %p51 = scmp.eq.s32.totalorder %s13, 1
    %p52 = scmp.ne.s32.totalorder %s47, %s49
    %p53 = scmp.eq.s32.totalorder %s13, 0
    %p54 = por %p52, %p53
    %p55 = scmp.ne.s32.totalorder %s47, %s49
    %p56 = scmp.eq.s32.totalorder %s18, 1
    %p57 = por %p55, %p56
    %p58 = scmp.ne.s32.totalorder %s49, %s50
    %p59 = scmp.eq.s32.totalorder %s18, 0
    %p60 = por %p58, %p59
    %p61 = scmp.ne.s32.totalorder %s49, %s50
    %p62 = scmp.eq.s32.totalorder %s19, 1
    %p63 = por %p61, %p62
    %p65 = scmp.ne.s32.totalorder %s50, %s64
    %p66 = scmp.eq.s32.totalorder %s19, 0
    %p67 = por %p65, %p66
    %s69 = sadd.s32 %s68, 1
    %p72 = scmp.eq.s32.totalorder %s13, 1
    %p73 = scmp.ne.s32.totalorder %s68, %s70
    %p74 = scmp.eq.s32.totalorder %s13, 0
    %p75 = por %p73, %p74
    %p76 = scmp.ne.s32.totalorder %s68, %s70
    %p77 = scmp.eq.s32.totalorder %s18, 1
    %p78 = por %p76, %p77
    %p79 = scmp.ne.s32.totalorder %s70, %s71
    %p80 = scmp.eq.s32.totalorder %s18, 0
    %p81 = por %p79, %p80
    %p82 = scmp.ne.s32.totalorder %s70, %s71
    %p83 = scmp.eq.s32.totalorder %s19, 1
    %p84 = por %p82, %p83
    %p86 = scmp.ne.s32.totalorder %s71, %s85
    %p87 = scmp.eq.s32.totalorder %s19, 0
    %p88 = por %p86, %p87
    %s90 = sadd.s32 %s89, 1
    %p93 = scmp.eq.s32.totalorder %s13, 1
    %p94 = scmp.ne.s32.totalorder %s89, %s91
    %p95 = scmp.eq.s32.totalorder %s13, 0
    %p96 = por %p94, %p95
    %p97 = scmp.ne.s32.totalorder %s89, %s91
    %p98 = scmp.eq.s32.totalorder %s18, 1
    %p99 = por %p97, %p98
    %p100 = scmp.ne.s32.totalorder %s91, %s92
    %p101 = scmp.eq.s32.totalorder %s18, 0
    %p102 = por %p100, %p101
    %p103 = scmp.ne.s32.totalorder %s91, %s92
    %p104 = scmp.eq.s32.totalorder %s19, 1
    %p105 = por %p103, %p104
    %p107 = scmp.ne.s32.totalorder %s92, %s106
    %p108 = scmp.eq.s32.totalorder %s19, 0
    %p109 = por %p107, %p108
    %s111 = sadd.s32 %s110, 1
    %p114 = scmp.eq.s32.totalorder %s13, 1
    %p115 = scmp.ne.s32.totalorder %s110, %s112
    %p116 = scmp.eq.s32.totalorder %s13, 0
    %p117 = por %p115, %p116
    %p118 = scmp.ne.s32.totalorder %s110, %s112
    %p119 = scmp.eq.s32.totalorder %s18, 1
    %p120 = por %p118, %p119
    %p121 = scmp.ne.s32.totalorder %s112, %s113
    %p122 = scmp.eq.s32.totalorder %s18, 0
    %p123 = por %p121, %p122
    %p124 = scmp.ne.s32.totalorder %s112, %s113
    %p125 = scmp.eq.s32.totalorder %s19, 1
    %p126 = por %p124, %p125
    %p128 = scmp.ne.s32.totalorder %s113, %s127
    %p129 = scmp.eq.s32.totalorder %s19, 0
    %p130 = por %p128, %p129
    %s132 = sadd.s32 %s131, 1
    %p135 = scmp.eq.s32.totalorder %s13, 1
    %p136 = scmp.ne.s32.totalorder %s131, %s133
    %p137 = scmp.eq.s32.totalorder %s13, 0
    %p138 = por %p136, %p137
    %p139 = scmp.ne.s32.totalorder %s131, %s133
    %p140 = scmp.eq.s32.totalorder %s18, 1
    %p141 = por %p139, %p140
    %p142 = scmp.ne.s32.totalorder %s133, %s134
    %p143 = scmp.eq.s32.totalorder %s18, 0
    %p144 = por %p142, %p143
    %p145 = scmp.ne.s32.totalorder %s133, %s134
    %p146 = scmp.eq.s32.totalorder %s19, 1
    %p147 = por %p145, %p146
    %p149 = scmp.ne.s32.totalorder %s134, %s148
    %p150 = scmp.eq.s32.totalorder %s19, 0
    %p151 = por %p149, %p150
    %s153 = sadd.s32 %s152, 1
    %p156 = scmp.eq.s32.totalorder %s13, 1
    %p157 = scmp.ne.s32.totalorder %s152, %s154
    %p158 = scmp.eq.s32.totalorder %s13, 0
    %p159 = por %p157, %p158
    %p160 = scmp.ne.s32.totalorder %s152, %s154
    %p161 = scmp.eq.s32.totalorder %s18, 1
    %p162 = por %p160, %p161
    %p163 = scmp.ne.s32.totalorder %s154, %s155
    %p164 = scmp.eq.s32.totalorder %s18, 0
    %p165 = por %p163, %p164
    %p166 = scmp.ne.s32.totalorder %s154, %s155
    %p167 = scmp.eq.s32.totalorder %s19, 1
    %p168 = por %p166, %p167
    %p170 = scmp.ne.s32.totalorder %s155, %s169
    %p171 = scmp.eq.s32.totalorder %s19, 0
    %p172 = por %p170, %p171
    %s173 = ssub.s32 %s13, %s20
    %p174 = scmp.eq.s32.totalorder %s173, 0
    %s176 = sadd.s32 %s175, 1
    %s177 = scalar_select %p174, %s175, %s176
    %p180 = pneg %p174
    %p181 = scmp.eq.s32.totalorder %s13, 1
    %p182 = por %p180, %p181
    %p183 = scmp.ne.s32.totalorder %s175, %s178
    %p184 = scmp.eq.s32.totalorder %s13, 0
    %p185 = por %p183, %p184
    %p186 = scmp.ne.s32.totalorder %s175, %s178
    %p187 = scmp.eq.s32.totalorder %s18, 1
    %p188 = por %p186, %p187
    %p189 = scmp.ne.s32.totalorder %s178, %s179
    %p190 = scmp.eq.s32.totalorder %s18, 0
    %p191 = por %p189, %p190
    %p192 = scmp.ne.s32.totalorder %s178, %s179
    %p193 = scmp.eq.s32.totalorder %s19, 1
    %p194 = por %p192, %p193
    %p196 = scmp.ne.s32.totalorder %s179, %s195
    %p197 = scmp.eq.s32.totalorder %s19, 0
    %p198 = por %p196, %p197
    %p199 = scmp.le.s32.totalorder 1, %s13
    %p200 = scmp.lt.s32.totalorder %s13, 3
    %p201 = pnand %p199, %p200
    %p202 = pneg %p201
    // Predicated region
    $region9: #{tpu_custom_call.1} parent=5 // pred_check
      _
    $region10: #{tpu_custom_call.1} parent=5 // pred_check_branch
      %204 = sbr.rel (%p201) target = $region12
    $region11: #{tpu_custom_call.1} parent=5 // pred_region
      %s205 = ssub.s32 %s13, 1
      // Predicated region
      $region13: #{tpu_custom_call.1} parent=11 // pred_check
        %p206 = pneg %p60
      $region14: #{tpu_custom_call.1} parent=11 // pred_check_branch
        %208 = sbr.rel (%p206) target = $region16
      $region15: #{tpu_custom_call.1} parent=11 // pred_region
        _
      $region16: #{tpu_custom_call.1} parent=11 // pred_fallthru
        _
      // Predicated region
      $region17: #{tpu_custom_call.1} parent=11 // pred_check
        %p209 = pneg %p81
      $region18: #{tpu_custom_call.1} parent=11 // pred_check_branch
        %211 = sbr.rel (%p209) target = $region20
      $region19: #{tpu_custom_call.1} parent=11 // pred_region
        _
      $region20: #{tpu_custom_call.1} parent=11 // pred_fallthru
        _
      // Predicated region
      $region21: #{tpu_custom_call.1} parent=11 // pred_check
        %p212 = pneg %p102
      $region22: #{tpu_custom_call.1} parent=11 // pred_check_branch
        %214 = sbr.rel (%p212) target = $region24
      $region23: #{tpu_custom_call.1} parent=11 // pred_region
        _
      $region24: #{tpu_custom_call.1} parent=11 // pred_fallthru
        _
      // Predicated region
      $region25: #{tpu_custom_call.1} parent=11 // pred_check
        %p215 = pneg %p123
      $region26: #{tpu_custom_call.1} parent=11 // pred_check_branch
        %217 = sbr.rel (%p215) target = $region28
      $region27: #{tpu_custom_call.1} parent=11 // pred_region
        _
      $region28: #{tpu_custom_call.1} parent=11 // pred_fallthru
        _
      // Predicated region
      $region29: #{tpu_custom_call.1} parent=11 // pred_check
        %p218 = pneg %p144
      $region30: #{tpu_custom_call.1} parent=11 // pred_check_branch
        %220 = sbr.rel (%p218) target = $region32
      $region31: #{tpu_custom_call.1} parent=11 // pred_region
        _
      $region32: #{tpu_custom_call.1} parent=11 // pred_fallthru
        _
      // Predicated region
      $region33: #{tpu_custom_call.1} parent=11 // pred_check
        %p221 = pneg %p165
      $region34: #{tpu_custom_call.1} parent=11 // pred_check_branch
        %223 = sbr.rel (%p221) target = $region36
      $region35: #{tpu_custom_call.1} parent=11 // pred_region
        _
      $region36: #{tpu_custom_call.1} parent=11 // pred_fallthru
        _
    $region12: #{tpu_custom_call.1} parent=5 // pred_fallthru
      _
    %p224 = scmp.lt.s32.totalorder %s13, 2
    // Predicated region
    $region37: #{tpu_custom_call.1} parent=5 // pred_check
      %p225 = pneg %p224
    $region38: #{tpu_custom_call.1} parent=5 // pred_check_branch
      %227 = sbr.rel (%p225) target = $region40
    $region39: #{tpu_custom_call.1} parent=5 // pred_region
      // Predicated region
      $region41: #{tpu_custom_call.1} parent=39 // pred_check
        %p228 = pneg %p33
      $region42: #{tpu_custom_call.1} parent=39 // pred_check_branch
        %230 = sbr.rel (%p228) target = $region44
      $region43: #{tpu_custom_call.1} parent=39 // pred_region
        %p231 = scmp.lt.s32.totalorder %s13, 1
        %s232 = scalar_select %p231, %s13, 1
        %s233 = smul.addr %s232, 32
        %s234 = smul.addr %s233, 4
        %s235 = scalar_lea.vmem %s0, %s234
      $region44: #{tpu_custom_call.1} parent=39 // pred_fallthru
        _
    $region40: #{tpu_custom_call.1} parent=5 // pred_fallthru
      _
    %p236 = scmp.le.s32.totalorder 1, %s13
    %p237 = scmp.lt.s32.totalorder %s13, 3
    %p238 = pnand %p236, %p237
    %p239 = pneg %p238
    // Predicated region
    $region45: #{tpu_custom_call.1} parent=5 // pred_check
      _
    $region46: #{tpu_custom_call.1} parent=5 // pred_check_branch
      %241 = sbr.rel (%p238) target = $region48
    $region47: #{tpu_custom_call.1} parent=5 // pred_region
      %s242 = ssub.s32 %s13, 1
      %p243 = scmp.lt.s32.totalorder %s18, 1
      %s244 = scalar_select %p243, %s18, 1
      %s245 = smul.addr %s244, 32
      %s246 = smul.addr %s245, 4
      %s247 = scalar_lea.vmem %s0, %s246
      %p248 = pneg %p39
      %p249 = pneg %p36
      %p250 = pneg %p60
      %p251 = pneg %p57
      %p252 = pneg %p81
      %p253 = pneg %p78
      %p254 = pneg %p102
      %p255 = pneg %p99
      %p256 = pneg %p123
      %p257 = pneg %p120
      %p258 = pneg %p144
      %p259 = pneg %p141
      %p260 = pneg %p165
      %p261 = pneg %p162
      %p262 = pneg %p191
      %p263 = pneg %p188
      %p264 = scmp.lt.s32.totalorder %s18, 1
      %s265 = scalar_select %p264, %s18, 1
      %s266 = smul.addr %s265, 32
      %s267 = smul.addr %s266, 4
      %s268 = scalar_lea.vmem %s7, %s267
      %p269 = scmp.lt.s32.totalorder %s18, 1
      %s270 = scalar_select %p269, %s18, 1
      %s271 = smul.addr %s270, 32
      %s272 = smul.addr %s271, 4
      %s273 = scalar_lea.vmem %s0, %s272
      %p274 = scmp.lt.s32.totalorder %s18, 1
      %s275 = scalar_select %p274, %s18, 1
      %s276 = smul.addr %s275, 32
      %s277 = smul.addr %s276, 4
      %s278 = scalar_lea.vmem %s7, %s277
      %v280 = vld [vmem:[%s273] sm:$0xf]
      %v281 = vld [vmem:[%s273 + $0x4] sm:$0xf]
      %v282 = vld [vmem:[%s273 + $0x8] sm:$0xf]
      %v283 = vld [vmem:[%s273 + $0xc] sm:$0xf]
      %v284 = vld [vmem:[%s273 + $0x10] sm:$0xf]
      %v285 = vld [vmem:[%s273 + $0x14] sm:$0xf]
      %v286 = vld [vmem:[%s273 + $0x18] sm:$0xf]
      %v287 = vld [vmem:[%s273 + $0x1c] sm:$0xf]
      %v288 = vld [vmem:[%s273 + $0x20] sm:$0xf]
      %v289 = vld [vmem:[%s273 + $0x24] sm:$0xf]
      %v290 = vld [vmem:[%s273 + $0x28] sm:$0xf]
      %v291 = vld [vmem:[%s273 + $0x2c] sm:$0xf]
      %v292 = vld [vmem:[%s273 + $0x30] sm:$0xf]
      %v293 = vld [vmem:[%s273 + $0x34] sm:$0xf]
      %v294 = vld [vmem:[%s273 + $0x38] sm:$0xf]
      %v295 = vld [vmem:[%s273 + $0x3c] sm:$0xf]
      %v296 = vld [vmem:[%s273 + $0x40] sm:$0xf]
      %v297 = vld [vmem:[%s273 + $0x44] sm:$0xf]
      %v298 = vld [vmem:[%s273 + $0x48] sm:$0xf]
      %v299 = vld [vmem:[%s273 + $0x4c] sm:$0xf]
      %v300 = vld [vmem:[%s273 + $0x50] sm:$0xf]
      %v301 = vld [vmem:[%s273 + $0x54] sm:$0xf]
      %v302 = vld [vmem:[%s273 + $0x58] sm:$0xf]
      %v303 = vld [vmem:[%s273 + $0x5c] sm:$0xf]
      %v304 = vld [vmem:[%s273 + $0x60] sm:$0xf]
      %v305 = vld [vmem:[%s273 + $0x64] sm:$0xf]
      %v306 = vld [vmem:[%s273 + $0x68] sm:$0xf]
      %v307 = vld [vmem:[%s273 + $0x6c] sm:$0xf]
      %v308 = vld [vmem:[%s273 + $0x70] sm:$0xf]
      %v309 = vld [vmem:[%s273 + $0x74] sm:$0xf]
      %v310 = vld [vmem:[%s273 + $0x78] sm:$0xf]
      %v311 = vld [vmem:[%s273 + $0x7c] sm:$0xf]
      %v312 = vld [vmem:[%s1] sm:$0xf]
      %v313 = vld [vmem:[%s1 + $0x4] sm:$0xf]
      %v346 = vunpack.c.l.b16 %v280
      %v347 = vunpack.c.l.b16 %v281
      %v348 = vunpack.c.l.b16 %v282
      %v349 = vunpack.c.l.b16 %v283
      %v350 = vunpack.c.l.b16 %v284
      %v351 = vunpack.c.l.b16 %v285
      %v352 = vunpack.c.l.b16 %v286
      %v353 = vunpack.c.l.b16 %v287
      %v354 = vunpack.c.l.b16 %v288
      %v355 = vunpack.c.l.b16 %v289
      %v356 = vunpack.c.l.b16 %v290
      %v357 = vunpack.c.l.b16 %v291
      %v358 = vunpack.c.l.b16 %v292
      %v359 = vunpack.c.l.b16 %v293
      %v360 = vunpack.c.l.b16 %v294
      %v361 = vunpack.c.l.b16 %v295
      %v362 = vunpack.c.l.b16 %v296
      %v363 = vunpack.c.l.b16 %v297
      %v364 = vunpack.c.l.b16 %v298
      %v365 = vunpack.c.l.b16 %v299
      %v366 = vunpack.c.l.b16 %v300
      %v367 = vunpack.c.l.b16 %v301
      %v368 = vunpack.c.l.b16 %v302
      %v369 = vunpack.c.l.b16 %v303
      %v370 = vunpack.c.l.b16 %v304
      %v371 = vunpack.c.l.b16 %v305
      %v372 = vunpack.c.l.b16 %v306
      %v373 = vunpack.c.l.b16 %v307
      %v374 = vunpack.c.l.b16 %v308
      %v375 = vunpack.c.l.b16 %v309
      %v376 = vunpack.c.l.b16 %v310
      %v377 = vunpack.c.l.b16 %v311
      %v378 = vpack.c.b16 %v347, %v346
      %v379 = vpack.c.b16 %v349, %v348
      %v380 = vpack.c.b16 %v351, %v350
      %v381 = vpack.c.b16 %v353, %v352
      %v382 = vpack.c.b16 %v355, %v354
      %v383 = vpack.c.b16 %v357, %v356
      %v384 = vpack.c.b16 %v359, %v358
      %v385 = vpack.c.b16 %v361, %v360
      %v386 = vpack.c.b16 %v363, %v362
      %v387 = vpack.c.b16 %v365, %v364
      %v388 = vpack.c.b16 %v367, %v366
      %v389 = vpack.c.b16 %v369, %v368
      %v390 = vpack.c.b16 %v371, %v370
      %v391 = vpack.c.b16 %v373, %v372
      %v392 = vpack.c.b16 %v375, %v374
      %v393 = vpack.c.b16 %v377, %v376
      %v396 = vunpack.c.l.b16 %v312
      %v397 = vunpack.c.l.b16 %v313
      %v398 = vpack.c.b16 %v397, %v396
      %vm400 = vcmask 130048
      %v402 = vsel %vm400, %v378, 0
      %v405 = vsel %vm400, %v379, 0
      %v408 = vsel %vm400, %v380, 0
      %v411 = vsel %vm400, %v381, 0
      %v414 = vsel %vm400, %v382, 0
      %v417 = vsel %vm400, %v383, 0
      %v420 = vsel %vm400, %v384, 0
      %v423 = vsel %vm400, %v385, 0
      %v426 = vsel %vm400, %v386, 0
      %v429 = vsel %vm400, %v387, 0
      %v432 = vsel %vm400, %v388, 0
      %v435 = vsel %vm400, %v389, 0
      %v438 = vsel %vm400, %v390, 0
      %v441 = vsel %vm400, %v391, 0
      %v444 = vsel %vm400, %v392, 0
      %v447 = vsel %vm400, %v393, 0
      %449 = vmatprep.subr.bf16.mxu0 0
      %450 = vmatpush1.bf16.msra.mxu0 %v398
      %451 = vmatprep.subr.bf16.mxu0 0
      %452 = vmatpush1.bf16.msra.mxu0 0
      %453 = vmatprep.subr.bf16.mxu0 0
      %454 = vmatpush1.bf16.msra.mxu0 0
      %455 = vmatprep.subr.bf16.mxu0 0
      %456 = vmatpush1.bf16.msra.mxu0 0
      %457 = vmatprep.subr.bf16.mxu0 0
      %458 = vmatpush1.bf16.msra.mxu0 0
      %459 = vmatprep.subr.bf16.mxu0 0
      %460 = vmatpush1.bf16.msra.mxu0 0
      %461 = vmatprep.subr.bf16.mxu0 0
      %462 = vmatpush1.bf16.msra.mxu0 0
      %463 = vmatprep.subr.bf16.mxu0 0
      %464 = vmatpush1.bf16.msra.mxu0 0
      %465 = vmatprep.subr.bf16.mxu0 0
      %466 = vmatpush1.bf16.msra.mxu0 0
      %467 = vmatprep.subr.bf16.mxu0 0
      %468 = vmatpush1.bf16.msra.mxu0 0
      %469 = vmatprep.subr.bf16.mxu0 0
      %470 = vmatpush1.bf16.msra.mxu0 0
      %471 = vmatprep.subr.bf16.mxu0 0
      %472 = vmatpush1.bf16.msra.mxu0 0
      %473 = vmatprep.subr.bf16.mxu0 0
      %474 = vmatpush1.bf16.msra.mxu0 0
      %475 = vmatprep.subr.bf16.mxu0 0
      %476 = vmatpush1.bf16.msra.mxu0 0
      %477 = vmatprep.subr.bf16.mxu0 0
      %478 = vmatpush1.bf16.msra.mxu0 0
      %479 = vmatprep.subr.bf16.mxu0 0
      %480 = vmatpush1.bf16.msra.mxu0 0
      %481 = vmatprep.mubr.bf16.mxu0 0
      %482 = vmatmul.mubr.bf16.gmra.mrb[0].mxu0 %v402
      %v483 = vpop.f32.mrb[0].mxu0
      %v484 = vadd.f32 0.0, %v483
      %v485 = vpop.f32.mrb[0].mxu0
      %v486 = vpop.f32.mrb[0].mxu0
      %v487 = vadd.f32 0.0, %v486
      %v488 = vpop.f32.mrb[0].mxu0
      %489 = vmatprep.mubr.bf16.mxu0 0
      %490 = vmatmul.mubr.bf16.gmra.mrb[0].mxu0 %v405
      %v491 = vpop.f32.mrb[0].mxu0
      %v492 = vadd.f32 0.0, %v491
      %v493 = vpop.f32.mrb[0].mxu0
      %v494 = vpop.f32.mrb[0].mxu0
      %v495 = vadd.f32 0.0, %v494
      %v496 = vpop.f32.mrb[0].mxu0
      %497 = vmatprep.mubr.bf16.mxu0 0
      %498 = vmatmul.mubr.bf16.gmra.mrb[0].mxu0 %v408
      %v499 = vpop.f32.mrb[0].mxu0
      %v500 = vadd.f32 0.0, %v499
      %v501 = vpop.f32.mrb[0].mxu0
      %v502 = vpop.f32.mrb[0].mxu0
      %v503 = vadd.f32 0.0, %v502
      %v504 = vpop.f32.mrb[0].mxu0
      %505 = vmatprep.mubr.bf16.mxu0 0
      %506 = vmatmul.mubr.bf16.gmra.mrb[0].mxu0 %v411
      %v507 = vpop.f32.mrb[0].mxu0
      %v508 = vadd.f32 0.0, %v507
      %v509 = vpop.f32.mrb[0].mxu0
      %v510 = vpop.f32.mrb[0].mxu0
      %v511 = vadd.f32 0.0, %v510
      %v512 = vpop.f32.mrb[0].mxu0
      %513 = vmatprep.mubr.bf16.mxu0 0
      %514 = vmatmul.mubr.bf16.gmra.mrb[0].mxu0 %v414
      %v515 = vpop.f32.mrb[0].mxu0
      %v516 = vadd.f32 0.0, %v515
      %v517 = vpop.f32.mrb[0].mxu0
      %v518 = vpop.f32.mrb[0].mxu0
      %v519 = vadd.f32 0.0, %v518
      %v520 = vpop.f32.mrb[0].mxu0
      %521 = vmatprep.mubr.bf16.mxu0 0
      %522 = vmatmul.mubr.bf16.gmra.mrb[0].mxu0 %v417
      %v523 = vpop.f32.mrb[0].mxu0
      %v524 = vadd.f32 0.0, %v523
      %v525 = vpop.f32.mrb[0].mxu0
      %v526 = vpop.f32.mrb[0].mxu0
      %v527 = vadd.f32 0.0, %v526
      %v528 = vpop.f32.mrb[0].mxu0
      %529 = vmatprep.mubr.bf16.mxu0 0
      %530 = vmatmul.mubr.bf16.gmra.mrb[0].mxu0 %v420
      %v531 = vpop.f32.mrb[0].mxu0
      %v532 = vadd.f32 0.0, %v531
      %v533 = vpop.f32.mrb[0].mxu0
      %v534 = vpop.f32.mrb[0].mxu0
      %v535 = vadd.f32 0.0, %v534
      %v536 = vpop.f32.mrb[0].mxu0
      %537 = vmatprep.mubr.bf16.mxu0 0
      %538 = vmatmul.mubr.bf16.gmra.mrb[0].mxu0 %v423
      %v539 = vpop.f32.mrb[0].mxu0
      %v540 = vadd.f32 0.0, %v539
      %v541 = vpop.f32.mrb[0].mxu0
      %v542 = vpop.f32.mrb[0].mxu0
      %v543 = vadd.f32 0.0, %v542
      %v544 = vpop.f32.mrb[0].mxu0
      %545 = vmatprep.mubr.bf16.mxu0 0
      %546 = vmatmul.mubr.bf16.gmra.mrb[0].mxu0 %v426
      %v547 = vpop.f32.mrb[0].mxu0
      %v548 = vadd.f32 0.0, %v547
      %v549 = vpop.f32.mrb[0].mxu0
      %v550 = vpop.f32.mrb[0].mxu0
      %v551 = vadd.f32 0.0, %v550
      %v552 = vpop.f32.mrb[0].mxu0
      %553 = vmatprep.mubr.bf16.mxu0 0
      %554 = vmatmul.mubr.bf16.gmra.mrb[0].mxu0 %v429
      %v555 = vpop.f32.mrb[0].mxu0
      %v556 = vadd.f32 0.0, %v555
      %v557 = vpop.f32.mrb[0].mxu0
      %v558 = vpop.f32.mrb[0].mxu0
      %v559 = vadd.f32 0.0, %v558
      %v560 = vpop.f32.mrb[0].mxu0
      %561 = vmatprep.mubr.bf16.mxu0 0
      %562 = vmatmul.mubr.bf16.gmra.mrb[0].mxu0 %v432
      %v563 = vpop.f32.mrb[0].mxu0
      %v564 = vadd.f32 0.0, %v563
      %v565 = vpop.f32.mrb[0].mxu0
      %v566 = vpop.f32.mrb[0].mxu0
      %v567 = vadd.f32 0.0, %v566
      %v568 = vpop.f32.mrb[0].mxu0
      %569 = vmatprep.mubr.bf16.mxu0 0
      %570 = vmatmul.mubr.bf16.gmra.mrb[0].mxu0 %v435
      %v571 = vpop.f32.mrb[0].mxu0
      %v572 = vadd.f32 0.0, %v571
      %v573 = vpop.f32.mrb[0].mxu0
      %v574 = vpop.f32.mrb[0].mxu0
      %v575 = vadd.f32 0.0, %v574
      %v576 = vpop.f32.mrb[0].mxu0
      %577 = vmatprep.mubr.bf16.mxu0 0
      %578 = vmatmul.mubr.bf16.gmra.mrb[0].mxu0 %v438
      %v579 = vpop.f32.mrb[0].mxu0
      %v580 = vadd.f32 0.0, %v579
      %v581 = vpop.f32.mrb[0].mxu0
      %v582 = vpop.f32.mrb[0].mxu0
      %v583 = vadd.f32 0.0, %v582
      %v584 = vpop.f32.mrb[0].mxu0
      %585 = vmatprep.mubr.bf16.mxu0 0
      %586 = vmatmul.mubr.bf16.gmra.mrb[0].mxu0 %v441
      %v587 = vpop.f32.mrb[0].mxu0
      %v588 = vadd.f32 0.0, %v587
      %v589 = vpop.f32.mrb[0].mxu0
      %v590 = vpop.f32.mrb[0].mxu0
      %v591 = vadd.f32 0.0, %v590
      %v592 = vpop.f32.mrb[0].mxu0
      %593 = vmatprep.mubr.bf16.mxu0 0
      %594 = vmatmul.mubr.bf16.gmra.mrb[0].mxu0 %v444
      %v595 = vpop.f32.mrb[0].mxu0
      %v596 = vadd.f32 0.0, %v595
      %v597 = vpop.f32.mrb[0].mxu0
      %v598 = vpop.f32.mrb[0].mxu0
      %v599 = vadd.f32 0.0, %v598
      %v600 = vpop.f32.mrb[0].mxu0
      %601 = vmatprep.mubr.bf16.mxu0 0
      %602 = vmatmul.mubr.bf16.gmra.mrb[0].mxu0 %v447
      %v603 = vpop.f32.mrb[0].mxu0
      %v604 = vadd.f32 0.0, %v603
      %v605 = vpop.f32.mrb[0].mxu0
      %v606 = vpop.f32.mrb[0].mxu0
      %v607 = vadd.f32 0.0, %v606
      %v608 = vpop.f32.mrb[0].mxu0
      %609 = vdwg.mxu0
      %v610 = vld [vmem:[%s4] sm:$0x1]
      %v611 = vlaneseq
      %v612 = vshrl.u32 %v611, 7
      %v613 = vsub.s32 0, %v612
      %v614 = vrot.slane %v610, %v613
      %v615 = vmul.f32 %v484, %v614
      %v616 = vmul.f32 %v487, %v614
      %v617 = vmul.f32 %v492, %v614
      %v618 = vmul.f32 %v495, %v614
      %v619 = vmul.f32 %v500, %v614
      %v620 = vmul.f32 %v503, %v614
      %v621 = vmul.f32 %v508, %v614
      %v622 = vmul.f32 %v511, %v614
      %v623 = vmul.f32 %v516, %v614
      %v624 = vmul.f32 %v519, %v614
      %v625 = vmul.f32 %v524, %v614
      %v626 = vmul.f32 %v527, %v614
      %v627 = vmul.f32 %v532, %v614
      %v628 = vmul.f32 %v535, %v614
      %v629 = vmul.f32 %v540, %v614
      %v630 = vmul.f32 %v543, %v614
      %v631 = vmul.f32 %v548, %v614
      %v632 = vmul.f32 %v551, %v614
      %v633 = vmul.f32 %v556, %v614
      %v634 = vmul.f32 %v559, %v614
      %v635 = vmul.f32 %v564, %v614
      %v636 = vmul.f32 %v567, %v614
      %v637 = vmul.f32 %v572, %v614
      %v638 = vmul.f32 %v575, %v614
      %v639 = vmul.f32 %v580, %v614
      %v640 = vmul.f32 %v583, %v614
      %v641 = vmul.f32 %v588, %v614
      %v642 = vmul.f32 %v591, %v614
      %v643 = vmul.f32 %v596, %v614
      %v644 = vmul.f32 %v599, %v614
      %v645 = vmul.f32 %v604, %v614
      %v646 = vmul.f32 %v607, %v614
      %v647 = vld [vmem:[%s4 + $0x1] sm:$0x1]
      %v648 = vlaneseq
      %v649 = vshrl.u32 %v648, 7
      %v650 = vsub.s32 0, %v649
      %v651 = vrot.slane %v647, %v650
      %v652 = vadd.f32 %v615, %v651
      %v653 = vadd.f32 %v616, %v651
      %v654 = vadd.f32 %v617, %v651
      %v655 = vadd.f32 %v618, %v651
      %v656 = vadd.f32 %v619, %v651
      %v657 = vadd.f32 %v620, %v651
      %v658 = vadd.f32 %v621, %v651
      %v659 = vadd.f32 %v622, %v651
      %v660 = vadd.f32 %v623, %v651
      %v661 = vadd.f32 %v624, %v651
      %v662 = vadd.f32 %v625, %v651
      %v663 = vadd.f32 %v626, %v651
      %v664 = vadd.f32 %v627, %v651
      %v665 = vadd.f32 %v628, %v651
      %v666 = vadd.f32 %v629, %v651
      %v667 = vadd.f32 %v630, %v651
      %v668 = vadd.f32 %v631, %v651
      %v669 = vadd.f32 %v632, %v651
      %v670 = vadd.f32 %v633, %v651
      %v671 = vadd.f32 %v634, %v651
      %v672 = vadd.f32 %v635, %v651
      %v673 = vadd.f32 %v636, %v651
      %v674 = vadd.f32 %v637, %v651
      %v675 = vadd.f32 %v638, %v651
      %v676 = vadd.f32 %v639, %v651
      %v677 = vadd.f32 %v640, %v651
      %v678 = vadd.f32 %v641, %v651
      %v679 = vadd.f32 %v642, %v651
      %v680 = vadd.f32 %v643, %v651
      %v681 = vadd.f32 %v644, %v651
      %v682 = vadd.f32 %v645, %v651
      %v683 = vadd.f32 %v646, %v651
      %v684 = vmax.f32 %v652, 0.0
      %v685 = vmax.f32 %v653, 0.0
      %v686 = vmax.f32 %v654, 0.0
      %v687 = vmax.f32 %v655, 0.0
      %v688 = vmax.f32 %v656, 0.0
      %v689 = vmax.f32 %v657, 0.0
      %v690 = vmax.f32 %v658, 0.0
      %v691 = vmax.f32 %v659, 0.0
      %v692 = vmax.f32 %v660, 0.0
      %v693 = vmax.f32 %v661, 0.0
      %v694 = vmax.f32 %v662, 0.0
      %v695 = vmax.f32 %v663, 0.0
      %v696 = vmax.f32 %v664, 0.0
      %v697 = vmax.f32 %v665, 0.0
      %v698 = vmax.f32 %v666, 0.0
      %v699 = vmax.f32 %v667, 0.0
      %v700 = vmax.f32 %v668, 0.0
      %v701 = vmax.f32 %v669, 0.0
      %v702 = vmax.f32 %v670, 0.0
      %v703 = vmax.f32 %v671, 0.0
      %v704 = vmax.f32 %v672, 0.0
      %v705 = vmax.f32 %v673, 0.0
      %v706 = vmax.f32 %v674, 0.0
      %v707 = vmax.f32 %v675, 0.0
      %v708 = vmax.f32 %v676, 0.0
      %v709 = vmax.f32 %v677, 0.0
      %v710 = vmax.f32 %v678, 0.0
      %v711 = vmax.f32 %v679, 0.0
      %v712 = vmax.f32 %v680, 0.0
      %v713 = vmax.f32 %v681, 0.0
      %v714 = vmax.f32 %v682, 0.0
      %v715 = vmax.f32 %v683, 0.0
      %vm716 = vcmask 31744
      %717 = vst.msk [vmem:[#allocation2] sm:$0xff] %vm716, 0
      %718 = vst.msk [vmem:[#allocation2 + $0x8] sm:$0xff] %vm716, 0
      %719 = vst.msk [vmem:[#allocation2 + $0x90] sm:$0xff] %vm716, 0
      %720 = vst.msk [vmem:[#allocation2 + $0x98] sm:$0xff] %vm716, 0
      %v721 = vpack.c.bf16 %v685, %v684
      %v722 = vpack.c.bf16 %v687, %v686
      %v723 = vpack.c.bf16 %v689, %v688
      %v724 = vpack.c.bf16 %v691, %v690
      %v725 = vpack.c.bf16 %v693, %v692
      %v726 = vpack.c.bf16 %v695, %v694
      %v727 = vpack.c.bf16 %v697, %v696
      %v728 = vpack.c.bf16 %v699, %v698
      %v729 = vpack.c.bf16 %v701, %v700
      %v730 = vpack.c.bf16 %v703, %v702
      %v731 = vpack.c.bf16 %v705, %v704
      %v732 = vpack.c.bf16 %v707, %v706
      %v733 = vpack.c.bf16 %v709, %v708
      %v734 = vpack.c.bf16 %v711, %v710
      %v735 = vpack.c.bf16 %v713, %v712
      %v736 = vpack.c.bf16 %v715, %v714
      %737 = vst.msk [vmem:[#allocation2 + $0x10] sm:$0xff] %vm716, %v721
      %738 = vst.msk [vmem:[#allocation2 + $0x18] sm:$0xff] %vm716, %v722
      %739 = vst.msk [vmem:[#allocation2 + $0x20] sm:$0xff] %vm716, %v723
      %740 = vst.msk [vmem:[#allocation2 + $0x28] sm:$0xff] %vm716, %v724
      %741 = vst.msk [vmem:[#allocation2 + $0x30] sm:$0xff] %vm716, %v725
      %742 = vst.msk [vmem:[#allocation2 + $0x38] sm:$0xff] %vm716, %v726
      %743 = vst.msk [vmem:[#allocation2 + $0x40] sm:$0xff] %vm716, %v727
      %744 = vst.msk [vmem:[#allocation2 + $0x48] sm:$0xff] %vm716, %v728
      %745 = vst.msk [vmem:[#allocation2 + $0x50] sm:$0xff] %vm716, %v729
      %746 = vst.msk [vmem:[#allocation2 + $0x58] sm:$0xff] %vm716, %v730
      %747 = vst.msk [vmem:[#allocation2 + $0x60] sm:$0xff] %vm716, %v731
      %748 = vst.msk [vmem:[#allocation2 + $0x68] sm:$0xff] %vm716, %v732
      %749 = vst.msk [vmem:[#allocation2 + $0x70] sm:$0xff] %vm716, %v733
      %750 = vst.msk [vmem:[#allocation2 + $0x78] sm:$0xff] %vm716, %v734
      %751 = vst.msk [vmem:[#allocation2 + $0x80] sm:$0xff] %vm716, %v735
      %752 = vst.msk [vmem:[#allocation2 + $0x88] sm:$0xff] %vm716, %v736
      %v753 = vlaneseq
      %v754 = vshrl.u32 %v753, 7
      %v755 = vadd.s32 %v754, 8
      %v756 = vadd.s32 %v754, 16
      %v757 = vadd.s32 %v754, 24
      %v758 = vadd.s32 %v754, 32
      %v759 = vadd.s32 %v754, 40
      %v760 = vadd.s32 %v754, 48
      %v761 = vadd.s32 %v754, 56
      %v762 = vadd.s32 %v754, 64
      %v763 = vadd.s32 %v754, 72
      %v764 = vadd.s32 %v754, 80
      %v765 = vadd.s32 %v754, 88
      %v766 = vadd.s32 %v754, 96
      %v767 = vadd.s32 %v754, 104
      %v768 = vadd.s32 %v754, 112
      %v769 = vadd.s32 %v754, 120
      %v770 = vadd.s32 %v754, 128
      %v771 = vadd.s32 %v754, 136
      %v772 = vadd.s32 %v754, 144
      %v773 = vadd.s32 %v754, 152
      %v774 = vadd.s32 %v754, 160
      %v775 = vadd.s32 %v754, 168
      %v776 = vadd.s32 %v754, 176
      %v777 = vadd.s32 %v754, 184
      %v778 = vadd.s32 %v754, 192
      %v779 = vadd.s32 %v754, 200
      %v780 = vadd.s32 %v754, 208
      %v781 = vadd.s32 %v754, 216
      %v782 = vadd.s32 %v754, 224
      %v783 = vadd.s32 %v754, 232
      %v784 = vadd.s32 %v754, 240
      %v785 = vadd.s32 %v754, 248
      %vm786 = vcmp.lt.s32.totalorder %v754, 0
      %v787 = vsub.s32 0, %v754
      %v788 = vsel %vm786, %v787, %v754
      %v789 = vshrl.u32 %v788, 4
      %v790 = vand.u32 %v788, 15
      %v791 = vsub.s32 0, %v790
      %v792 = vsel %vm786, %v791, %v790
      %vm793 = vcmp.lt.s32.totalorder %v755, 0
      %v794 = vsub.s32 0, %v755
      %v795 = vsel %vm793, %v794, %v755
      %v796 = vshrl.u32 %v795, 4
      %v797 = vand.u32 %v795, 15
      %v798 = vsub.s32 0, %v797
      %v799 = vsel %vm793, %v798, %v797
      %vm800 = vcmp.lt.s32.totalorder %v756, 0
      %v801 = vsub.s32 0, %v756
      %v802 = vsel %vm800, %v801, %v756
      %v803 = vshrl.u32 %v802, 4
      %v804 = vand.u32 %v802, 15
      %v805 = vsub.s32 0, %v804
      %v806 = vsel %vm800, %v805, %v804
      %vm807 = vcmp.lt.s32.totalorder %v757, 0
      %v808 = vsub.s32 0, %v757
      %v809 = vsel %vm807, %v808, %v757
      %v810 = vshrl.u32 %v809, 4
      %v811 = vand.u32 %v809, 15
      %v812 = vsub.s32 0, %v811
      %v813 = vsel %vm807, %v812, %v811
      %vm814 = vcmp.lt.s32.totalorder %v758, 0
      %v815 = vsub.s32 0, %v758
      %v816 = vsel %vm814, %v815, %v758
      %v817 = vshrl.u32 %v816, 4
      %v818 = vand.u32 %v816, 15
      %v819 = vsub.s32 0, %v818
      %v820 = vsel %vm814, %v819, %v818
      %vm821 = vcmp.lt.s32.totalorder %v759, 0
      %v822 = vsub.s32 0, %v759
      %v823 = vsel %vm821, %v822, %v759
      %v824 = vshrl.u32 %v823, 4
      %v825 = vand.u32 %v823, 15
      %v826 = vsub.s32 0, %v825
      %v827 = vsel %vm821, %v826, %v825
      %vm828 = vcmp.lt.s32.totalorder %v760, 0
      %v829 = vsub.s32 0, %v760
      %v830 = vsel %vm828, %v829, %v760
      %v831 = vshrl.u32 %v830, 4
      %v832 = vand.u32 %v830, 15
      %v833 = vsub.s32 0, %v832
      %v834 = vsel %vm828, %v833, %v832
      %vm835 = vcmp.lt.s32.totalorder %v761, 0
      %v836 = vsub.s32 0, %v761
      %v837 = vsel %vm835, %v836, %v761
      %v838 = vshrl.u32 %v837, 4
      %v839 = vand.u32 %v837, 15
      %v840 = vsub.s32 0, %v839
      %v841 = vsel %vm835, %v840, %v839
      %vm842 = vcmp.lt.s32.totalorder %v762, 0
      %v843 = vsub.s32 0, %v762
      %v844 = vsel %vm842, %v843, %v762
      %v845 = vshrl.u32 %v844, 4
      %v846 = vand.u32 %v844, 15
      %v847 = vsub.s32 0, %v846
      %v848 = vsel %vm842, %v847, %v846
      %vm849 = vcmp.lt.s32.totalorder %v763, 0
      %v850 = vsub.s32 0, %v763
      %v851 = vsel %vm849, %v850, %v763
      %v852 = vshrl.u32 %v851, 4
      %v853 = vand.u32 %v851, 15
      %v854 = vsub.s32 0, %v853
      %v855 = vsel %vm849, %v854, %v853
      %vm856 = vcmp.lt.s32.totalorder %v764, 0
      %v857 = vsub.s32 0, %v764
      %v858 = vsel %vm856, %v857, %v764
      %v859 = vshrl.u32 %v858, 4
      %v860 = vand.u32 %v858, 15
      %v861 = vsub.s32 0, %v860
      %v862 = vsel %vm856, %v861, %v860
      %vm863 = vcmp.lt.s32.totalorder %v765, 0
      %v864 = vsub.s32 0, %v765
      %v865 = vsel %vm863, %v864, %v765
      %v866 = vshrl.u32 %v865, 4
      %v867 = vand.u32 %v865, 15
      %v868 = vsub.s32 0, %v867
      %v869 = vsel %vm863, %v868, %v867
      %vm870 = vcmp.lt.s32.totalorder %v766, 0
      %v871 = vsub.s32 0, %v766
      %v872 = vsel %vm870, %v871, %v766
      %v873 = vshrl.u32 %v872, 4
      %v874 = vand.u32 %v872, 15
      %v875 = vsub.s32 0, %v874
      %v876 = vsel %vm870, %v875, %v874
      %vm877 = vcmp.lt.s32.totalorder %v767, 0
      %v878 = vsub.s32 0, %v767
      %v879 = vsel %vm877, %v878, %v767
      %v880 = vshrl.u32 %v879, 4
      %v881 = vand.u32 %v879, 15
      %v882 = vsub.s32 0, %v881
      %v883 = vsel %vm877, %v882, %v881
      %vm884 = vcmp.lt.s32.totalorder %v768, 0
      %v885 = vsub.s32 0, %v768
      %v886 = vsel %vm884, %v885, %v768
      %v887 = vshrl.u32 %v886, 4
      %v888 = vand.u32 %v886, 15
      %v889 = vsub.s32 0, %v888
      %v890 = vsel %vm884, %v889, %v888
      %vm891 = vcmp.lt.s32.totalorder %v769, 0
      %v892 = vsub.s32 0, %v769
      %v893 = vsel %vm891, %v892, %v769
      %v894 = vshrl.u32 %v893, 4
      %v895 = vand.u32 %v893, 15
      %v896 = vsub.s32 0, %v895
      %v897 = vsel %vm891, %v896, %v895
      %vm898 = vcmp.lt.s32.totalorder %v770, 0
      %v899 = vsub.s32 0, %v770
      %v900 = vsel %vm898, %v899, %v770
      %v901 = vshrl.u32 %v900, 4
      %v902 = vand.u32 %v900, 15
      %v903 = vsub.s32 0, %v902
      %v904 = vsel %vm898, %v903, %v902
      %vm905 = vcmp.lt.s32.totalorder %v771, 0
      %v906 = vsub.s32 0, %v771
      %v907 = vsel %vm905, %v906, %v771
      %v908 = vshrl.u32 %v907, 4
      %v909 = vand.u32 %v907, 15
      %v910 = vsub.s32 0, %v909
      %v911 = vsel %vm905, %v910, %v909
      %vm912 = vcmp.lt.s32.totalorder %v772, 0
      %v913 = vsub.s32 0, %v772
      %v914 = vsel %vm912, %v913, %v772
      %v915 = vshrl.u32 %v914, 4
      %v916 = vand.u32 %v914, 15
      %v917 = vsub.s32 0, %v916
      %v918 = vsel %vm912, %v917, %v916
      %vm919 = vcmp.lt.s32.totalorder %v773, 0
      %v920 = vsub.s32 0, %v773
      %v921 = vsel %vm919, %v920, %v773
      %v922 = vshrl.u32 %v921, 4
      %v923 = vand.u32 %v921, 15
      %v924 = vsub.s32 0, %v923
      %v925 = vsel %vm919, %v924, %v923
      %vm926 = vcmp.lt.s32.totalorder %v774, 0
      %v927 = vsub.s32 0, %v774
      %v928 = vsel %vm926, %v927, %v774
      %v929 = vshrl.u32 %v928, 4
      %v930 = vand.u32 %v928, 15
      %v931 = vsub.s32 0, %v930
      %v932 = vsel %vm926, %v931, %v930
      %vm933 = vcmp.lt.s32.totalorder %v775, 0
      %v934 = vsub.s32 0, %v775
      %v935 = vsel %vm933, %v934, %v775
      %v936 = vshrl.u32 %v935, 4
      %v937 = vand.u32 %v935, 15
      %v938 = vsub.s32 0, %v937
      %v939 = vsel %vm933, %v938, %v937
      %vm940 = vcmp.lt.s32.totalorder %v776, 0
      %v941 = vsub.s32 0, %v776
      %v942 = vsel %vm940, %v941, %v776
      %v943 = vshrl.u32 %v942, 4
      %v944 = vand.u32 %v942, 15
      %v945 = vsub.s32 0, %v944
      %v946 = vsel %vm940, %v945, %v944
      %vm947 = vcmp.lt.s32.totalorder %v777, 0
      %v948 = vsub.s32 0, %v777
      %v949 = vsel %vm947, %v948, %v777
      %v950 = vshrl.u32 %v949, 4
      %v951 = vand.u32 %v949, 15
      %v952 = vsub.s32 0, %v951
      %v953 = vsel %vm947, %v952, %v951
      %vm954 = vcmp.lt.s32.totalorder %v778, 0
      %v955 = vsub.s32 0, %v778
      %v956 = vsel %vm954, %v955, %v778
      %v957 = vshrl.u32 %v956, 4
      %v958 = vand.u32 %v956, 15
      %v959 = vsub.s32 0, %v958
      %v960 = vsel %vm954, %v959, %v958
      %vm961 = vcmp.lt.s32.totalorder %v779, 0
      %v962 = vsub.s32 0, %v779
      %v963 = vsel %vm961, %v962, %v779
      %v964 = vshrl.u32 %v963, 4
      %v965 = vand.u32 %v963, 15
      %v966 = vsub.s32 0, %v965
      %v967 = vsel %vm961, %v966, %v965
      %vm968 = vcmp.lt.s32.totalorder %v780, 0
      %v969 = vsub.s32 0, %v780
      %v970 = vsel %vm968, %v969, %v780
      %v971 = vshrl.u32 %v970, 4
      %v972 = vand.u32 %v970, 15
      %v973 = vsub.s32 0, %v972
      %v974 = vsel %vm968, %v973, %v972
      %vm975 = vcmp.lt.s32.totalorder %v781, 0
      %v976 = vsub.s32 0, %v781
      %v977 = vsel %vm975, %v976, %v781
      %v978 = vshrl.u32 %v977, 4
      %v979 = vand.u32 %v977, 15
      %v980 = vsub.s32 0, %v979
      %v981 = vsel %vm975, %v980, %v979
      %vm982 = vcmp.lt.s32.totalorder %v782, 0
      %v983 = vsub.s32 0, %v782
      %v984 = vsel %vm982, %v983, %v782
      %v985 = vshrl.u32 %v984, 4
      %v986 = vand.u32 %v984, 15
      %v987 = vsub.s32 0, %v986
      %v988 = vsel %vm982, %v987, %v986
      %vm989 = vcmp.lt.s32.totalorder %v783, 0
      %v990 = vsub.s32 0, %v783
      %v991 = vsel %vm989, %v990, %v783
      %v992 = vshrl.u32 %v991, 4
      %v993 = vand.u32 %v991, 15
      %v994 = vsub.s32 0, %v993
      %v995 = vsel %vm989, %v994, %v993
      %vm996 = vcmp.lt.s32.totalorder %v784, 0
      %v997 = vsub.s32 0, %v784
      %v998 = vsel %vm996, %v997, %v784
      %v999 = vshrl.u32 %v998, 4
      %v1000 = vand.u32 %v998, 15
      %v1001 = vsub.s32 0, %v1000
      %v1002 = vsel %vm996, %v1001, %v1000
      %vm1003 = vcmp.lt.s32.totalorder %v785, 0
      %v1004 = vsub.s32 0, %v785
      %v1005 = vsel %vm1003, %v1004, %v785
      %v1006 = vshrl.u32 %v1005, 4
      %v1007 = vand.u32 %v1005, 15
      %v1008 = vsub.s32 0, %v1007
      %v1009 = vsel %vm1003, %v1008, %v1007
      %vm1010 = vcmp.ne.s32.totalorder %v792, 0
      %vm1011 = vcmp.ne.s32.totalorder %v799, 0
      %vm1012 = vcmp.ne.s32.totalorder %v806, 0
      %vm1013 = vcmp.ne.s32.totalorder %v813, 0
      %vm1014 = vcmp.ne.s32.totalorder %v820, 0
      %vm1015 = vcmp.ne.s32.totalorder %v827, 0
      %vm1016 = vcmp.ne.s32.totalorder %v834, 0
      %vm1017 = vcmp.ne.s32.totalorder %v841, 0
      %vm1018 = vcmp.ne.s32.totalorder %v848, 0
      %vm1019 = vcmp.ne.s32.totalorder %v855, 0
      %vm1020 = vcmp.ne.s32.totalorder %v862, 0
      %vm1021 = vcmp.ne.s32.totalorder %v869, 0
      %vm1022 = vcmp.ne.s32.totalorder %v876, 0
      %vm1023 = vcmp.ne.s32.totalorder %v883, 0
      %vm1024 = vcmp.ne.s32.totalorder %v890, 0
      %vm1025 = vcmp.ne.s32.totalorder %v897, 0
      %vm1026 = vcmp.ne.s32.totalorder %v904, 0
      %vm1027 = vcmp.ne.s32.totalorder %v911, 0
      %vm1028 = vcmp.ne.s32.totalorder %v918, 0
      %vm1029 = vcmp.ne.s32.totalorder %v925, 0
      %vm1030 = vcmp.ne.s32.totalorder %v932, 0
      %vm1031 = vcmp.ne.s32.totalorder %v939, 0
      %vm1032 = vcmp.ne.s32.totalorder %v946, 0
      %vm1033 = vcmp.ne.s32.totalorder %v953, 0
      %vm1034 = vcmp.ne.s32.totalorder %v960, 0
      %vm1035 = vcmp.ne.s32.totalorder %v967, 0
      %vm1036 = vcmp.ne.s32.totalorder %v974, 0
      %vm1037 = vcmp.ne.s32.totalorder %v981, 0
      %vm1038 = vcmp.ne.s32.totalorder %v988, 0
      %vm1039 = vcmp.ne.s32.totalorder %v995, 0
      %vm1040 = vcmp.ne.s32.totalorder %v1002, 0
      %vm1041 = vcmp.ne.s32.totalorder %v1009, 0
      %vm1042 = vcmp.lt.s32.totalorder %v792, 0
      %vm1043 = vcmp.lt.s32.totalorder %v799, 0
      %vm1044 = vcmp.lt.s32.totalorder %v806, 0
      %vm1045 = vcmp.lt.s32.totalorder %v813, 0
      %vm1046 = vcmp.lt.s32.totalorder %v820, 0
      %vm1047 = vcmp.lt.s32.totalorder %v827, 0
      %vm1048 = vcmp.lt.s32.totalorder %v834, 0
      %vm1049 = vcmp.lt.s32.totalorder %v841, 0
      %vm1050 = vcmp.lt.s32.totalorder %v848, 0
      %vm1051 = vcmp.lt.s32.totalorder %v855, 0
      %vm1052 = vcmp.lt.s32.totalorder %v862, 0
      %vm1053 = vcmp.lt.s32.totalorder %v869, 0
      %vm1054 = vcmp.lt.s32.totalorder %v876, 0
      %vm1055 = vcmp.lt.s32.totalorder %v883, 0
      %vm1056 = vcmp.lt.s32.totalorder %v890, 0
      %vm1057 = vcmp.lt.s32.totalorder %v897, 0
      %vm1058 = vcmp.lt.s32.totalorder %v904, 0
      %vm1059 = vcmp.lt.s32.totalorder %v911, 0
      %vm1060 = vcmp.lt.s32.totalorder %v918, 0
      %vm1061 = vcmp.lt.s32.totalorder %v925, 0
      %vm1062 = vcmp.lt.s32.totalorder %v932, 0
      %vm1063 = vcmp.lt.s32.totalorder %v939, 0
      %vm1064 = vcmp.lt.s32.totalorder %v946, 0
      %vm1065 = vcmp.lt.s32.totalorder %v953, 0
      %vm1066 = vcmp.lt.s32.totalorder %v960, 0
      %vm1067 = vcmp.lt.s32.totalorder %v967, 0
      %vm1068 = vcmp.lt.s32.totalorder %v974, 0
      %vm1069 = vcmp.lt.s32.totalorder %v981, 0
      %vm1070 = vcmp.lt.s32.totalorder %v988, 0
      %vm1071 = vcmp.lt.s32.totalorder %v995, 0
      %vm1072 = vcmp.lt.s32.totalorder %v1002, 0
      %vm1073 = vcmp.lt.s32.totalorder %v1009, 0
      %vm1074 = vmand %vm1042, %vm1010
      %vm1075 = vmand %vm1043, %vm1011
      %vm1076 = vmand %vm1044, %vm1012
      %vm1077 = vmand %vm1045, %vm1013
      %vm1078 = vmand %vm1046, %vm1014
      %vm1079 = vmand %vm1047, %vm1015
      %vm1080 = vmand %vm1048, %vm1016
      %vm1081 = vmand %vm1049, %vm1017
      %vm1082 = vmand %vm1050, %vm1018
      %vm1083 = vmand %vm1051, %vm1019
      %vm1084 = vmand %vm1052, %vm1020
      %vm1085 = vmand %vm1053, %vm1021
      %vm1086 = vmand %vm1054, %vm1022
      %vm1087 = vmand %vm1055, %vm1023
      %vm1088 = vmand %vm1056, %vm1024
      %vm1089 = vmand %vm1057, %vm1025
      %vm1090 = vmand %vm1058, %vm1026
      %vm1091 = vmand %vm1059, %vm1027
      %vm1092 = vmand %vm1060, %vm1028
      %vm1093 = vmand %vm1061, %vm1029
      %vm1094 = vmand %vm1062, %vm1030
      %vm1095 = vmand %vm1063, %vm1031
      %vm1096 = vmand %vm1064, %vm1032
      %vm1097 = vmand %vm1065, %vm1033
      %vm1098 = vmand %vm1066, %vm1034
      %vm1099 = vmand %vm1067, %vm1035
      %vm1100 = vmand %vm1068, %vm1036
      %vm1101 = vmand %vm1069, %vm1037
      %vm1102 = vmand %vm1070, %vm1038
      %vm1103 = vmand %vm1071, %vm1039
      %vm1104 = vmand %vm1072, %vm1040
      %vm1105 = vmand %vm1073, %vm1041
      %v1106 = vadd.s32 %v792, 16
      %v1107 = vadd.s32 %v799, 16
      %v1108 = vadd.s32 %v806, 16
      %v1109 = vadd.s32 %v813, 16
      %v1110 = vadd.s32 %v820, 16
      %v1111 = vadd.s32 %v827, 16
      %v1112 = vadd.s32 %v834, 16
      %v1113 = vadd.s32 %v841, 16
      %v1114 = vadd.s32 %v848, 16
      %v1115 = vadd.s32 %v855, 16
      %v1116 = vadd.s32 %v862, 16
      %v1117 = vadd.s32 %v869, 16
      %v1118 = vadd.s32 %v876, 16
      %v1119 = vadd.s32 %v883, 16
      %v1120 = vadd.s32 %v890, 16
      %v1121 = vadd.s32 %v897, 16
      %v1122 = vadd.s32 %v904, 16
      %v1123 = vadd.s32 %v911, 16
      %v1124 = vadd.s32 %v918, 16
      %v1125 = vadd.s32 %v925, 16
      %v1126 = vadd.s32 %v932, 16
      %v1127 = vadd.s32 %v939, 16
      %v1128 = vadd.s32 %v946, 16
      %v1129 = vadd.s32 %v953, 16
      %v1130 = vadd.s32 %v960, 16
      %v1131 = vadd.s32 %v967, 16
      %v1132 = vadd.s32 %v974, 16
      %v1133 = vadd.s32 %v981, 16
      %v1134 = vadd.s32 %v988, 16
      %v1135 = vadd.s32 %v995, 16
      %v1136 = vadd.s32 %v1002, 16
      %v1137 = vadd.s32 %v1009, 16
      %v1138 = vsel %vm1074, %v1106, %v792
      %v1139 = vsel %vm1075, %v1107, %v799
      %v1140 = vsel %vm1076, %v1108, %v806
      %v1141 = vsel %vm1077, %v1109, %v813
      %v1142 = vsel %vm1078, %v1110, %v820
      %v1143 = vsel %vm1079, %v1111, %v827
      %v1144 = vsel %vm1080, %v1112, %v834
      %v1145 = vsel %vm1081, %v1113, %v841
      %v1146 = vsel %vm1082, %v1114, %v848
      %v1147 = vsel %vm1083, %v1115, %v855
      %v1148 = vsel %vm1084, %v1116, %v862
      %v1149 = vsel %vm1085, %v1117, %v869
      %v1150 = vsel %vm1086, %v1118, %v876
      %v1151 = vsel %vm1087, %v1119, %v883
      %v1152 = vsel %vm1088, %v1120, %v890
      %v1153 = vsel %vm1089, %v1121, %v897
      %v1154 = vsel %vm1090, %v1122, %v904
      %v1155 = vsel %vm1091, %v1123, %v911
      %v1156 = vsel %vm1092, %v1124, %v918
      %v1157 = vsel %vm1093, %v1125, %v925
      %v1158 = vsel %vm1094, %v1126, %v932
      %v1159 = vsel %vm1095, %v1127, %v939
      %v1160 = vsel %vm1096, %v1128, %v946
      %v1161 = vsel %vm1097, %v1129, %v953
      %v1162 = vsel %vm1098, %v1130, %v960
      %v1163 = vsel %vm1099, %v1131, %v967
      %v1164 = vsel %vm1100, %v1132, %v974
      %v1165 = vsel %vm1101, %v1133, %v981
      %v1166 = vsel %vm1102, %v1134, %v988
      %v1167 = vsel %vm1103, %v1135, %v995
      %v1168 = vsel %vm1104, %v1136, %v1002
      %v1169 = vsel %vm1105, %v1137, %v1009
      %vm1170 = vcmp.ge.s32.totalorder %v1138, 1
      %vm1171 = vcmp.ge.s32.totalorder %v1139, 1
      %vm1172 = vcmp.ge.s32.totalorder %v1140, 1
      %vm1173 = vcmp.ge.s32.totalorder %v1141, 1
      %vm1174 = vcmp.ge.s32.totalorder %v1142, 1
      %vm1175 = vcmp.ge.s32.totalorder %v1143, 1
      %vm1176 = vcmp.ge.s32.totalorder %v1144, 1
      %vm1177 = vcmp.ge.s32.totalorder %v1145, 1
      %vm1178 = vcmp.ge.s32.totalorder %v1146, 1
      %vm1179 = vcmp.ge.s32.totalorder %v1147, 1
      %vm1180 = vcmp.ge.s32.totalorder %v1148, 1
      %vm1181 = vcmp.ge.s32.totalorder %v1149, 1
      %vm1182 = vcmp.ge.s32.totalorder %v1150, 1
      %vm1183 = vcmp.ge.s32.totalorder %v1151, 1
      %vm1184 = vcmp.ge.s32.totalorder %v1152, 1
      %vm1185 = vcmp.ge.s32.totalorder %v1153, 1
      %vm1186 = vcmp.ge.s32.totalorder %v1154, 1
      %vm1187 = vcmp.ge.s32.totalorder %v1155, 1
      %vm1188 = vcmp.ge.s32.totalorder %v1156, 1
      %vm1189 = vcmp.ge.s32.totalorder %v1157, 1
      %vm1190 = vcmp.ge.s32.totalorder %v1158, 1
      %vm1191 = vcmp.ge.s32.totalorder %v1159, 1
      %vm1192 = vcmp.ge.s32.totalorder %v1160, 1
      %vm1193 = vcmp.ge.s32.totalorder %v1161, 1
      %vm1194 = vcmp.ge.s32.totalorder %v1162, 1
      %vm1195 = vcmp.ge.s32.totalorder %v1163, 1
      %vm1196 = vcmp.ge.s32.totalorder %v1164, 1
      %vm1197 = vcmp.ge.s32.totalorder %v1165, 1
      %vm1198 = vcmp.ge.s32.totalorder %v1166, 1
      %vm1199 = vcmp.ge.s32.totalorder %v1167, 1
      %vm1200 = vcmp.ge.s32.totalorder %v1168, 1
      %vm1201 = vcmp.ge.s32.totalorder %v1169, 1
      %v1202 = vsel %vm1170, 1, 0
      %v1203 = vsel %vm1171, 1, 0
      %v1204 = vsel %vm1172, 1, 0
      %v1205 = vsel %vm1173, 1, 0
      %v1206 = vsel %vm1174, 1, 0
      %v1207 = vsel %vm1175, 1, 0
      %v1208 = vsel %vm1176, 1, 0
      %v1209 = vsel %vm1177, 1, 0
      %v1210 = vsel %vm1178, 1, 0
      %v1211 = vsel %vm1179, 1, 0
      %v1212 = vsel %vm1180, 1, 0
      %v1213 = vsel %vm1181, 1, 0
      %v1214 = vsel %vm1182, 1, 0
      %v1215 = vsel %vm1183, 1, 0
      %v1216 = vsel %vm1184, 1, 0
      %v1217 = vsel %vm1185, 1, 0
      %v1218 = vsel %vm1186, 1, 0
      %v1219 = vsel %vm1187, 1, 0
      %v1220 = vsel %vm1188, 1, 0
      %v1221 = vsel %vm1189, 1, 0
      %v1222 = vsel %vm1190, 1, 0
      %v1223 = vsel %vm1191, 1, 0
      %v1224 = vsel %vm1192, 1, 0
      %v1225 = vsel %vm1193, 1, 0
      %v1226 = vsel %vm1194, 1, 0
      %v1227 = vsel %vm1195, 1, 0
      %v1228 = vsel %vm1196, 1, 0
      %v1229 = vsel %vm1197, 1, 0
      %v1230 = vsel %vm1198, 1, 0
      %v1231 = vsel %vm1199, 1, 0
      %v1232 = vsel %vm1200, 1, 0
      %v1233 = vsel %vm1201, 1, 0
      %v1234 = vcvt.s32.f32 %v1202
      %v1235 = vcvt.s32.f32 %v1203
      %v1236 = vcvt.s32.f32 %v1204
      %v1237 = vcvt.s32.f32 %v1205
      %v1238 = vcvt.s32.f32 %v1206
      %v1239 = vcvt.s32.f32 %v1207
      %v1240 = vcvt.s32.f32 %v1208
      %v1241 = vcvt.s32.f32 %v1209
      %v1242 = vcvt.s32.f32 %v1210
      %v1243 = vcvt.s32.f32 %v1211
      %v1244 = vcvt.s32.f32 %v1212
      %v1245 = vcvt.s32.f32 %v1213
      %v1246 = vcvt.s32.f32 %v1214
      %v1247 = vcvt.s32.f32 %v1215
      %v1248 = vcvt.s32.f32 %v1216
      %v1249 = vcvt.s32.f32 %v1217
      %v1250 = vcvt.s32.f32 %v1218
      %v1251 = vcvt.s32.f32 %v1219
      %v1252 = vcvt.s32.f32 %v1220
      %v1253 = vcvt.s32.f32 %v1221
      %v1254 = vcvt.s32.f32 %v1222
      %v1255 = vcvt.s32.f32 %v1223
      %v1256 = vcvt.s32.f32 %v1224
      %v1257 = vcvt.s32.f32 %v1225
      %v1258 = vcvt.s32.f32 %v1226
      %v1259 = vcvt.s32.f32 %v1227
      %v1260 = vcvt.s32.f32 %v1228
      %v1261 = vcvt.s32.f32 %v1229
      %v1262 = vcvt.s32.f32 %v1230
      %v1263 = vcvt.s32.f32 %v1231
      %v1264 = vcvt.s32.f32 %v1232
      %v1265 = vcvt.s32.f32 %v1233
      %v1266 = vpack.c.bf16 %v1235, %v1234
      %v1267 = vpack.c.bf16 %v1237, %v1236
      %v1268 = vpack.c.bf16 %v1239, %v1238
      %v1269 = vpack.c.bf16 %v1241, %v1240
      %v1270 = vpack.c.bf16 %v1243, %v1242
      %v1271 = vpack.c.bf16 %v1245, %v1244
      %v1272 = vpack.c.bf16 %v1247, %v1246
      %v1273 = vpack.c.bf16 %v1249, %v1248
      %v1274 = vpack.c.bf16 %v1251, %v1250
      %v1275 = vpack.c.bf16 %v1253, %v1252
      %v1276 = vpack.c.bf16 %v1255, %v1254
      %v1277 = vpack.c.bf16 %v1257, %v1256
      %v1278 = vpack.c.bf16 %v1259, %v1258
      %v1279 = vpack.c.bf16 %v1261, %v1260
      %v1280 = vpack.c.bf16 %v1263, %v1262
      %v1281 = vpack.c.bf16 %v1265, %v1264
      %vm1282 = vcmp.le.s32.totalorder %v1138, 14
      %vm1283 = vcmp.le.s32.totalorder %v1139, 14
      %vm1284 = vcmp.le.s32.totalorder %v1140, 14
      %vm1285 = vcmp.le.s32.totalorder %v1141, 14
      %vm1286 = vcmp.le.s32.totalorder %v1142, 14
      %vm1287 = vcmp.le.s32.totalorder %v1143, 14
      %vm1288 = vcmp.le.s32.totalorder %v1144, 14
      %vm1289 = vcmp.le.s32.totalorder %v1145, 14
      %vm1290 = vcmp.le.s32.totalorder %v1146, 14
      %vm1291 = vcmp.le.s32.totalorder %v1147, 14
      %vm1292 = vcmp.le.s32.totalorder %v1148, 14
      %vm1293 = vcmp.le.s32.totalorder %v1149, 14
      %vm1294 = vcmp.le.s32.totalorder %v1150, 14
      %vm1295 = vcmp.le.s32.totalorder %v1151, 14
      %vm1296 = vcmp.le.s32.totalorder %v1152, 14
      %vm1297 = vcmp.le.s32.totalorder %v1153, 14
      %vm1298 = vcmp.le.s32.totalorder %v1154, 14
      %vm1299 = vcmp.le.s32.totalorder %v1155, 14
      %vm1300 = vcmp.le.s32.totalorder %v1156, 14
      %vm1301 = vcmp.le.s32.totalorder %v1157, 14
      %vm1302 = vcmp.le.s32.totalorder %v1158, 14
      %vm1303 = vcmp.le.s32.totalorder %v1159, 14
      %vm1304 = vcmp.le.s32.totalorder %v1160, 14
      %vm1305 = vcmp.le.s32.totalorder %v1161, 14
      %vm1306 = vcmp.le.s32.totalorder %v1162, 14
      %vm1307 = vcmp.le.s32.totalorder %v1163, 14
      %vm1308 = vcmp.le.s32.totalorder %v1164, 14
      %vm1309 = vcmp.le.s32.totalorder %v1165, 14
      %vm1310 = vcmp.le.s32.totalorder %v1166, 14
      %vm1311 = vcmp.le.s32.totalorder %v1167, 14
      %vm1312 = vcmp.le.s32.totalorder %v1168, 14
      %vm1313 = vcmp.le.s32.totalorder %v1169, 14
      %v1314 = vsel %vm1282, 1, 0
      %v1315 = vsel %vm1283, 1, 0
      %v1316 = vsel %vm1284, 1, 0
      %v1317 = vsel %vm1285, 1, 0
      %v1318 = vsel %vm1286, 1, 0
      %v1319 = vsel %vm1287, 1, 0
      %v1320 = vsel %vm1288, 1, 0
      %v1321 = vsel %vm1289, 1, 0
      %v1322 = vsel %vm1290, 1, 0
      %v1323 = vsel %vm1291, 1, 0
      %v1324 = vsel %vm1292, 1, 0
      %v1325 = vsel %vm1293, 1, 0
      %v1326 = vsel %vm1294, 1, 0
      %v1327 = vsel %vm1295, 1, 0
      %v1328 = vsel %vm1296, 1, 0
      %v1329 = vsel %vm1297, 1, 0
      %v1330 = vsel %vm1298, 1, 0
      %v1331 = vsel %vm1299, 1, 0
      %v1332 = vsel %vm1300, 1, 0
      %v1333 = vsel %vm1301, 1, 0
      %v1334 = vsel %vm1302, 1, 0
      %v1335 = vsel %vm1303, 1, 0
      %v1336 = vsel %vm1304, 1, 0
      %v1337 = vsel %vm1305, 1, 0
      %v1338 = vsel %vm1306, 1, 0
      %v1339 = vsel %vm1307, 1, 0
      %v1340 = vsel %vm1308, 1, 0
      %v1341 = vsel %vm1309, 1, 0
      %v1342 = vsel %vm1310, 1, 0
      %v1343 = vsel %vm1311, 1, 0
      %v1344 = vsel %vm1312, 1, 0
      %v1345 = vsel %vm1313, 1, 0
      %v1346 = vcvt.s32.f32 %v1314
      %v1347 = vcvt.s32.f32 %v1315
      %v1348 = vcvt.s32.f32 %v1316
      %v1349 = vcvt.s32.f32 %v1317
      %v1350 = vcvt.s32.f32 %v1318
      %v1351 = vcvt.s32.f32 %v1319
      %v1352 = vcvt.s32.f32 %v1320
      %v1353 = vcvt.s32.f32 %v1321
      %v1354 = vcvt.s32.f32 %v1322
      %v1355 = vcvt.s32.f32 %v1323
      %v1356 = vcvt.s32.f32 %v1324
      %v1357 = vcvt.s32.f32 %v1325
      %v1358 = vcvt.s32.f32 %v1326
      %v1359 = vcvt.s32.f32 %v1327
      %v1360 = vcvt.s32.f32 %v1328
      %v1361 = vcvt.s32.f32 %v1329
      %v1362 = vcvt.s32.f32 %v1330
      %v1363 = vcvt.s32.f32 %v1331
      %v1364 = vcvt.s32.f32 %v1332
      %v1365 = vcvt.s32.f32 %v1333
      %v1366 = vcvt.s32.f32 %v1334
      %v1367 = vcvt.s32.f32 %v1335
      %v1368 = vcvt.s32.f32 %v1336
      %v1369 = vcvt.s32.f32 %v1337
      %v1370 = vcvt.s32.f32 %v1338
      %v1371 = vcvt.s32.f32 %v1339
      %v1372 = vcvt.s32.f32 %v1340
      %v1373 = vcvt.s32.f32 %v1341
      %v1374 = vcvt.s32.f32 %v1342
      %v1375 = vcvt.s32.f32 %v1343
      %v1376 = vcvt.s32.f32 %v1344
      %v1377 = vcvt.s32.f32 %v1345
      %v1378 = vpack.c.bf16 %v1347, %v1346
      %v1379 = vpack.c.bf16 %v1349, %v1348
      %v1380 = vpack.c.bf16 %v1351, %v1350
      %v1381 = vpack.c.bf16 %v1353, %v1352
      %v1382 = vpack.c.bf16 %v1355, %v1354
      %v1383 = vpack.c.bf16 %v1357, %v1356
      %v1384 = vpack.c.bf16 %v1359, %v1358
      %v1385 = vpack.c.bf16 %v1361, %v1360
      %v1386 = vpack.c.bf16 %v1363, %v1362
      %v1387 = vpack.c.bf16 %v1365, %v1364
      %v1388 = vpack.c.bf16 %v1367, %v1366
      %v1389 = vpack.c.bf16 %v1369, %v1368
      %v1390 = vpack.c.bf16 %v1371, %v1370
      %v1391 = vpack.c.bf16 %v1373, %v1372
      %v1392 = vpack.c.bf16 %v1375, %v1374
      %v1393 = vpack.c.bf16 %v1377, %v1376
      %v1394 = vld [vmem:[#allocation2] sm:$0x80]
      %v1395 = vld [vmem:[#allocation2 + $0x8] sm:$0xff]
      %v1396 = vld [vmem:[#allocation2 + $0x10] sm:$0xff]
      %v1397 = vld [vmem:[#allocation2 + $0x18] sm:$0xff]
      %v1398 = vld [vmem:[#allocation2 + $0x20] sm:$0xff]
      %v1399 = vld [vmem:[#allocation2 + $0x28] sm:$0xff]
      %v1400 = vld [vmem:[#allocation2 + $0x30] sm:$0xff]
      %v1401 = vld [vmem:[#allocation2 + $0x38] sm:$0xff]
      %v1402 = vld [vmem:[#allocation2 + $0x40] sm:$0xff]
      %v1403 = vld [vmem:[#allocation2 + $0x48] sm:$0xff]
      %v1404 = vld [vmem:[#allocation2 + $0x50] sm:$0xff]
      %v1405 = vld [vmem:[#allocation2 + $0x58] sm:$0xff]
      %v1406 = vld [vmem:[#allocation2 + $0x60] sm:$0xff]
      %v1407 = vld [vmem:[#allocation2 + $0x68] sm:$0xff]
      %v1408 = vld [vmem:[#allocation2 + $0x70] sm:$0xff]
      %v1409 = vld [vmem:[#allocation2 + $0x78] sm:$0xff]
      %v1410 = vld [vmem:[#allocation2 + $0x80] sm:$0xff]
      %vm1411 = vsmask.f32 7424
      %v1413 = vshll.u32 %v1266, 16
      %v1415 = vrot.slane %v1413, 1
      %v1416 = vshrl.u32 %v1266, 16
      %v1418 = vor.u32 %v1416, %v1415
      %v1420 = vshll.u32 %v1267, 16
      %v1422 = vrot.slane %v1420, 1
      %v1423 = vsel %vm1411, %v1418, %v1422
      %v1424 = vshrl.u32 %v1267, 16
      %v1426 = vor.u32 %v1424, %v1422
      %v1428 = vshll.u32 %v1268, 16
      %v1430 = vrot.slane %v1428, 1
      %v1431 = vsel %vm1411, %v1426, %v1430
      %v1432 = vshrl.u32 %v1268, 16
      %v1434 = vor.u32 %v1432, %v1430
      %v1436 = vshll.u32 %v1269, 16
      %v1438 = vrot.slane %v1436, 1
      %v1439 = vsel %vm1411, %v1434, %v1438
      %v1440 = vshrl.u32 %v1269, 16
      %v1442 = vor.u32 %v1440, %v1438
      %v1444 = vshll.u32 %v1270, 16
      %v1446 = vrot.slane %v1444, 1
      %v1447 = vsel %vm1411, %v1442, %v1446
      %v1448 = vshrl.u32 %v1270, 16
      %v1450 = vor.u32 %v1448, %v1446
      %v1452 = vshll.u32 %v1271, 16
      %v1454 = vrot.slane %v1452, 1
      %v1455 = vsel %vm1411, %v1450, %v1454
      %v1456 = vshrl.u32 %v1271, 16
      %v1458 = vor.u32 %v1456, %v1454
      %v1460 = vshll.u32 %v1272, 16
      %v1462 = vrot.slane %v1460, 1
      %v1463 = vsel %vm1411, %v1458, %v1462
      %v1464 = vshrl.u32 %v1272, 16
      %v1466 = vor.u32 %v1464, %v1462
      %v1468 = vshll.u32 %v1273, 16
      %v1470 = vrot.slane %v1468, 1
      %v1471 = vsel %vm1411, %v1466, %v1470
      %v1472 = vshrl.u32 %v1273, 16
      %v1474 = vor.u32 %v1472, %v1470
      %v1476 = vshll.u32 %v1274, 16
      %v1478 = vrot.slane %v1476, 1
      %v1479 = vsel %vm1411, %v1474, %v1478
      %v1480 = vshrl.u32 %v1274, 16
      %v1482 = vor.u32 %v1480, %v1478
      %v1484 = vshll.u32 %v1275, 16
      %v1486 = vrot.slane %v1484, 1
      %v1487 = vsel %vm1411, %v1482, %v1486
      %v1488 = vshrl.u32 %v1275, 16
      %v1490 = vor.u32 %v1488, %v1486
      %v1492 = vshll.u32 %v1276, 16
      %v1494 = vrot.slane %v1492, 1
      %v1495 = vsel %vm1411, %v1490, %v1494
      %v1496 = vshrl.u32 %v1276, 16
      %v1498 = vor.u32 %v1496, %v1494
      %v1500 = vshll.u32 %v1277, 16
      %v1502 = vrot.slane %v1500, 1
      %v1503 = vsel %vm1411, %v1498, %v1502
      %v1504 = vshrl.u32 %v1277, 16
      %v1506 = vor.u32 %v1504, %v1502
      %v1508 = vshll.u32 %v1278, 16
      %v1510 = vrot.slane %v1508, 1
      %v1511 = vsel %vm1411, %v1506, %v1510
      %v1512 = vshrl.u32 %v1278, 16
      %v1514 = vor.u32 %v1512, %v1510
      %v1516 = vshll.u32 %v1279, 16
      %v1518 = vrot.slane %v1516, 1
      %v1519 = vsel %vm1411, %v1514, %v1518
      %v1520 = vshrl.u32 %v1279, 16
      %v1522 = vor.u32 %v1520, %v1518
      %v1524 = vshll.u32 %v1280, 16
      %v1526 = vrot.slane %v1524, 1
      %v1527 = vsel %vm1411, %v1522, %v1526
      %v1528 = vshrl.u32 %v1280, 16
      %v1530 = vor.u32 %v1528, %v1526
      %v1532 = vshll.u32 %v1281, 16
      %v1534 = vrot.slane %v1532, 1
      %v1535 = vsel %vm1411, %v1530, %v1534
      %v1536 = vshrl.u32 %v1281, 16
      %v1538 = vor.u32 %v1536, %v1534
      %v1556 = vmul.bf16 %v1394, %v1415
      %v1557 = vmul.bf16 %v1395, %v1423
      %v1558 = vmul.bf16 %v1396, %v1431
      %v1559 = vmul.bf16 %v1397, %v1439
      %v1560 = vmul.bf16 %v1398, %v1447
      %v1561 = vmul.bf16 %v1399, %v1455
      %v1562 = vmul.bf16 %v1400, %v1463
      %v1563 = vmul.bf16 %v1401, %v1471
      %v1564 = vmul.bf16 %v1402, %v1479
      %v1565 = vmul.bf16 %v1403, %v1487
      %v1566 = vmul.bf16 %v1404, %v1495
      %v1567 = vmul.bf16 %v1405, %v1503
      %v1568 = vmul.bf16 %v1406, %v1511
      %v1569 = vmul.bf16 %v1407, %v1519
      %v1570 = vmul.bf16 %v1408, %v1527
      %v1571 = vmul.bf16 %v1409, %v1535
      %v1572 = vmul.bf16 %v1410, %v1538
      %vm1573 = vsmask.f32 256
      %v1575 = vshrl.u32 %v1556, 16
      %v1577 = vrot.slane %v1575, 7
      %v1579 = vshrl.u32 %v1557, 16
      %v1581 = vrot.slane %v1579, 7
      %v1582 = vshll.u32 %v1557, 16
      %v1584 = vor.u32 %v1581, %v1582
      %v1585 = vsel %vm1573, %v1577, %v1584
      %v1587 = vshrl.u32 %v1558, 16
      %v1589 = vrot.slane %v1587, 7
      %v1590 = vshll.u32 %v1558, 16
      %v1592 = vor.u32 %v1589, %v1590
      %v1593 = vsel %vm1573, %v1581, %v1592
      %v1595 = vshrl.u32 %v1559, 16
      %v1597 = vrot.slane %v1595, 7
      %v1598 = vshll.u32 %v1559, 16
      %v1600 = vor.u32 %v1597, %v1598
      %v1601 = vsel %vm1573, %v1589, %v1600
      %v1603 = vshrl.u32 %v1560, 16
      %v1605 = vrot.slane %v1603, 7
      %v1606 = vshll.u32 %v1560, 16
      %v1608 = vor.u32 %v1605, %v1606
      %v1609 = vsel %vm1573, %v1597, %v1608
      %v1611 = vshrl.u32 %v1561, 16
      %v1613 = vrot.slane %v1611, 7
      %v1614 = vshll.u32 %v1561, 16
      %v1616 = vor.u32 %v1613, %v1614
      %v1617 = vsel %vm1573, %v1605, %v1616
      %v1619 = vshrl.u32 %v1562, 16
      %v1621 = vrot.slane %v1619, 7
      %v1622 = vshll.u32 %v1562, 16
      %v1624 = vor.u32 %v1621, %v1622
      %v1625 = vsel %vm1573, %v1613, %v1624
      %v1627 = vshrl.u32 %v1563, 16
      %v1629 = vrot.slane %v1627, 7
      %v1630 = vshll.u32 %v1563, 16
      %v1632 = vor.u32 %v1629, %v1630
      %v1633 = vsel %vm1573, %v1621, %v1632
      %v1635 = vshrl.u32 %v1564, 16
      %v1637 = vrot.slane %v1635, 7
      %v1638 = vshll.u32 %v1564, 16
      %v1640 = vor.u32 %v1637, %v1638
      %v1641 = vsel %vm1573, %v1629, %v1640
      %v1643 = vshrl.u32 %v1565, 16
      %v1645 = vrot.slane %v1643, 7
      %v1646 = vshll.u32 %v1565, 16
      %v1648 = vor.u32 %v1645, %v1646
      %v1649 = vsel %vm1573, %v1637, %v1648
      %v1651 = vshrl.u32 %v1566, 16
      %v1653 = vrot.slane %v1651, 7
      %v1654 = vshll.u32 %v1566, 16
      %v1656 = vor.u32 %v1653, %v1654
      %v1657 = vsel %vm1573, %v1645, %v1656
      %v1659 = vshrl.u32 %v1567, 16
      %v1661 = vrot.slane %v1659, 7
      %v1662 = vshll.u32 %v1567, 16
      %v1664 = vor.u32 %v1661, %v1662
      %v1665 = vsel %vm1573, %v1653, %v1664
      %v1667 = vshrl.u32 %v1568, 16
      %v1669 = vrot.slane %v1667, 7
      %v1670 = vshll.u32 %v1568, 16
      %v1672 = vor.u32 %v1669, %v1670
      %v1673 = vsel %vm1573, %v1661, %v1672
      %v1675 = vshrl.u32 %v1569, 16
      %v1677 = vrot.slane %v1675, 7
      %v1678 = vshll.u32 %v1569, 16
      %v1680 = vor.u32 %v1677, %v1678
      %v1681 = vsel %vm1573, %v1669, %v1680
      %v1683 = vshrl.u32 %v1570, 16
      %v1685 = vrot.slane %v1683, 7
      %v1686 = vshll.u32 %v1570, 16
      %v1688 = vor.u32 %v1685, %v1686
      %v1689 = vsel %vm1573, %v1677, %v1688
      %v1691 = vshrl.u32 %v1571, 16
      %v1693 = vrot.slane %v1691, 7
      %v1694 = vshll.u32 %v1571, 16
      %v1696 = vor.u32 %v1693, %v1694
      %v1697 = vsel %vm1573, %v1685, %v1696
      %v1699 = vshrl.u32 %v1572, 16
      %v1701 = vrot.slane %v1699, 7
      %v1702 = vshll.u32 %v1572, 16
      %v1704 = vor.u32 %v1701, %v1702
      %v1705 = vsel %vm1573, %v1693, %v1704
      %1722 = vst.msk [vmem:[#allocation3] sm:$0xff] %vm716, %v1585
      %1723 = vst.msk [vmem:[#allocation3 + $0x8] sm:$0xff] %vm716, %v1593
      %1724 = vst.msk [vmem:[#allocation3 + $0x10] sm:$0xff] %vm716, %v1601
      %1725 = vst.msk [vmem:[#allocation3 + $0x18] sm:$0xff] %vm716, %v1609
      %1726 = vst.msk [vmem:[#allocation3 + $0x20] sm:$0xff] %vm716, %v1617
      %1727 = vst.msk [vmem:[#allocation3 + $0x28] sm:$0xff] %vm716, %v1625
      %1728 = vst.msk [vmem:[#allocation3 + $0x30] sm:$0xff] %vm716, %v1633
      %1729 = vst.msk [vmem:[#allocation3 + $0x38] sm:$0xff] %vm716, %v1641
      %1730 = vst.msk [vmem:[#allocation3 + $0x40] sm:$0xff] %vm716, %v1649
      %1731 = vst.msk [vmem:[#allocation3 + $0x48] sm:$0xff] %vm716, %v1657
      %1732 = vst.msk [vmem:[#allocation3 + $0x50] sm:$0xff] %vm716, %v1665
      %1733 = vst.msk [vmem:[#allocation3 + $0x58] sm:$0xff] %vm716, %v1673
      %1734 = vst.msk [vmem:[#allocation3 + $0x60] sm:$0xff] %vm716, %v1681
      %1735 = vst.msk [vmem:[#allocation3 + $0x68] sm:$0xff] %vm716, %v1689
      %1736 = vst.msk [vmem:[#allocation3 + $0x70] sm:$0xff] %vm716, %v1697
      %1737 = vst.msk [vmem:[#allocation3 + $0x78] sm:$0xff] %vm716, %v1705
      %v1738 = vld [vmem:[#allocation2 + $0x8] sm:$0xff]
      %v1739 = vld [vmem:[#allocation2 + $0x10] sm:$0xff]
      %v1740 = vld [vmem:[#allocation2 + $0x18] sm:$0xff]
      %v1741 = vld [vmem:[#allocation2 + $0x20] sm:$0xff]
      %v1742 = vld [vmem:[#allocation2 + $0x28] sm:$0xff]
      %v1743 = vld [vmem:[#allocation2 + $0x30] sm:$0xff]
      %v1744 = vld [vmem:[#allocation2 + $0x38] sm:$0xff]
      %v1745 = vld [vmem:[#allocation2 + $0x40] sm:$0xff]
      %v1746 = vld [vmem:[#allocation2 + $0x48] sm:$0xff]
      %v1747 = vld [vmem:[#allocation2 + $0x50] sm:$0xff]
      %v1748 = vld [vmem:[#allocation2 + $0x58] sm:$0xff]
      %v1749 = vld [vmem:[#allocation2 + $0x60] sm:$0xff]
      %v1750 = vld [vmem:[#allocation2 + $0x68] sm:$0xff]
      %v1751 = vld [vmem:[#allocation2 + $0x70] sm:$0xff]
      %v1752 = vld [vmem:[#allocation2 + $0x78] sm:$0xff]
      %v1753 = vld [vmem:[#allocation2 + $0x80] sm:$0xff]
      %1770 = vrot.lane.b32.xlu0 %v1738, 4
      %v1771 = vpop.permute.xlu0 %1770
      %1772 = vrot.lane.b32.xlu0 %v1739, 4
      %v1773 = vpop.permute.xlu0 %1772
      %1774 = vrot.lane.b32.xlu0 %v1740, 4
      %v1775 = vpop.permute.xlu0 %1774
      %1776 = vrot.lane.b32.xlu0 %v1741, 4
      %v1777 = vpop.permute.xlu0 %1776
      %1778 = vrot.lane.b32.xlu0 %v1742, 4
      %v1779 = vpop.permute.xlu0 %1778
      %1780 = vrot.lane.b32.xlu0 %v1743, 4
      %v1781 = vpop.permute.xlu0 %1780
      %1782 = vrot.lane.b32.xlu0 %v1744, 4
      %v1783 = vpop.permute.xlu0 %1782
      %1784 = vrot.lane.b32.xlu0 %v1745, 4
      %v1785 = vpop.permute.xlu0 %1784
      %1786 = vrot.lane.b32.xlu0 %v1746, 4
      %v1787 = vpop.permute.xlu0 %1786
      %1788 = vrot.lane.b32.xlu0 %v1747, 4
      %v1789 = vpop.permute.xlu0 %1788
      %1790 = vrot.lane.b32.xlu0 %v1748, 4
      %v1791 = vpop.permute.xlu0 %1790
      %1792 = vrot.lane.b32.xlu0 %v1749, 4
      %v1793 = vpop.permute.xlu0 %1792
      %1794 = vrot.lane.b32.xlu0 %v1750, 4
      %v1795 = vpop.permute.xlu0 %1794
      %1796 = vrot.lane.b32.xlu0 %v1751, 4
      %v1797 = vpop.permute.xlu0 %1796
      %1798 = vrot.lane.b32.xlu0 %v1752, 4
      %v1799 = vpop.permute.xlu0 %1798
      %1800 = vrot.lane.b32.xlu0 %v1753, 4
      %v1801 = vpop.permute.xlu0 %1800
      %vm1818 = vcmask 64544
      %1819 = vst.msk [vmem:[#allocation3] sm:$0xff] %vm1818, %v1771
      %1820 = vst.msk [vmem:[#allocation3 + $0x8] sm:$0xff] %vm1818, %v1773
      %1821 = vst.msk [vmem:[#allocation3 + $0x10] sm:$0xff] %vm1818, %v1775
      %1822 = vst.msk [vmem:[#allocation3 + $0x18] sm:$0xff] %vm1818, %v1777
      %1823 = vst.msk [vmem:[#allocation3 + $0x20] sm:$0xff] %vm1818, %v1779
      %1824 = vst.msk [vmem:[#allocation3 + $0x28] sm:$0xff] %vm1818, %v1781
      %1825 = vst.msk [vmem:[#allocation3 + $0x30] sm:$0xff] %vm1818, %v1783
      %1826 = vst.msk [vmem:[#allocation3 + $0x38] sm:$0xff] %vm1818, %v1785
      %1827 = vst.msk [vmem:[#allocation3 + $0x40] sm:$0xff] %vm1818, %v1787
      %1828 = vst.msk [vmem:[#allocation3 + $0x48] sm:$0xff] %vm1818, %v1789
      %1829 = vst.msk [vmem:[#allocation3 + $0x50] sm:$0xff] %vm1818, %v1791
      %1830 = vst.msk [vmem:[#allocation3 + $0x58] sm:$0xff] %vm1818, %v1793
      %1831 = vst.msk [vmem:[#allocation3 + $0x60] sm:$0xff] %vm1818, %v1795
      %1832 = vst.msk [vmem:[#allocation3 + $0x68] sm:$0xff] %vm1818, %v1797
      %1833 = vst.msk [vmem:[#allocation3 + $0x70] sm:$0xff] %vm1818, %v1799
      %1834 = vst.msk [vmem:[#allocation3 + $0x78] sm:$0xff] %vm1818, %v1801
      %v1835 = vld [vmem:[#allocation2 + $0x8] sm:$0xff]
      %v1836 = vld [vmem:[#allocation2 + $0x10] sm:$0xff]
      %v1837 = vld [vmem:[#allocation2 + $0x18] sm:$0xff]
      %v1838 = vld [vmem:[#allocation2 + $0x20] sm:$0xff]
      %v1839 = vld [vmem:[#allocation2 + $0x28] sm:$0xff]
      %v1840 = vld [vmem:[#allocation2 + $0x30] sm:$0xff]
      %v1841 = vld [vmem:[#allocation2 + $0x38] sm:$0xff]
      %v1842 = vld [vmem:[#allocation2 + $0x40] sm:$0xff]
      %v1843 = vld [vmem:[#allocation2 + $0x48] sm:$0xff]
      %v1844 = vld [vmem:[#allocation2 + $0x50] sm:$0xff]
      %v1845 = vld [vmem:[#allocation2 + $0x58] sm:$0xff]
      %v1846 = vld [vmem:[#allocation2 + $0x60] sm:$0xff]
      %v1847 = vld [vmem:[#allocation2 + $0x68] sm:$0xff]
      %v1848 = vld [vmem:[#allocation2 + $0x70] sm:$0xff]
      %v1849 = vld [vmem:[#allocation2 + $0x78] sm:$0xff]
      %v1850 = vld [vmem:[#allocation2 + $0x80] sm:$0xff]
      %v1851 = vld [vmem:[#allocation2 + $0x88] sm:$0x1]
      %v1853 = vshrl.u32 %v1378, 16
      %v1855 = vrot.slane %v1853, 7
      %v1856 = vshll.u32 %v1378, 16
      %v1858 = vor.u32 %v1855, %v1856
      %v1860 = vshrl.u32 %v1379, 16
      %v1862 = vrot.slane %v1860, 7
      %v1863 = vshll.u32 %v1379, 16
      %v1865 = vor.u32 %v1862, %v1863
      %v1866 = vsel %vm1573, %v1855, %v1865
      %v1868 = vshrl.u32 %v1380, 16
      %v1870 = vrot.slane %v1868, 7
      %v1871 = vshll.u32 %v1380, 16
      %v1873 = vor.u32 %v1870, %v1871
      %v1874 = vsel %vm1573, %v1862, %v1873
      %v1876 = vshrl.u32 %v1381, 16
      %v1878 = vrot.slane %v1876, 7
      %v1879 = vshll.u32 %v1381, 16
      %v1881 = vor.u32 %v1878, %v1879
      %v1882 = vsel %vm1573, %v1870, %v1881
      %v1884 = vshrl.u32 %v1382, 16
      %v1886 = vrot.slane %v1884, 7
      %v1887 = vshll.u32 %v1382, 16
      %v1889 = vor.u32 %v1886, %v1887
      %v1890 = vsel %vm1573, %v1878, %v1889
      %v1892 = vshrl.u32 %v1383, 16
      %v1894 = vrot.slane %v1892, 7
      %v1895 = vshll.u32 %v1383, 16
      %v1897 = vor.u32 %v1894, %v1895
      %v1898 = vsel %vm1573, %v1886, %v1897
      %v1900 = vshrl.u32 %v1384, 16
      %v1902 = vrot.slane %v1900, 7
      %v1903 = vshll.u32 %v1384, 16
      %v1905 = vor.u32 %v1902, %v1903
      %v1906 = vsel %vm1573, %v1894, %v1905
      %v1908 = vshrl.u32 %v1385, 16
      %v1910 = vrot.slane %v1908, 7
      %v1911 = vshll.u32 %v1385, 16
      %v1913 = vor.u32 %v1910, %v1911
      %v1914 = vsel %vm1573, %v1902, %v1913
      %v1916 = vshrl.u32 %v1386, 16
      %v1918 = vrot.slane %v1916, 7
      %v1919 = vshll.u32 %v1386, 16
      %v1921 = vor.u32 %v1918, %v1919
      %v1922 = vsel %vm1573, %v1910, %v1921
      %v1924 = vshrl.u32 %v1387, 16
      %v1926 = vrot.slane %v1924, 7
      %v1927 = vshll.u32 %v1387, 16
      %v1929 = vor.u32 %v1926, %v1927
      %v1930 = vsel %vm1573, %v1918, %v1929
      %v1932 = vshrl.u32 %v1388, 16
      %v1934 = vrot.slane %v1932, 7
      %v1935 = vshll.u32 %v1388, 16
      %v1937 = vor.u32 %v1934, %v1935
      %v1938 = vsel %vm1573, %v1926, %v1937
      %v1940 = vshrl.u32 %v1389, 16
      %v1942 = vrot.slane %v1940, 7
      %v1943 = vshll.u32 %v1389, 16
      %v1945 = vor.u32 %v1942, %v1943
      %v1946 = vsel %vm1573, %v1934, %v1945
      %v1948 = vshrl.u32 %v1390, 16
      %v1950 = vrot.slane %v1948, 7
      %v1951 = vshll.u32 %v1390, 16
      %v1953 = vor.u32 %v1950, %v1951
      %v1954 = vsel %vm1573, %v1942, %v1953
      %v1956 = vshrl.u32 %v1391, 16
      %v1958 = vrot.slane %v1956, 7
      %v1959 = vshll.u32 %v1391, 16
      %v1961 = vor.u32 %v1958, %v1959
      %v1962 = vsel %vm1573, %v1950, %v1961
      %v1964 = vshrl.u32 %v1392, 16
      %v1966 = vrot.slane %v1964, 7
      %v1967 = vshll.u32 %v1392, 16
      %v1969 = vor.u32 %v1966, %v1967
      %v1970 = vsel %vm1573, %v1958, %v1969
      %v1972 = vshrl.u32 %v1393, 16
      %v1974 = vrot.slane %v1972, 7
      %v1975 = vshll.u32 %v1393, 16
      %v1977 = vor.u32 %v1974, %v1975
      %v1978 = vsel %vm1573, %v1966, %v1977
      %v1996 = vmul.bf16 %v1835, %v1858
      %v1997 = vmul.bf16 %v1836, %v1866
      %v1998 = vmul.bf16 %v1837, %v1874
      %v1999 = vmul.bf16 %v1838, %v1882
      %v2000 = vmul.bf16 %v1839, %v1890
      %v2001 = vmul.bf16 %v1840, %v1898
      %v2002 = vmul.bf16 %v1841, %v1906
      %v2003 = vmul.bf16 %v1842, %v1914
      %v2004 = vmul.bf16 %v1843, %v1922
      %v2005 = vmul.bf16 %v1844, %v1930
      %v2006 = vmul.bf16 %v1845, %v1938
      %v2007 = vmul.bf16 %v1846, %v1946
      %v2008 = vmul.bf16 %v1847, %v1954
      %v2009 = vmul.bf16 %v1848, %v1962
      %v2010 = vmul.bf16 %v1849, %v1970
      %v2011 = vmul.bf16 %v1850, %v1978
      %v2012 = vmul.bf16 %v1851, %v1974
      %v2014 = vshrl.u32 %v1996, 16
      %v2016 = vshll.u32 %v1996, 16
      %v2018 = vrot.slane %v2016, 1
      %v2019 = vor.u32 %v2014, %v2018
      %v2021 = vshll.u32 %v1997, 16
      %v2023 = vrot.slane %v2021, 1
      %v2024 = vsel %vm1411, %v2019, %v2023
      %v2025 = vshrl.u32 %v1997, 16
      %v2027 = vor.u32 %v2025, %v2023
      %v2029 = vshll.u32 %v1998, 16
      %v2031 = vrot.slane %v2029, 1
      %v2032 = vsel %vm1411, %v2027, %v2031
      %v2033 = vshrl.u32 %v1998, 16
      %v2035 = vor.u32 %v2033, %v2031
      %v2037 = vshll.u32 %v1999, 16
      %v2039 = vrot.slane %v2037, 1
      %v2040 = vsel %vm1411, %v2035, %v2039
      %v2041 = vshrl.u32 %v1999, 16
      %v2043 = vor.u32 %v2041, %v2039
      %v2045 = vshll.u32 %v2000, 16
      %v2047 = vrot.slane %v2045, 1
      %v2048 = vsel %vm1411, %v2043, %v2047
      %v2049 = vshrl.u32 %v2000, 16
      %v2051 = vor.u32 %v2049, %v2047
      %v2053 = vshll.u32 %v2001, 16
      %v2055 = vrot.slane %v2053, 1
      %v2056 = vsel %vm1411, %v2051, %v2055
      %v2057 = vshrl.u32 %v2001, 16
      %v2059 = vor.u32 %v2057, %v2055
      %v2061 = vshll.u32 %v2002, 16
      %v2063 = vrot.slane %v2061, 1
      %v2064 = vsel %vm1411, %v2059, %v2063
      %v2065 = vshrl.u32 %v2002, 16
      %v2067 = vor.u32 %v2065, %v2063
      %v2069 = vshll.u32 %v2003, 16
      %v2071 = vrot.slane %v2069, 1
      %v2072 = vsel %vm1411, %v2067, %v2071
      %v2073 = vshrl.u32 %v2003, 16
      %v2075 = vor.u32 %v2073, %v2071
      %v2077 = vshll.u32 %v2004, 16
      %v2079 = vrot.slane %v2077, 1
      %v2080 = vsel %vm1411, %v2075, %v2079
      %v2081 = vshrl.u32 %v2004, 16
      %v2083 = vor.u32 %v2081, %v2079
      %v2085 = vshll.u32 %v2005, 16
      %v2087 = vrot.slane %v2085, 1
      %v2088 = vsel %vm1411, %v2083, %v2087
      %v2089 = vshrl.u32 %v2005, 16
      %v2091 = vor.u32 %v2089, %v2087
      %v2093 = vshll.u32 %v2006, 16
      %v2095 = vrot.slane %v2093, 1
      %v2096 = vsel %vm1411, %v2091, %v2095
      %v2097 = vshrl.u32 %v2006, 16
      %v2099 = vor.u32 %v2097, %v2095
      %v2101 = vshll.u32 %v2007, 16
      %v2103 = vrot.slane %v2101, 1
      %v2104 = vsel %vm1411, %v2099, %v2103
      %v2105 = vshrl.u32 %v2007, 16
      %v2107 = vor.u32 %v2105, %v2103
      %v2109 = vshll.u32 %v2008, 16
      %v2111 = vrot.slane %v2109, 1
      %v2112 = vsel %vm1411, %v2107, %v2111
      %v2113 = vshrl.u32 %v2008, 16
      %v2115 = vor.u32 %v2113, %v2111
      %v2117 = vshll.u32 %v2009, 16
      %v2119 = vrot.slane %v2117, 1
      %v2120 = vsel %vm1411, %v2115, %v2119
      %v2121 = vshrl.u32 %v2009, 16
      %v2123 = vor.u32 %v2121, %v2119
      %v2125 = vshll.u32 %v2010, 16
      %v2127 = vrot.slane %v2125, 1
      %v2128 = vsel %vm1411, %v2123, %v2127
      %v2129 = vshrl.u32 %v2010, 16
      %v2131 = vor.u32 %v2129, %v2127
      %v2133 = vshll.u32 %v2011, 16
      %v2135 = vrot.slane %v2133, 1
      %v2136 = vsel %vm1411, %v2131, %v2135
      %v2137 = vshrl.u32 %v2011, 16
      %v2139 = vor.u32 %v2137, %v2135
      %v2141 = vshll.u32 %v2012, 16
      %v2143 = vrot.slane %v2141, 1
      %v2144 = vsel %vm1411, %v2139, %v2143
      %2145 = vrot.lane.b32.xlu0 %v2024, 8
      %v2146 = vpop.permute.xlu0 %2145
      %2147 = vrot.lane.b32.xlu0 %v2032, 8
      %v2148 = vpop.permute.xlu0 %2147
      %2149 = vrot.lane.b32.xlu0 %v2040, 8
      %v2150 = vpop.permute.xlu0 %2149
      %2151 = vrot.lane.b32.xlu0 %v2048, 8
      %v2152 = vpop.permute.xlu0 %2151
      %2153 = vrot.lane.b32.xlu0 %v2056, 8
      %v2154 = vpop.permute.xlu0 %2153
      %2155 = vrot.lane.b32.xlu0 %v2064, 8
      %v2156 = vpop.permute.xlu0 %2155
      %2157 = vrot.lane.b32.xlu0 %v2072, 8
      %v2158 = vpop.permute.xlu0 %2157
      %2159 = vrot.lane.b32.xlu0 %v2080, 8
      %v2160 = vpop.permute.xlu0 %2159
      %2161 = vrot.lane.b32.xlu0 %v2088, 8
      %v2162 = vpop.permute.xlu0 %2161
      %2163 = vrot.lane.b32.xlu0 %v2096, 8
      %v2164 = vpop.permute.xlu0 %2163
      %2165 = vrot.lane.b32.xlu0 %v2104, 8
      %v2166 = vpop.permute.xlu0 %2165
      %2167 = vrot.lane.b32.xlu0 %v2112, 8
      %v2168 = vpop.permute.xlu0 %2167
      %2169 = vrot.lane.b32.xlu0 %v2120, 8
      %v2170 = vpop.permute.xlu0 %2169
      %2171 = vrot.lane.b32.xlu0 %v2128, 8
      %v2172 = vpop.permute.xlu0 %2171
      %2173 = vrot.lane.b32.xlu0 %v2136, 8
      %v2174 = vpop.permute.xlu0 %2173
      %2175 = vrot.lane.b32.xlu0 %v2144, 8
      %v2176 = vpop.permute.xlu0 %2175
      %vm2193 = vcmask 97344
      %2194 = vst.msk [vmem:[#allocation3] sm:$0xff] %vm2193, %v2146
      %2195 = vst.msk [vmem:[#allocation3 + $0x8] sm:$0xff] %vm2193, %v2148
      %2196 = vst.msk [vmem:[#allocation3 + $0x10] sm:$0xff] %vm2193, %v2150
      %2197 = vst.msk [vmem:[#allocation3 + $0x18] sm:$0xff] %vm2193, %v2152
      %2198 = vst.msk [vmem:[#allocation3 + $0x20] sm:$0xff] %vm2193, %v2154
      %2199 = vst.msk [vmem:[#allocation3 + $0x28] sm:$0xff] %vm2193, %v2156
      %2200 = vst.msk [vmem:[#allocation3 + $0x30] sm:$0xff] %vm2193, %v2158
      %2201 = vst.msk [vmem:[#allocation3 + $0x38] sm:$0xff] %vm2193, %v2160
      %2202 = vst.msk [vmem:[#allocation3 + $0x40] sm:$0xff] %vm2193, %v2162
      %2203 = vst.msk [vmem:[#allocation3 + $0x48] sm:$0xff] %vm2193, %v2164
      %2204 = vst.msk [vmem:[#allocation3 + $0x50] sm:$0xff] %vm2193, %v2166
      %2205 = vst.msk [vmem:[#allocation3 + $0x58] sm:$0xff] %vm2193, %v2168
      %2206 = vst.msk [vmem:[#allocation3 + $0x60] sm:$0xff] %vm2193, %v2170
      %2207 = vst.msk [vmem:[#allocation3 + $0x68] sm:$0xff] %vm2193, %v2172
      %2208 = vst.msk [vmem:[#allocation3 + $0x70] sm:$0xff] %vm2193, %v2174
      %2209 = vst.msk [vmem:[#allocation3 + $0x78] sm:$0xff] %vm2193, %v2176
      %v2210 = vld [vmem:[#allocation2 + $0x8] sm:$0x80]
      %v2211 = vld [vmem:[#allocation2 + $0x10] sm:$0xff]
      %v2212 = vld [vmem:[#allocation2 + $0x18] sm:$0xff]
      %v2213 = vld [vmem:[#allocation2 + $0x20] sm:$0xff]
      %v2214 = vld [vmem:[#allocation2 + $0x28] sm:$0xff]
      %v2215 = vld [vmem:[#allocation2 + $0x30] sm:$0xff]
      %v2216 = vld [vmem:[#allocation2 + $0x38] sm:$0xff]
      %v2217 = vld [vmem:[#allocation2 + $0x40] sm:$0xff]
      %v2218 = vld [vmem:[#allocation2 + $0x48] sm:$0xff]
      %v2219 = vld [vmem:[#allocation2 + $0x50] sm:$0xff]
      %v2220 = vld [vmem:[#allocation2 + $0x58] sm:$0xff]
      %v2221 = vld [vmem:[#allocation2 + $0x60] sm:$0xff]
      %v2222 = vld [vmem:[#allocation2 + $0x68] sm:$0xff]
      %v2223 = vld [vmem:[#allocation2 + $0x70] sm:$0xff]
      %v2224 = vld [vmem:[#allocation2 + $0x78] sm:$0xff]
      %v2225 = vld [vmem:[#allocation2 + $0x80] sm:$0xff]
      %v2226 = vld [vmem:[#allocation2 + $0x88] sm:$0xff]
      %v2227 = vmul.bf16 %v2210, %v1415
      %v2228 = vmul.bf16 %v2211, %v1423
      %v2229 = vmul.bf16 %v2212, %v1431
      %v2230 = vmul.bf16 %v2213, %v1439
      %v2231 = vmul.bf16 %v2214, %v1447
      %v2232 = vmul.bf16 %v2215, %v1455
      %v2233 = vmul.bf16 %v2216, %v1463
      %v2234 = vmul.bf16 %v2217, %v1471
      %v2235 = vmul.bf16 %v2218, %v1479
      %v2236 = vmul.bf16 %v2219, %v1487
      %v2237 = vmul.bf16 %v2220, %v1495
      %v2238 = vmul.bf16 %v2221, %v1503
      %v2239 = vmul.bf16 %v2222, %v1511
      %v2240 = vmul.bf16 %v2223, %v1519
      %v2241 = vmul.bf16 %v2224, %v1527
      %v2242 = vmul.bf16 %v2225, %v1535
      %v2243 = vmul.bf16 %v2226, %v1538
      %v2245 = vshrl.u32 %v2227, 16
      %v2247 = vrot.slane %v2245, 7
      %v2249 = vshrl.u32 %v2228, 16
      %v2251 = vrot.slane %v2249, 7
      %v2252 = vshll.u32 %v2228, 16
      %v2254 = vor.u32 %v2251, %v2252
      %v2255 = vsel %vm1573, %v2247, %v2254
      %v2257 = vshrl.u32 %v2229, 16
      %v2259 = vrot.slane %v2257, 7
      %v2260 = vshll.u32 %v2229, 16
      %v2262 = vor.u32 %v2259, %v2260
      %v2263 = vsel %vm1573, %v2251, %v2262
      %v2265 = vshrl.u32 %v2230, 16
      %v2267 = vrot.slane %v2265, 7
      %v2268 = vshll.u32 %v2230, 16
      %v2270 = vor.u32 %v2267, %v2268
      %v2271 = vsel %vm1573, %v2259, %v2270
      %v2273 = vshrl.u32 %v2231, 16
      %v2275 = vrot.slane %v2273, 7
      %v2276 = vshll.u32 %v2231, 16
      %v2278 = vor.u32 %v2275, %v2276
      %v2279 = vsel %vm1573, %v2267, %v2278
      %v2281 = vshrl.u32 %v2232, 16
      %v2283 = vrot.slane %v2281, 7
      %v2284 = vshll.u32 %v2232, 16
      %v2286 = vor.u32 %v2283, %v2284
      %v2287 = vsel %vm1573, %v2275, %v2286
      %v2289 = vshrl.u32 %v2233, 16
      %v2291 = vrot.slane %v2289, 7
      %v2292 = vshll.u32 %v2233, 16
      %v2294 = vor.u32 %v2291, %v2292
      %v2295 = vsel %vm1573, %v2283, %v2294
      %v2297 = vshrl.u32 %v2234, 16
      %v2299 = vrot.slane %v2297, 7
      %v2300 = vshll.u32 %v2234, 16
      %v2302 = vor.u32 %v2299, %v2300
      %v2303 = vsel %vm1573, %v2291, %v2302
      %v2305 = vshrl.u32 %v2235, 16
      %v2307 = vrot.slane %v2305, 7
      %v2308 = vshll.u32 %v2235, 16
      %v2310 = vor.u32 %v2307, %v2308
      %v2311 = vsel %vm1573, %v2299, %v2310
      %v2313 = vshrl.u32 %v2236, 16
      %v2315 = vrot.slane %v2313, 7
      %v2316 = vshll.u32 %v2236, 16
      %v2318 = vor.u32 %v2315, %v2316
      %v2319 = vsel %vm1573, %v2307, %v2318
      %v2321 = vshrl.u32 %v2237, 16
      %v2323 = vrot.slane %v2321, 7
      %v2324 = vshll.u32 %v2237, 16
      %v2326 = vor.u32 %v2323, %v2324
      %v2327 = vsel %vm1573, %v2315, %v2326
      %v2329 = vshrl.u32 %v2238, 16
      %v2331 = vrot.slane %v2329, 7
      %v2332 = vshll.u32 %v2238, 16
      %v2334 = vor.u32 %v2331, %v2332
      %v2335 = vsel %vm1573, %v2323, %v2334
      %v2337 = vshrl.u32 %v2239, 16
      %v2339 = vrot.slane %v2337, 7
      %v2340 = vshll.u32 %v2239, 16
      %v2342 = vor.u32 %v2339, %v2340
      %v2343 = vsel %vm1573, %v2331, %v2342
      %v2345 = vshrl.u32 %v2240, 16
      %v2347 = vrot.slane %v2345, 7
      %v2348 = vshll.u32 %v2240, 16
      %v2350 = vor.u32 %v2347, %v2348
      %v2351 = vsel %vm1573, %v2339, %v2350
      %v2353 = vshrl.u32 %v2241, 16
      %v2355 = vrot.slane %v2353, 7
      %v2356 = vshll.u32 %v2241, 16
      %v2358 = vor.u32 %v2355, %v2356
      %v2359 = vsel %vm1573, %v2347, %v2358
      %v2361 = vshrl.u32 %v2242, 16
      %v2363 = vrot.slane %v2361, 7
      %v2364 = vshll.u32 %v2242, 16
      %v2366 = vor.u32 %v2363, %v2364
      %v2367 = vsel %vm1573, %v2355, %v2366
      %v2369 = vshrl.u32 %v2243, 16
      %v2371 = vrot.slane %v2369, 7
      %v2372 = vshll.u32 %v2243, 16
      %v2374 = vor.u32 %v2371, %v2372
      %v2375 = vsel %vm1573, %v2363, %v2374
      %2376 = vrot.lane.b32.xlu0 %v2255, 12
      %v2377 = vpop.permute.xlu0 %2376
      %2378 = vrot.lane.b32.xlu0 %v2263, 12
      %v2379 = vpop.permute.xlu0 %2378
      %2380 = vrot.lane.b32.xlu0 %v2271, 12
      %v2381 = vpop.permute.xlu0 %2380
      %2382 = vrot.lane.b32.xlu0 %v2279, 12
      %v2383 = vpop.permute.xlu0 %2382
      %2384 = vrot.lane.b32.xlu0 %v2287, 12
      %v2385 = vpop.permute.xlu0 %2384
      %2386 = vrot.lane.b32.xlu0 %v2295, 12
      %v2387 = vpop.permute.xlu0 %2386
      %2388 = vrot.lane.b32.xlu0 %v2303, 12
      %v2389 = vpop.permute.xlu0 %2388
      %2390 = vrot.lane.b32.xlu0 %v2311, 12
      %v2391 = vpop.permute.xlu0 %2390
      %2392 = vrot.lane.b32.xlu0 %v2319, 12
      %v2393 = vpop.permute.xlu0 %2392
      %2394 = vrot.lane.b32.xlu0 %v2327, 12
      %v2395 = vpop.permute.xlu0 %2394
      %2396 = vrot.lane.b32.xlu0 %v2335, 12
      %v2397 = vpop.permute.xlu0 %2396
      %2398 = vrot.lane.b32.xlu0 %v2343, 12
      %v2399 = vpop.permute.xlu0 %2398
      %2400 = vrot.lane.b32.xlu0 %v2351, 12
      %v2401 = vpop.permute.xlu0 %2400
      %2402 = vrot.lane.b32.xlu0 %v2359, 12
      %v2403 = vpop.permute.xlu0 %2402
      %2404 = vrot.lane.b32.xlu0 %v2367, 12
      %v2405 = vpop.permute.xlu0 %2404
      %2406 = vrot.lane.b32.xlu0 %v2375, 12
      %v2407 = vpop.permute.xlu0 %2406
      %vm2424 = vcmask 130144
      %2425 = vst.msk [vmem:[#allocation3] sm:$0xff] %vm2424, %v2377
      %2426 = vst.msk [vmem:[#allocation3 + $0x8] sm:$0xff] %vm2424, %v2379
      %2427 = vst.msk [vmem:[#allocation3 + $0x10] sm:$0xff] %vm2424, %v2381
      %2428 = vst.msk [vmem:[#allocation3 + $0x18] sm:$0xff] %vm2424, %v2383
      %2429 = vst.msk [vmem:[#allocation3 + $0x20] sm:$0xff] %vm2424, %v2385
      %2430 = vst.msk [vmem:[#allocation3 + $0x28] sm:$0xff] %vm2424, %v2387
      %2431 = vst.msk [vmem:[#allocation3 + $0x30] sm:$0xff] %vm2424, %v2389
      %2432 = vst.msk [vmem:[#allocation3 + $0x38] sm:$0xff] %vm2424, %v2391
      %2433 = vst.msk [vmem:[#allocation3 + $0x40] sm:$0xff] %vm2424, %v2393
      %2434 = vst.msk [vmem:[#allocation3 + $0x48] sm:$0xff] %vm2424, %v2395
      %2435 = vst.msk [vmem:[#allocation3 + $0x50] sm:$0xff] %vm2424, %v2397
      %2436 = vst.msk [vmem:[#allocation3 + $0x58] sm:$0xff] %vm2424, %v2399
      %2437 = vst.msk [vmem:[#allocation3 + $0x60] sm:$0xff] %vm2424, %v2401
      %2438 = vst.msk [vmem:[#allocation3 + $0x68] sm:$0xff] %vm2424, %v2403
      %2439 = vst.msk [vmem:[#allocation3 + $0x70] sm:$0xff] %vm2424, %v2405
      %2440 = vst.msk [vmem:[#allocation3 + $0x78] sm:$0xff] %vm2424, %v2407
      %v2441 = vld [vmem:[#allocation2 + $0x10] sm:$0xff]
      %v2442 = vld [vmem:[#allocation2 + $0x18] sm:$0xff]
      %v2443 = vld [vmem:[#allocation2 + $0x20] sm:$0xff]
      %v2444 = vld [vmem:[#allocation2 + $0x28] sm:$0xff]
      %v2445 = vld [vmem:[#allocation2 + $0x30] sm:$0xff]
      %v2446 = vld [vmem:[#allocation2 + $0x38] sm:$0xff]
      %v2447 = vld [vmem:[#allocation2 + $0x40] sm:$0xff]
      %v2448 = vld [vmem:[#allocation2 + $0x48] sm:$0xff]
      %v2449 = vld [vmem:[#allocation2 + $0x50] sm:$0xff]
      %v2450 = vld [vmem:[#allocation2 + $0x58] sm:$0xff]
      %v2451 = vld [vmem:[#allocation2 + $0x60] sm:$0xff]
      %v2452 = vld [vmem:[#allocation2 + $0x68] sm:$0xff]
      %v2453 = vld [vmem:[#allocation2 + $0x70] sm:$0xff]
      %v2454 = vld [vmem:[#allocation2 + $0x78] sm:$0xff]
      %v2455 = vld [vmem:[#allocation2 + $0x80] sm:$0xff]
      %v2456 = vld [vmem:[#allocation2 + $0x88] sm:$0xff]
      %2473 = vrot.lane.b32.xlu0 %v2441, 16
      %v2474 = vpop.permute.xlu0 %2473
      %2475 = vrot.lane.b32.xlu0 %v2442, 16
      %v2476 = vpop.permute.xlu0 %2475
      %2477 = vrot.lane.b32.xlu0 %v2443, 16
      %v2478 = vpop.permute.xlu0 %2477
      %2479 = vrot.lane.b32.xlu0 %v2444, 16
      %v2480 = vpop.permute.xlu0 %2479
      %2481 = vrot.lane.b32.xlu0 %v2445, 16
      %v2482 = vpop.permute.xlu0 %2481
      %2483 = vrot.lane.b32.xlu0 %v2446, 16
      %v2484 = vpop.permute.xlu0 %2483
      %2485 = vrot.lane.b32.xlu0 %v2447, 16
      %v2486 = vpop.permute.xlu0 %2485
      %2487 = vrot.lane.b32.xlu0 %v2448, 16
      %v2488 = vpop.permute.xlu0 %2487
      %2489 = vrot.lane.b32.xlu0 %v2449, 16
      %v2490 = vpop.permute.xlu0 %2489
      %2491 = vrot.lane.b32.xlu0 %v2450, 16
      %v2492 = vpop.permute.xlu0 %2491
      %2493 = vrot.lane.b32.xlu0 %v2451, 16
      %v2494 = vpop.permute.xlu0 %2493
      %2495 = vrot.lane.b32.xlu0 %v2452, 16
      %v2496 = vpop.permute.xlu0 %2495
      %2497 = vrot.lane.b32.xlu0 %v2453, 16
      %v2498 = vpop.permute.xlu0 %2497
      %2499 = vrot.lane.b32.xlu0 %v2454, 16
      %v2500 = vpop.permute.xlu0 %2499
      %2501 = vrot.lane.b32.xlu0 %v2455, 16
      %v2502 = vpop.permute.xlu0 %2501
      %2503 = vrot.lane.b32.xlu0 %v2456, 16
      %v2504 = vpop.permute.xlu0 %2503
      %vm2521 = vcmask 162944
      %2522 = vst.msk [vmem:[#allocation3] sm:$0xff] %vm2521, %v2474
      %2523 = vst.msk [vmem:[#allocation3 + $0x8] sm:$0xff] %vm2521, %v2476
      %2524 = vst.msk [vmem:[#allocation3 + $0x10] sm:$0xff] %vm2521, %v2478
      %2525 = vst.msk [vmem:[#allocation3 + $0x18] sm:$0xff] %vm2521, %v2480
      %2526 = vst.msk [vmem:[#allocation3 + $0x20] sm:$0xff] %vm2521, %v2482
      %2527 = vst.msk [vmem:[#allocation3 + $0x28] sm:$0xff] %vm2521, %v2484
      %2528 = vst.msk [vmem:[#allocation3 + $0x30] sm:$0xff] %vm2521, %v2486
      %2529 = vst.msk [vmem:[#allocation3 + $0x38] sm:$0xff] %vm2521, %v2488
      %2530 = vst.msk [vmem:[#allocation3 + $0x40] sm:$0xff] %vm2521, %v2490
      %2531 = vst.msk [vmem:[#allocation3 + $0x48] sm:$0xff] %vm2521, %v2492
      %2532 = vst.msk [vmem:[#allocation3 + $0x50] sm:$0xff] %vm2521, %v2494
      %2533 = vst.msk [vmem:[#allocation3 + $0x58] sm:$0xff] %vm2521, %v2496
      %2534 = vst.msk [vmem:[#allocation3 + $0x60] sm:$0xff] %vm2521, %v2498
      %2535 = vst.msk [vmem:[#allocation3 + $0x68] sm:$0xff] %vm2521, %v2500
      %2536 = vst.msk [vmem:[#allocation3 + $0x70] sm:$0xff] %vm2521, %v2502
      %2537 = vst.msk [vmem:[#allocation3 + $0x78] sm:$0xff] %vm2521, %v2504
      %v2538 = vld [vmem:[#allocation2 + $0x10] sm:$0xff]
      %v2539 = vld [vmem:[#allocation2 + $0x18] sm:$0xff]
      %v2540 = vld [vmem:[#allocation2 + $0x20] sm:$0xff]
      %v2541 = vld [vmem:[#allocation2 + $0x28] sm:$0xff]
      %v2542 = vld [vmem:[#allocation2 + $0x30] sm:$0xff]
      %v2543 = vld [vmem:[#allocation2 + $0x38] sm:$0xff]
      %v2544 = vld [vmem:[#allocation2 + $0x40] sm:$0xff]
      %v2545 = vld [vmem:[#allocation2 + $0x48] sm:$0xff]
      %v2546 = vld [vmem:[#allocation2 + $0x50] sm:$0xff]
      %v2547 = vld [vmem:[#allocation2 + $0x58] sm:$0xff]
      %v2548 = vld [vmem:[#allocation2 + $0x60] sm:$0xff]
      %v2549 = vld [vmem:[#allocation2 + $0x68] sm:$0xff]
      %v2550 = vld [vmem:[#allocation2 + $0x70] sm:$0xff]
      %v2551 = vld [vmem:[#allocation2 + $0x78] sm:$0xff]
      %v2552 = vld [vmem:[#allocation2 + $0x80] sm:$0xff]
      %v2553 = vld [vmem:[#allocation2 + $0x88] sm:$0xff]
      %v2554 = vld [vmem:[#allocation2 + $0x90] sm:$0x1]
      %v2555 = vmul.bf16 %v2538, %v1858
      %v2556 = vmul.bf16 %v2539, %v1866
      %v2557 = vmul.bf16 %v2540, %v1874
      %v2558 = vmul.bf16 %v2541, %v1882
      %v2559 = vmul.bf16 %v2542, %v1890
      %v2560 = vmul.bf16 %v2543, %v1898
      %v2561 = vmul.bf16 %v2544, %v1906
      %v2562 = vmul.bf16 %v2545, %v1914
      %v2563 = vmul.bf16 %v2546, %v1922
      %v2564 = vmul.bf16 %v2547, %v1930
      %v2565 = vmul.bf16 %v2548, %v1938
      %v2566 = vmul.bf16 %v2549, %v1946
      %v2567 = vmul.bf16 %v2550, %v1954
      %v2568 = vmul.bf16 %v2551, %v1962
      %v2569 = vmul.bf16 %v2552, %v1970
      %v2570 = vmul.bf16 %v2553, %v1978
      %v2571 = vmul.bf16 %v2554, %v1974
      %v2573 = vshrl.u32 %v2555, 16
      %v2575 = vshll.u32 %v2555, 16
      %v2577 = vrot.slane %v2575, 1
      %v2578 = vor.u32 %v2573, %v2577
      %v2580 = vshll.u32 %v2556, 16
      %v2582 = vrot.slane %v2580, 1
      %v2583 = vsel %vm1411, %v2578, %v2582
      %v2584 = vshrl.u32 %v2556, 16
      %v2586 = vor.u32 %v2584, %v2582
      %v2588 = vshll.u32 %v2557, 16
      %v2590 = vrot.slane %v2588, 1
      %v2591 = vsel %vm1411, %v2586, %v2590
      %v2592 = vshrl.u32 %v2557, 16
      %v2594 = vor.u32 %v2592, %v2590
      %v2596 = vshll.u32 %v2558, 16
      %v2598 = vrot.slane %v2596, 1
      %v2599 = vsel %vm1411, %v2594, %v2598
      %v2600 = vshrl.u32 %v2558, 16
      %v2602 = vor.u32 %v2600, %v2598
      %v2604 = vshll.u32 %v2559, 16
      %v2606 = vrot.slane %v2604, 1
      %v2607 = vsel %vm1411, %v2602, %v2606
      %v2608 = vshrl.u32 %v2559, 16
      %v2610 = vor.u32 %v2608, %v2606
      %v2612 = vshll.u32 %v2560, 16
      %v2614 = vrot.slane %v2612, 1
      %v2615 = vsel %vm1411, %v2610, %v2614
      %v2616 = vshrl.u32 %v2560, 16
      %v2618 = vor.u32 %v2616, %v2614
      %v2620 = vshll.u32 %v2561, 16
      %v2622 = vrot.slane %v2620, 1
      %v2623 = vsel %vm1411, %v2618, %v2622
      %v2624 = vshrl.u32 %v2561, 16
      %v2626 = vor.u32 %v2624, %v2622
      %v2628 = vshll.u32 %v2562, 16
      %v2630 = vrot.slane %v2628, 1
      %v2631 = vsel %vm1411, %v2626, %v2630
      %v2632 = vshrl.u32 %v2562, 16
      %v2634 = vor.u32 %v2632, %v2630
      %v2636 = vshll.u32 %v2563, 16
      %v2638 = vrot.slane %v2636, 1
      %v2639 = vsel %vm1411, %v2634, %v2638
      %v2640 = vshrl.u32 %v2563, 16
      %v2642 = vor.u32 %v2640, %v2638
      %v2644 = vshll.u32 %v2564, 16
      %v2646 = vrot.slane %v2644, 1
      %v2647 = vsel %vm1411, %v2642, %v2646
      %v2648 = vshrl.u32 %v2564, 16
      %v2650 = vor.u32 %v2648, %v2646
      %v2652 = vshll.u32 %v2565, 16
      %v2654 = vrot.slane %v2652, 1
      %v2655 = vsel %vm1411, %v2650, %v2654
      %v2656 = vshrl.u32 %v2565, 16
      %v2658 = vor.u32 %v2656, %v2654
      %v2660 = vshll.u32 %v2566, 16
      %v2662 = vrot.slane %v2660, 1
      %v2663 = vsel %vm1411, %v2658, %v2662
      %v2664 = vshrl.u32 %v2566, 16
      %v2666 = vor.u32 %v2664, %v2662
      %v2668 = vshll.u32 %v2567, 16
      %v2670 = vrot.slane %v2668, 1
      %v2671 = vsel %vm1411, %v2666, %v2670
      %v2672 = vshrl.u32 %v2567, 16
      %v2674 = vor.u32 %v2672, %v2670
      %v2676 = vshll.u32 %v2568, 16
      %v2678 = vrot.slane %v2676, 1
      %v2679 = vsel %vm1411, %v2674, %v2678
      %v2680 = vshrl.u32 %v2568, 16
      %v2682 = vor.u32 %v2680, %v2678
      %v2684 = vshll.u32 %v2569, 16
      %v2686 = vrot.slane %v2684, 1
      %v2687 = vsel %vm1411, %v2682, %v2686
      %v2688 = vshrl.u32 %v2569, 16
      %v2690 = vor.u32 %v2688, %v2686
      %v2692 = vshll.u32 %v2570, 16
      %v2694 = vrot.slane %v2692, 1
      %v2695 = vsel %vm1411, %v2690, %v2694
      %v2696 = vshrl.u32 %v2570, 16
      %v2698 = vor.u32 %v2696, %v2694
      %v2700 = vshll.u32 %v2571, 16
      %v2702 = vrot.slane %v2700, 1
      %v2703 = vsel %vm1411, %v2698, %v2702
      %2704 = vrot.lane.b32.xlu0 %v2583, 20
      %v2705 = vpop.permute.xlu0 %2704
      %2706 = vrot.lane.b32.xlu0 %v2591, 20
      %v2707 = vpop.permute.xlu0 %2706
      %2708 = vrot.lane.b32.xlu0 %v2599, 20
      %v2709 = vpop.permute.xlu0 %2708
      %2710 = vrot.lane.b32.xlu0 %v2607, 20
      %v2711 = vpop.permute.xlu0 %2710
      %2712 = vrot.lane.b32.xlu0 %v2615, 20
      %v2713 = vpop.permute.xlu0 %2712
      %2714 = vrot.lane.b32.xlu0 %v2623, 20
      %v2715 = vpop.permute.xlu0 %2714
      %2716 = vrot.lane.b32.xlu0 %v2631, 20
      %v2717 = vpop.permute.xlu0 %2716
      %2718 = vrot.lane.b32.xlu0 %v2639, 20
      %v2719 = vpop.permute.xlu0 %2718
      %2720 = vrot.lane.b32.xlu0 %v2647, 20
      %v2721 = vpop.permute.xlu0 %2720
      %2722 = vrot.lane.b32.xlu0 %v2655, 20
      %v2723 = vpop.permute.xlu0 %2722
      %2724 = vrot.lane.b32.xlu0 %v2663, 20
      %v2725 = vpop.permute.xlu0 %2724
      %2726 = vrot.lane.b32.xlu0 %v2671, 20
      %v2727 = vpop.permute.xlu0 %2726
      %2728 = vrot.lane.b32.xlu0 %v2679, 20
      %v2729 = vpop.permute.xlu0 %2728
      %2730 = vrot.lane.b32.xlu0 %v2687, 20
      %v2731 = vpop.permute.xlu0 %2730
      %2732 = vrot.lane.b32.xlu0 %v2695, 20
      %v2733 = vpop.permute.xlu0 %2732
      %2734 = vrot.lane.b32.xlu0 %v2703, 20
      %v2735 = vpop.permute.xlu0 %2734
      %vm2752 = vcmask 195744
      %2753 = vst.msk [vmem:[#allocation3] sm:$0xff] %vm2752, %v2705
      %2754 = vst.msk [vmem:[#allocation3 + $0x8] sm:$0xff] %vm2752, %v2707
      %2755 = vst.msk [vmem:[#allocation3 + $0x10] sm:$0xff] %vm2752, %v2709
      %2756 = vst.msk [vmem:[#allocation3 + $0x18] sm:$0xff] %vm2752, %v2711
      %2757 = vst.msk [vmem:[#allocation3 + $0x20] sm:$0xff] %vm2752, %v2713
      %2758 = vst.msk [vmem:[#allocation3 + $0x28] sm:$0xff] %vm2752, %v2715
      %2759 = vst.msk [vmem:[#allocation3 + $0x30] sm:$0xff] %vm2752, %v2717
      %2760 = vst.msk [vmem:[#allocation3 + $0x38] sm:$0xff] %vm2752, %v2719
      %2761 = vst.msk [vmem:[#allocation3 + $0x40] sm:$0xff] %vm2752, %v2721
      %2762 = vst.msk [vmem:[#allocation3 + $0x48] sm:$0xff] %vm2752, %v2723
      %2763 = vst.msk [vmem:[#allocation3 + $0x50] sm:$0xff] %vm2752, %v2725
      %2764 = vst.msk [vmem:[#allocation3 + $0x58] sm:$0xff] %vm2752, %v2727
      %2765 = vst.msk [vmem:[#allocation3 + $0x60] sm:$0xff] %vm2752, %v2729
      %2766 = vst.msk [vmem:[#allocation3 + $0x68] sm:$0xff] %vm2752, %v2731
      %2767 = vst.msk [vmem:[#allocation3 + $0x70] sm:$0xff] %vm2752, %v2733
      %2768 = vst.msk [vmem:[#allocation3 + $0x78] sm:$0xff] %vm2752, %v2735
      %v2769 = vld [vmem:[#allocation2 + $0x10] sm:$0x80]
      %v2770 = vld [vmem:[#allocation2 + $0x18] sm:$0xff]
      %v2771 = vld [vmem:[#allocation2 + $0x20] sm:$0xff]
      %v2772 = vld [vmem:[#allocation2 + $0x28] sm:$0xff]
      %v2773 = vld [vmem:[#allocation2 + $0x30] sm:$0xff]
      %v2774 = vld [vmem:[#allocation2 + $0x38] sm:$0xff]
      %v2775 = vld [vmem:[#allocation2 + $0x40] sm:$0xff]
      %v2776 = vld [vmem:[#allocation2 + $0x48] sm:$0xff]
      %v2777 = vld [vmem:[#allocation2 + $0x50] sm:$0xff]
      %v2778 = vld [vmem:[#allocation2 + $0x58] sm:$0xff]
      %v2779 = vld [vmem:[#allocation2 + $0x60] sm:$0xff]
      %v2780 = vld [vmem:[#allocation2 + $0x68] sm:$0xff]
      %v2781 = vld [vmem:[#allocation2 + $0x70] sm:$0xff]
      %v2782 = vld [vmem:[#allocation2 + $0x78] sm:$0xff]
      %v2783 = vld [vmem:[#allocation2 + $0x80] sm:$0xff]
      %v2784 = vld [vmem:[#allocation2 + $0x88] sm:$0xff]
      %v2785 = vld [vmem:[#allocation2 + $0x90] sm:$0xff]
      %v2786 = vmul.bf16 %v2769, %v1415
      %v2787 = vmul.bf16 %v2770, %v1423
      %v2788 = vmul.bf16 %v2771, %v1431
      %v2789 = vmul.bf16 %v2772, %v1439
      %v2790 = vmul.bf16 %v2773, %v1447
      %v2791 = vmul.bf16 %v2774, %v1455
      %v2792 = vmul.bf16 %v2775, %v1463
      %v2793 = vmul.bf16 %v2776, %v1471
      %v2794 = vmul.bf16 %v2777, %v1479
      %v2795 = vmul.bf16 %v2778, %v1487
      %v2796 = vmul.bf16 %v2779, %v1495
      %v2797 = vmul.bf16 %v2780, %v1503
      %v2798 = vmul.bf16 %v2781, %v1511
      %v2799 = vmul.bf16 %v2782, %v1519
      %v2800 = vmul.bf16 %v2783, %v1527
      %v2801 = vmul.bf16 %v2784, %v1535
      %v2802 = vmul.bf16 %v2785, %v1538
      %v2804 = vshrl.u32 %v2786, 16
      %v2806 = vrot.slane %v2804, 7
      %v2808 = vshrl.u32 %v2787, 16
      %v2810 = vrot.slane %v2808, 7
      %v2811 = vshll.u32 %v2787, 16
      %v2813 = vor.u32 %v2810, %v2811
      %v2814 = vsel %vm1573, %v2806, %v2813
      %v2816 = vshrl.u32 %v2788, 16
      %v2818 = vrot.slane %v2816, 7
      %v2819 = vshll.u32 %v2788, 16
      %v2821 = vor.u32 %v2818, %v2819
      %v2822 = vsel %vm1573, %v2810, %v2821
      %v2824 = vshrl.u32 %v2789, 16
      %v2826 = vrot.slane %v2824, 7
      %v2827 = vshll.u32 %v2789, 16
      %v2829 = vor.u32 %v2826, %v2827
      %v2830 = vsel %vm1573, %v2818, %v2829
      %v2832 = vshrl.u32 %v2790, 16
      %v2834 = vrot.slane %v2832, 7
      %v2835 = vshll.u32 %v2790, 16
      %v2837 = vor.u32 %v2834, %v2835
      %v2838 = vsel %vm1573, %v2826, %v2837
      %v2840 = vshrl.u32 %v2791, 16
      %v2842 = vrot.slane %v2840, 7
      %v2843 = vshll.u32 %v2791, 16
      %v2845 = vor.u32 %v2842, %v2843
      %v2846 = vsel %vm1573, %v2834, %v2845
      %v2848 = vshrl.u32 %v2792, 16
      %v2850 = vrot.slane %v2848, 7
      %v2851 = vshll.u32 %v2792, 16
      %v2853 = vor.u32 %v2850, %v2851
      %v2854 = vsel %vm1573, %v2842, %v2853
      %v2856 = vshrl.u32 %v2793, 16
      %v2858 = vrot.slane %v2856, 7
      %v2859 = vshll.u32 %v2793, 16
      %v2861 = vor.u32 %v2858, %v2859
      %v2862 = vsel %vm1573, %v2850, %v2861
      %v2864 = vshrl.u32 %v2794, 16
      %v2866 = vrot.slane %v2864, 7
      %v2867 = vshll.u32 %v2794, 16
      %v2869 = vor.u32 %v2866, %v2867
      %v2870 = vsel %vm1573, %v2858, %v2869
      %v2872 = vshrl.u32 %v2795, 16
      %v2874 = vrot.slane %v2872, 7
      %v2875 = vshll.u32 %v2795, 16
      %v2877 = vor.u32 %v2874, %v2875
      %v2878 = vsel %vm1573, %v2866, %v2877
      %v2880 = vshrl.u32 %v2796, 16
      %v2882 = vrot.slane %v2880, 7
      %v2883 = vshll.u32 %v2796, 16
      %v2885 = vor.u32 %v2882, %v2883
      %v2886 = vsel %vm1573, %v2874, %v2885
      %v2888 = vshrl.u32 %v2797, 16
      %v2890 = vrot.slane %v2888, 7
      %v2891 = vshll.u32 %v2797, 16
      %v2893 = vor.u32 %v2890, %v2891
      %v2894 = vsel %vm1573, %v2882, %v2893
      %v2896 = vshrl.u32 %v2798, 16
      %v2898 = vrot.slane %v2896, 7
      %v2899 = vshll.u32 %v2798, 16
      %v2901 = vor.u32 %v2898, %v2899
      %v2902 = vsel %vm1573, %v2890, %v2901
      %v2904 = vshrl.u32 %v2799, 16
      %v2906 = vrot.slane %v2904, 7
      %v2907 = vshll.u32 %v2799, 16
      %v2909 = vor.u32 %v2906, %v2907
      %v2910 = vsel %vm1573, %v2898, %v2909
      %v2912 = vshrl.u32 %v2800, 16
      %v2914 = vrot.slane %v2912, 7
      %v2915 = vshll.u32 %v2800, 16
      %v2917 = vor.u32 %v2914, %v2915
      %v2918 = vsel %vm1573, %v2906, %v2917
      %v2920 = vshrl.u32 %v2801, 16
      %v2922 = vrot.slane %v2920, 7
      %v2923 = vshll.u32 %v2801, 16
      %v2925 = vor.u32 %v2922, %v2923
      %v2926 = vsel %vm1573, %v2914, %v2925
      %v2928 = vshrl.u32 %v2802, 16
      %v2930 = vrot.slane %v2928, 7
      %v2931 = vshll.u32 %v2802, 16
      %v2933 = vor.u32 %v2930, %v2931
      %v2934 = vsel %vm1573, %v2922, %v2933
      %2935 = vrot.lane.b32.xlu0 %v2814, 24
      %v2936 = vpop.permute.xlu0 %2935
      %2937 = vrot.lane.b32.xlu0 %v2822, 24
      %v2938 = vpop.permute.xlu0 %2937
      %2939 = vrot.lane.b32.xlu0 %v2830, 24
      %v2940 = vpop.permute.xlu0 %2939
      %2941 = vrot.lane.b32.xlu0 %v2838, 24
      %v2942 = vpop.permute.xlu0 %2941
      %2943 = vrot.lane.b32.xlu0 %v2846, 24
      %v2944 = vpop.permute.xlu0 %2943
      %2945 = vrot.lane.b32.xlu0 %v2854, 24
      %v2946 = vpop.permute.xlu0 %2945
      %2947 = vrot.lane.b32.xlu0 %v2862, 24
      %v2948 = vpop.permute.xlu0 %2947
      %2949 = vrot.lane.b32.xlu0 %v2870, 24
      %v2950 = vpop.permute.xlu0 %2949
      %2951 = vrot.lane.b32.xlu0 %v2878, 24
      %v2952 = vpop.permute.xlu0 %2951
      %2953 = vrot.lane.b32.xlu0 %v2886, 24
      %v2954 = vpop.permute.xlu0 %2953
      %2955 = vrot.lane.b32.xlu0 %v2894, 24
      %v2956 = vpop.permute.xlu0 %2955
      %2957 = vrot.lane.b32.xlu0 %v2902, 24
      %v2958 = vpop.permute.xlu0 %2957
      %2959 = vrot.lane.b32.xlu0 %v2910, 24
      %v2960 = vpop.permute.xlu0 %2959
      %2961 = vrot.lane.b32.xlu0 %v2918, 24
      %v2962 = vpop.permute.xlu0 %2961
      %2963 = vrot.lane.b32.xlu0 %v2926, 24
      %v2964 = vpop.permute.xlu0 %2963
      %2965 = vrot.lane.b32.xlu0 %v2934, 24
      %v2966 = vpop.permute.xlu0 %2965
      %vm2983 = vcmask 228544
      %2984 = vst.msk [vmem:[#allocation3] sm:$0xff] %vm2983, %v2936
      %2985 = vst.msk [vmem:[#allocation3 + $0x8] sm:$0xff] %vm2983, %v2938
      %2986 = vst.msk [vmem:[#allocation3 + $0x10] sm:$0xff] %vm2983, %v2940
      %2987 = vst.msk [vmem:[#allocation3 + $0x18] sm:$0xff] %vm2983, %v2942
      %2988 = vst.msk [vmem:[#allocation3 + $0x20] sm:$0xff] %vm2983, %v2944
      %2989 = vst.msk [vmem:[#allocation3 + $0x28] sm:$0xff] %vm2983, %v2946
      %2990 = vst.msk [vmem:[#allocation3 + $0x30] sm:$0xff] %vm2983, %v2948
      %2991 = vst.msk [vmem:[#allocation3 + $0x38] sm:$0xff] %vm2983, %v2950
      %2992 = vst.msk [vmem:[#allocation3 + $0x40] sm:$0xff] %vm2983, %v2952
      %2993 = vst.msk [vmem:[#allocation3 + $0x48] sm:$0xff] %vm2983, %v2954
      %2994 = vst.msk [vmem:[#allocation3 + $0x50] sm:$0xff] %vm2983, %v2956
      %2995 = vst.msk [vmem:[#allocation3 + $0x58] sm:$0xff] %vm2983, %v2958
      %2996 = vst.msk [vmem:[#allocation3 + $0x60] sm:$0xff] %vm2983, %v2960
      %2997 = vst.msk [vmem:[#allocation3 + $0x68] sm:$0xff] %vm2983, %v2962
      %2998 = vst.msk [vmem:[#allocation3 + $0x70] sm:$0xff] %vm2983, %v2964
      %2999 = vst.msk [vmem:[#allocation3 + $0x78] sm:$0xff] %vm2983, %v2966
      %v3000 = vld [vmem:[#allocation2 + $0x18] sm:$0xff]
      %v3001 = vld [vmem:[#allocation2 + $0x20] sm:$0xff]
      %v3002 = vld [vmem:[#allocation2 + $0x28] sm:$0xff]
      %v3003 = vld [vmem:[#allocation2 + $0x30] sm:$0xff]
      %v3004 = vld [vmem:[#allocation2 + $0x38] sm:$0xff]
      %v3005 = vld [vmem:[#allocation2 + $0x40] sm:$0xff]
      %v3006 = vld [vmem:[#allocation2 + $0x48] sm:$0xff]
      %v3007 = vld [vmem:[#allocation2 + $0x50] sm:$0xff]
      %v3008 = vld [vmem:[#allocation2 + $0x58] sm:$0xff]
      %v3009 = vld [vmem:[#allocation2 + $0x60] sm:$0xff]
      %v3010 = vld [vmem:[#allocation2 + $0x68] sm:$0xff]
      %v3011 = vld [vmem:[#allocation2 + $0x70] sm:$0xff]
      %v3012 = vld [vmem:[#allocation2 + $0x78] sm:$0xff]
      %v3013 = vld [vmem:[#allocation2 + $0x80] sm:$0xff]
      %v3014 = vld [vmem:[#allocation2 + $0x88] sm:$0xff]
      %v3015 = vld [vmem:[#allocation2 + $0x90] sm:$0xff]
      %3032 = vrot.lane.b32.xlu0 %v3000, 28
      %v3033 = vpop.permute.xlu0 %3032
      %3034 = vrot.lane.b32.xlu0 %v3001, 28
      %v3035 = vpop.permute.xlu0 %3034
      %3036 = vrot.lane.b32.xlu0 %v3002, 28
      %v3037 = vpop.permute.xlu0 %3036
      %3038 = vrot.lane.b32.xlu0 %v3003, 28
      %v3039 = vpop.permute.xlu0 %3038
      %3040 = vrot.lane.b32.xlu0 %v3004, 28
      %v3041 = vpop.permute.xlu0 %3040
      %3042 = vrot.lane.b32.xlu0 %v3005, 28
      %v3043 = vpop.permute.xlu0 %3042
      %3044 = vrot.lane.b32.xlu0 %v3006, 28
      %v3045 = vpop.permute.xlu0 %3044
      %3046 = vrot.lane.b32.xlu0 %v3007, 28
      %v3047 = vpop.permute.xlu0 %3046
      %3048 = vrot.lane.b32.xlu0 %v3008, 28
      %v3049 = vpop.permute.xlu0 %3048
      %3050 = vrot.lane.b32.xlu0 %v3009, 28
      %v3051 = vpop.permute.xlu0 %3050
      %3052 = vrot.lane.b32.xlu0 %v3010, 28
      %v3053 = vpop.permute.xlu0 %3052
      %3054 = vrot.lane.b32.xlu0 %v3011, 28
      %v3055 = vpop.permute.xlu0 %3054
      %3056 = vrot.lane.b32.xlu0 %v3012, 28
      %v3057 = vpop.permute.xlu0 %3056
      %3058 = vrot.lane.b32.xlu0 %v3013, 28
      %v3059 = vpop.permute.xlu0 %3058
      %3060 = vrot.lane.b32.xlu0 %v3014, 28
      %v3061 = vpop.permute.xlu0 %3060
      %3062 = vrot.lane.b32.xlu0 %v3015, 28
      %v3063 = vpop.permute.xlu0 %3062
      %vm3080 = vcmask 261344
      %3081 = vst.msk [vmem:[#allocation3] sm:$0xff] %vm3080, %v3033
      %3082 = vst.msk [vmem:[#allocation3 + $0x8] sm:$0xff] %vm3080, %v3035
      %3083 = vst.msk [vmem:[#allocation3 + $0x10] sm:$0xff] %vm3080, %v3037
      %3084 = vst.msk [vmem:[#allocation3 + $0x18] sm:$0xff] %vm3080, %v3039
      %3085 = vst.msk [vmem:[#allocation3 + $0x20] sm:$0xff] %vm3080, %v3041
      %3086 = vst.msk [vmem:[#allocation3 + $0x28] sm:$0xff] %vm3080, %v3043
      %3087 = vst.msk [vmem:[#allocation3 + $0x30] sm:$0xff] %vm3080, %v3045
      %3088 = vst.msk [vmem:[#allocation3 + $0x38] sm:$0xff] %vm3080, %v3047
      %3089 = vst.msk [vmem:[#allocation3 + $0x40] sm:$0xff] %vm3080, %v3049
      %3090 = vst.msk [vmem:[#allocation3 + $0x48] sm:$0xff] %vm3080, %v3051
      %3091 = vst.msk [vmem:[#allocation3 + $0x50] sm:$0xff] %vm3080, %v3053
      %3092 = vst.msk [vmem:[#allocation3 + $0x58] sm:$0xff] %vm3080, %v3055
      %3093 = vst.msk [vmem:[#allocation3 + $0x60] sm:$0xff] %vm3080, %v3057
      %3094 = vst.msk [vmem:[#allocation3 + $0x68] sm:$0xff] %vm3080, %v3059
      %3095 = vst.msk [vmem:[#allocation3 + $0x70] sm:$0xff] %vm3080, %v3061
      %3096 = vst.msk [vmem:[#allocation3 + $0x78] sm:$0xff] %vm3080, %v3063
      %v3097 = vld [vmem:[#allocation2 + $0x18] sm:$0xff]
      %v3098 = vld [vmem:[#allocation2 + $0x20] sm:$0xff]
      %v3099 = vld [vmem:[#allocation2 + $0x28] sm:$0xff]
      %v3100 = vld [vmem:[#allocation2 + $0x30] sm:$0xff]
      %v3101 = vld [vmem:[#allocation2 + $0x38] sm:$0xff]
      %v3102 = vld [vmem:[#allocation2 + $0x40] sm:$0xff]
      %v3103 = vld [vmem:[#allocation2 + $0x48] sm:$0xff]
      %v3104 = vld [vmem:[#allocation2 + $0x50] sm:$0xff]
      %v3105 = vld [vmem:[#allocation2 + $0x58] sm:$0xff]
      %v3106 = vld [vmem:[#allocation2 + $0x60] sm:$0xff]
      %v3107 = vld [vmem:[#allocation2 + $0x68] sm:$0xff]
      %v3108 = vld [vmem:[#allocation2 + $0x70] sm:$0xff]
      %v3109 = vld [vmem:[#allocation2 + $0x78] sm:$0xff]
      %v3110 = vld [vmem:[#allocation2 + $0x80] sm:$0xff]
      %v3111 = vld [vmem:[#allocation2 + $0x88] sm:$0xff]
      %v3112 = vld [vmem:[#allocation2 + $0x90] sm:$0xff]
      %v3113 = vld [vmem:[#allocation2 + $0x98] sm:$0x1]
      %v3114 = vmul.bf16 %v3097, %v1858
      %v3115 = vmul.bf16 %v3098, %v1866
      %v3116 = vmul.bf16 %v3099, %v1874
      %v3117 = vmul.bf16 %v3100, %v1882
      %v3118 = vmul.bf16 %v3101, %v1890
      %v3119 = vmul.bf16 %v3102, %v1898
      %v3120 = vmul.bf16 %v3103, %v1906
      %v3121 = vmul.bf16 %v3104, %v1914
      %v3122 = vmul.bf16 %v3105, %v1922
      %v3123 = vmul.bf16 %v3106, %v1930
      %v3124 = vmul.bf16 %v3107, %v1938
      %v3125 = vmul.bf16 %v3108, %v1946
      %v3126 = vmul.bf16 %v3109, %v1954
      %v3127 = vmul.bf16 %v3110, %v1962
      %v3128 = vmul.bf16 %v3111, %v1970
      %v3129 = vmul.bf16 %v3112, %v1978
      %v3130 = vmul.bf16 %v3113, %v1974
      %v3132 = vshrl.u32 %v3114, 16
      %v3134 = vshll.u32 %v3114, 16
      %v3136 = vrot.slane %v3134, 1
      %v3137 = vor.u32 %v3132, %v3136
      %v3139 = vshll.u32 %v3115, 16
      %v3141 = vrot.slane %v3139, 1
      %v3142 = vsel %vm1411, %v3137, %v3141
      %v3143 = vshrl.u32 %v3115, 16
      %v3145 = vor.u32 %v3143, %v3141
      %v3147 = vshll.u32 %v3116, 16
      %v3149 = vrot.slane %v3147, 1
      %v3150 = vsel %vm1411, %v3145, %v3149
      %v3151 = vshrl.u32 %v3116, 16
      %v3153 = vor.u32 %v3151, %v3149
      %v3155 = vshll.u32 %v3117, 16
      %v3157 = vrot.slane %v3155, 1
      %v3158 = vsel %vm1411, %v3153, %v3157
      %v3159 = vshrl.u32 %v3117, 16
      %v3161 = vor.u32 %v3159, %v3157
      %v3163 = vshll.u32 %v3118, 16
      %v3165 = vrot.slane %v3163, 1
      %v3166 = vsel %vm1411, %v3161, %v3165
      %v3167 = vshrl.u32 %v3118, 16
      %v3169 = vor.u32 %v3167, %v3165
      %v3171 = vshll.u32 %v3119, 16
      %v3173 = vrot.slane %v3171, 1
      %v3174 = vsel %vm1411, %v3169, %v3173
      %v3175 = vshrl.u32 %v3119, 16
      %v3177 = vor.u32 %v3175, %v3173
      %v3179 = vshll.u32 %v3120, 16
      %v3181 = vrot.slane %v3179, 1
      %v3182 = vsel %vm1411, %v3177, %v3181
      %v3183 = vshrl.u32 %v3120, 16
      %v3185 = vor.u32 %v3183, %v3181
      %v3187 = vshll.u32 %v3121, 16
      %v3189 = vrot.slane %v3187, 1
      %v3190 = vsel %vm1411, %v3185, %v3189
      %v3191 = vshrl.u32 %v3121, 16
      %v3193 = vor.u32 %v3191, %v3189
      %v3195 = vshll.u32 %v3122, 16
      %v3197 = vrot.slane %v3195, 1
      %v3198 = vsel %vm1411, %v3193, %v3197
      %v3199 = vshrl.u32 %v3122, 16
      %v3201 = vor.u32 %v3199, %v3197
      %v3203 = vshll.u32 %v3123, 16
      %v3205 = vrot.slane %v3203, 1
      %v3206 = vsel %vm1411, %v3201, %v3205
      %v3207 = vshrl.u32 %v3123, 16
      %v3209 = vor.u32 %v3207, %v3205
      %v3211 = vshll.u32 %v3124, 16
      %v3213 = vrot.slane %v3211, 1
      %v3214 = vsel %vm1411, %v3209, %v3213
      %v3215 = vshrl.u32 %v3124, 16
      %v3217 = vor.u32 %v3215, %v3213
      %v3219 = vshll.u32 %v3125, 16
      %v3221 = vrot.slane %v3219, 1
      %v3222 = vsel %vm1411, %v3217, %v3221
      %v3223 = vshrl.u32 %v3125, 16
      %v3225 = vor.u32 %v3223, %v3221
      %v3227 = vshll.u32 %v3126, 16
      %v3229 = vrot.slane %v3227, 1
      %v3230 = vsel %vm1411, %v3225, %v3229
      %v3231 = vshrl.u32 %v3126, 16
      %v3233 = vor.u32 %v3231, %v3229
      %v3235 = vshll.u32 %v3127, 16
      %v3237 = vrot.slane %v3235, 1
      %v3238 = vsel %vm1411, %v3233, %v3237
      %v3239 = vshrl.u32 %v3127, 16
      %v3241 = vor.u32 %v3239, %v3237
      %v3243 = vshll.u32 %v3128, 16
      %v3245 = vrot.slane %v3243, 1
      %v3246 = vsel %vm1411, %v3241, %v3245
      %v3247 = vshrl.u32 %v3128, 16
      %v3249 = vor.u32 %v3247, %v3245
      %v3251 = vshll.u32 %v3129, 16
      %v3253 = vrot.slane %v3251, 1
      %v3254 = vsel %vm1411, %v3249, %v3253
      %v3255 = vshrl.u32 %v3129, 16
      %v3257 = vor.u32 %v3255, %v3253
      %v3259 = vshll.u32 %v3130, 16
      %v3261 = vrot.slane %v3259, 1
      %v3262 = vsel %vm1411, %v3257, %v3261
      %3263 = vrot.lane.b32.xlu0 %v3142, 32
      %v3264 = vpop.permute.xlu0 %3263
      %3265 = vrot.lane.b32.xlu0 %v3150, 32
      %v3266 = vpop.permute.xlu0 %3265
      %3267 = vrot.lane.b32.xlu0 %v3158, 32
      %v3268 = vpop.permute.xlu0 %3267
      %3269 = vrot.lane.b32.xlu0 %v3166, 32
      %v3270 = vpop.permute.xlu0 %3269
      %3271 = vrot.lane.b32.xlu0 %v3174, 32
      %v3272 = vpop.permute.xlu0 %3271
      %3273 = vrot.lane.b32.xlu0 %v3182, 32
      %v3274 = vpop.permute.xlu0 %3273
      %3275 = vrot.lane.b32.xlu0 %v3190, 32
      %v3276 = vpop.permute.xlu0 %3275
      %3277 = vrot.lane.b32.xlu0 %v3198, 32
      %v3278 = vpop.permute.xlu0 %3277
      %3279 = vrot.lane.b32.xlu0 %v3206, 32
      %v3280 = vpop.permute.xlu0 %3279
      %3281 = vrot.lane.b32.xlu0 %v3214, 32
      %v3282 = vpop.permute.xlu0 %3281
      %3283 = vrot.lane.b32.xlu0 %v3222, 32
      %v3284 = vpop.permute.xlu0 %3283
      %3285 = vrot.lane.b32.xlu0 %v3230, 32
      %v3286 = vpop.permute.xlu0 %3285
      %3287 = vrot.lane.b32.xlu0 %v3238, 32
      %v3288 = vpop.permute.xlu0 %3287
      %3289 = vrot.lane.b32.xlu0 %v3246, 32
      %v3290 = vpop.permute.xlu0 %3289
      %3291 = vrot.lane.b32.xlu0 %v3254, 32
      %v3292 = vpop.permute.xlu0 %3291
      %3293 = vrot.lane.b32.xlu0 %v3262, 32
      %v3294 = vpop.permute.xlu0 %3293
      %vm3311 = vcmask 294144
      %3312 = vst.msk [vmem:[#allocation3] sm:$0xff] %vm3311, %v3264
      %3313 = vst.msk [vmem:[#allocation3 + $0x8] sm:$0xff] %vm3311, %v3266
      %3314 = vst.msk [vmem:[#allocation3 + $0x10] sm:$0xff] %vm3311, %v3268
      %3315 = vst.msk [vmem:[#allocation3 + $0x18] sm:$0xff] %vm3311, %v3270
      %3316 = vst.msk [vmem:[#allocation3 + $0x20] sm:$0xff] %vm3311, %v3272
      %3317 = vst.msk [vmem:[#allocation3 + $0x28] sm:$0xff] %vm3311, %v3274
      %3318 = vst.msk [vmem:[#allocation3 + $0x30] sm:$0xff] %vm3311, %v3276
      %3319 = vst.msk [vmem:[#allocation3 + $0x38] sm:$0xff] %vm3311, %v3278
      %3320 = vst.msk [vmem:[#allocation3 + $0x40] sm:$0xff] %vm3311, %v3280
      %3321 = vst.msk [vmem:[#allocation3 + $0x48] sm:$0xff] %vm3311, %v3282
      %3322 = vst.msk [vmem:[#allocation3 + $0x50] sm:$0xff] %vm3311, %v3284
      %3323 = vst.msk [vmem:[#allocation3 + $0x58] sm:$0xff] %vm3311, %v3286
      %3324 = vst.msk [vmem:[#allocation3 + $0x60] sm:$0xff] %vm3311, %v3288
      %3325 = vst.msk [vmem:[#allocation3 + $0x68] sm:$0xff] %vm3311, %v3290
      %3326 = vst.msk [vmem:[#allocation3 + $0x70] sm:$0xff] %vm3311, %v3292
      %3327 = vst.msk [vmem:[#allocation3 + $0x78] sm:$0xff] %vm3311, %v3294
      %v3328 = vld [vmem:[#allocation3] sm:$0xff]
      %v3329 = vld [vmem:[#allocation3 + $0x8] sm:$0xff]
      %v3330 = vld [vmem:[#allocation3 + $0x10] sm:$0xff]
      %v3331 = vld [vmem:[#allocation3 + $0x18] sm:$0xff]
      %v3332 = vld [vmem:[#allocation3 + $0x20] sm:$0xff]
      %v3333 = vld [vmem:[#allocation3 + $0x28] sm:$0xff]
      %v3334 = vld [vmem:[#allocation3 + $0x30] sm:$0xff]
      %v3335 = vld [vmem:[#allocation3 + $0x38] sm:$0xff]
      %v3336 = vld [vmem:[#allocation3 + $0x40] sm:$0xff]
      %v3337 = vld [vmem:[#allocation3 + $0x48] sm:$0xff]
      %v3338 = vld [vmem:[#allocation3 + $0x50] sm:$0xff]
      %v3339 = vld [vmem:[#allocation3 + $0x58] sm:$0xff]
      %v3340 = vld [vmem:[#allocation3 + $0x60] sm:$0xff]
      %v3341 = vld [vmem:[#allocation3 + $0x68] sm:$0xff]
      %v3342 = vld [vmem:[#allocation3 + $0x70] sm:$0xff]
      %v3343 = vld [vmem:[#allocation3 + $0x78] sm:$0xff]
      %v3344 = vld [vmem:[%s2] sm:$0xf]
      %v3345 = vld [vmem:[%s2 + $0x4] sm:$0xf]
      %v3346 = vld [vmem:[%s2 + $0x8] sm:$0xf]
      %v3347 = vld [vmem:[%s2 + $0xc] sm:$0xf]
      %v3348 = vld [vmem:[%s2 + $0x10] sm:$0x3]
      %v3354 = vunpack.c.l.b16 %v3344
      %v3355 = vunpack.c.l.b16 %v3345
      %v3356 = vunpack.c.l.b16 %v3346
      %v3357 = vunpack.c.l.b16 %v3347
      %v3358 = vunpack.c.l.b16 %v3348
      %v3359 = vpack.c.b16 %v3355, %v3354
      %v3360 = vpack.c.b16 %v3357, %v3356
      %v3361 = vpack.c.b16 %v3358, %v3358
      %vm3364 = vcmask 293888
      %v3366 = vsel %vm3364, %v3328, 0
      %v3369 = vsel %vm3364, %v3329, 0
      %v3372 = vsel %vm3364, %v3330, 0
      %v3375 = vsel %vm3364, %v3331, 0
      %v3378 = vsel %vm3364, %v3332, 0
      %v3381 = vsel %vm3364, %v3333, 0
      %v3384 = vsel %vm3364, %v3334, 0
      %v3387 = vsel %vm3364, %v3335, 0
      %v3390 = vsel %vm3364, %v3336, 0
      %v3393 = vsel %vm3364, %v3337, 0
      %v3396 = vsel %vm3364, %v3338, 0
      %v3399 = vsel %vm3364, %v3339, 0
      %v3402 = vsel %vm3364, %v3340, 0
      %v3405 = vsel %vm3364, %v3341, 0
      %v3408 = vsel %vm3364, %v3342, 0
      %v3411 = vsel %vm3364, %v3343, 0
      %vm3413 = vcmask 1041408
      %v3415 = vsel %vm3413, %v3361, 0
      %3417 = vmatprep.subr.bf16.mxu0 0
      %3418 = vmatpush1.bf16.msra.mxu0 %v3359
      %3419 = vmatprep.subr.bf16.mxu0 0
      %3420 = vmatpush1.bf16.msra.mxu0 %v3360
      %3421 = vmatprep.subr.bf16.mxu0 0
      %3422 = vmatpush1.bf16.msra.mxu0 %v3415
      %3423 = vmatprep.subr.bf16.mxu0 0
      %3424 = vmatpush1.bf16.msra.mxu0 0
      %3425 = vmatprep.subr.bf16.mxu0 0
      %3426 = vmatpush1.bf16.msra.mxu0 0
      %3427 = vmatprep.subr.bf16.mxu0 0
      %3428 = vmatpush1.bf16.msra.mxu0 0
      %3429 = vmatprep.subr.bf16.mxu0 0
      %3430 = vmatpush1.bf16.msra.mxu0 0
      %3431 = vmatprep.subr.bf16.mxu0 0
      %3432 = vmatpush1.bf16.msra.mxu0 0
      %3433 = vmatprep.subr.bf16.mxu0 0
      %3434 = vmatpush1.bf16.msra.mxu0 0
      %3435 = vmatprep.subr.bf16.mxu0 0
      %3436 = vmatpush1.bf16.msra.mxu0 0
      %3437 = vmatprep.subr.bf16.mxu0 0
      %3438 = vmatpush1.bf16.msra.mxu0 0
      %3439 = vmatprep.subr.bf16.mxu0 0
      %3440 = vmatpush1.bf16.msra.mxu0 0
      %3441 = vmatprep.subr.bf16.mxu0 0
      %3442 = vmatpush1.bf16.msra.mxu0 0
      %3443 = vmatprep.subr.bf16.mxu0 0
      %3444 = vmatpush1.bf16.msra.mxu0 0
      %3445 = vmatprep.subr.bf16.mxu0 0
      %3446 = vmatpush1.bf16.msra.mxu0 0
      %3447 = vmatprep.subr.bf16.mxu0 0
      %3448 = vmatpush1.bf16.msra.mxu0 0
      %3449 = vmatprep.mubr.bf16.mxu0 0
      %3450 = vmatmul.mubr.bf16.gmra.mrb[0].mxu0 %v3366
      %v3451 = vpop.f32.mrb[0].mxu0
      %v3452 = vadd.f32 0.0, %v3451
      %v3453 = vpop.f32.mrb[0].mxu0
      %v3454 = vpop.f32.mrb[0].mxu0
      %v3455 = vadd.f32 0.0, %v3454
      %v3456 = vpop.f32.mrb[0].mxu0
      %3457 = vmatprep.mubr.bf16.mxu0 0
      %3458 = vmatmul.mubr.bf16.gmra.mrb[0].mxu0 %v3369
      %v3459 = vpop.f32.mrb[0].mxu0
      %v3460 = vadd.f32 0.0, %v3459
      %v3461 = vpop.f32.mrb[0].mxu0
      %v3462 = vpop.f32.mrb[0].mxu0
      %v3463 = vadd.f32 0.0, %v3462
      %v3464 = vpop.f32.mrb[0].mxu0
      %3465 = vmatprep.mubr.bf16.mxu0 0
      %3466 = vmatmul.mubr.bf16.gmra.mrb[0].mxu0 %v3372
      %v3467 = vpop.f32.mrb[0].mxu0
      %v3468 = vadd.f32 0.0, %v3467
      %v3469 = vpop.f32.mrb[0].mxu0
      %v3470 = vpop.f32.mrb[0].mxu0
      %v3471 = vadd.f32 0.0, %v3470
      %v3472 = vpop.f32.mrb[0].mxu0
      %3473 = vmatprep.mubr.bf16.mxu0 0
      %3474 = vmatmul.mubr.bf16.gmra.mrb[0].mxu0 %v3375
      %v3475 = vpop.f32.mrb[0].mxu0
      %v3476 = vadd.f32 0.0, %v3475
      %v3477 = vpop.f32.mrb[0].mxu0
      %v3478 = vpop.f32.mrb[0].mxu0
      %v3479 = vadd.f32 0.0, %v3478
      %v3480 = vpop.f32.mrb[0].mxu0
      %3481 = vmatprep.mubr.bf16.mxu0 0
      %3482 = vmatmul.mubr.bf16.gmra.mrb[0].mxu0 %v3378
      %v3483 = vpop.f32.mrb[0].mxu0
      %v3484 = vadd.f32 0.0, %v3483
      %v3485 = vpop.f32.mrb[0].mxu0
      %v3486 = vpop.f32.mrb[0].mxu0
      %v3487 = vadd.f32 0.0, %v3486
      %v3488 = vpop.f32.mrb[0].mxu0
      %3489 = vmatprep.mubr.bf16.mxu0 0
      %3490 = vmatmul.mubr.bf16.gmra.mrb[0].mxu0 %v3381
      %v3491 = vpop.f32.mrb[0].mxu0
      %v3492 = vadd.f32 0.0, %v3491
      %v3493 = vpop.f32.mrb[0].mxu0
      %v3494 = vpop.f32.mrb[0].mxu0
      %v3495 = vadd.f32 0.0, %v3494
      %v3496 = vpop.f32.mrb[0].mxu0
      %3497 = vmatprep.mubr.bf16.mxu0 0
      %3498 = vmatmul.mubr.bf16.gmra.mrb[0].mxu0 %v3384
      %v3499 = vpop.f32.mrb[0].mxu0
      %v3500 = vadd.f32 0.0, %v3499
      %v3501 = vpop.f32.mrb[0].mxu0
      %v3502 = vpop.f32.mrb[0].mxu0
      %v3503 = vadd.f32 0.0, %v3502
      %v3504 = vpop.f32.mrb[0].mxu0
      %3505 = vmatprep.mubr.bf16.mxu0 0
      %3506 = vmatmul.mubr.bf16.gmra.mrb[0].mxu0 %v3387
      %v3507 = vpop.f32.mrb[0].mxu0
      %v3508 = vadd.f32 0.0, %v3507
      %v3509 = vpop.f32.mrb[0].mxu0
      %v3510 = vpop.f32.mrb[0].mxu0
      %v3511 = vadd.f32 0.0, %v3510
      %v3512 = vpop.f32.mrb[0].mxu0
      %3513 = vmatprep.mubr.bf16.mxu0 0
      %3514 = vmatmul.mubr.bf16.gmra.mrb[0].mxu0 %v3390
      %v3515 = vpop.f32.mrb[0].mxu0
      %v3516 = vadd.f32 0.0, %v3515
      %v3517 = vpop.f32.mrb[0].mxu0
      %v3518 = vpop.f32.mrb[0].mxu0
      %v3519 = vadd.f32 0.0, %v3518
      %v3520 = vpop.f32.mrb[0].mxu0
      %3521 = vmatprep.mubr.bf16.mxu0 0
      %3522 = vmatmul.mubr.bf16.gmra.mrb[0].mxu0 %v3393
      %v3523 = vpop.f32.mrb[0].mxu0
      %v3524 = vadd.f32 0.0, %v3523
      %v3525 = vpop.f32.mrb[0].mxu0
      %v3526 = vpop.f32.mrb[0].mxu0
      %v3527 = vadd.f32 0.0, %v3526
      %v3528 = vpop.f32.mrb[0].mxu0
      %3529 = vmatprep.mubr.bf16.mxu0 0
      %3530 = vmatmul.mubr.bf16.gmra.mrb[0].mxu0 %v3396
      %v3531 = vpop.f32.mrb[0].mxu0
      %v3532 = vadd.f32 0.0, %v3531
      %v3533 = vpop.f32.mrb[0].mxu0
      %v3534 = vpop.f32.mrb[0].mxu0
      %v3535 = vadd.f32 0.0, %v3534
      %v3536 = vpop.f32.mrb[0].mxu0
      %3537 = vmatprep.mubr.bf16.mxu0 0
      %3538 = vmatmul.mubr.bf16.gmra.mrb[0].mxu0 %v3399
      %v3539 = vpop.f32.mrb[0].mxu0
      %v3540 = vadd.f32 0.0, %v3539
      %v3541 = vpop.f32.mrb[0].mxu0
      %v3542 = vpop.f32.mrb[0].mxu0
      %v3543 = vadd.f32 0.0, %v3542
      %v3544 = vpop.f32.mrb[0].mxu0
      %3545 = vmatprep.mubr.bf16.mxu0 0
      %3546 = vmatmul.mubr.bf16.gmra.mrb[0].mxu0 %v3402
      %v3547 = vpop.f32.mrb[0].mxu0
      %v3548 = vadd.f32 0.0, %v3547
      %v3549 = vpop.f32.mrb[0].mxu0
      %v3550 = vpop.f32.mrb[0].mxu0
      %v3551 = vadd.f32 0.0, %v3550
      %v3552 = vpop.f32.mrb[0].mxu0
      %3553 = vmatprep.mubr.bf16.mxu0 0
      %3554 = vmatmul.mubr.bf16.gmra.mrb[0].mxu0 %v3405
      %v3555 = vpop.f32.mrb[0].mxu0
      %v3556 = vadd.f32 0.0, %v3555
      %v3557 = vpop.f32.mrb[0].mxu0
      %v3558 = vpop.f32.mrb[0].mxu0
      %v3559 = vadd.f32 0.0, %v3558
      %v3560 = vpop.f32.mrb[0].mxu0
      %3561 = vmatprep.mubr.bf16.mxu0 0
      %3562 = vmatmul.mubr.bf16.gmra.mrb[0].mxu0 %v3408
      %v3563 = vpop.f32.mrb[0].mxu0
      %v3564 = vadd.f32 0.0, %v3563
      %v3565 = vpop.f32.mrb[0].mxu0
      %v3566 = vpop.f32.mrb[0].mxu0
      %v3567 = vadd.f32 0.0, %v3566
      %v3568 = vpop.f32.mrb[0].mxu0
      %3569 = vmatprep.mubr.bf16.mxu0 0
      %3570 = vmatmul.mubr.bf16.gmra.mrb[0].mxu0 %v3411
      %v3571 = vpop.f32.mrb[0].mxu0
      %v3572 = vadd.f32 0.0, %v3571
      %v3573 = vpop.f32.mrb[0].mxu0
      %v3574 = vpop.f32.mrb[0].mxu0
      %v3575 = vadd.f32 0.0, %v3574
      %v3576 = vpop.f32.mrb[0].mxu0
      %3577 = vdwg.mxu0
      %v3578 = vld [vmem:[%s5] sm:$0x1]
      %v3579 = vlaneseq
      %v3580 = vshrl.u32 %v3579, 7
      %v3581 = vsub.s32 0, %v3580
      %v3582 = vrot.slane %v3578, %v3581
      %v3583 = vmul.f32 %v3452, %v3582
      %v3584 = vmul.f32 %v3455, %v3582
      %v3585 = vmul.f32 %v3460, %v3582
      %v3586 = vmul.f32 %v3463, %v3582
      %v3587 = vmul.f32 %v3468, %v3582
      %v3588 = vmul.f32 %v3471, %v3582
      %v3589 = vmul.f32 %v3476, %v3582
      %v3590 = vmul.f32 %v3479, %v3582
      %v3591 = vmul.f32 %v3484, %v3582
      %v3592 = vmul.f32 %v3487, %v3582
      %v3593 = vmul.f32 %v3492, %v3582
      %v3594 = vmul.f32 %v3495, %v3582
      %v3595 = vmul.f32 %v3500, %v3582
      %v3596 = vmul.f32 %v3503, %v3582
      %v3597 = vmul.f32 %v3508, %v3582
      %v3598 = vmul.f32 %v3511, %v3582
      %v3599 = vmul.f32 %v3516, %v3582
      %v3600 = vmul.f32 %v3519, %v3582
      %v3601 = vmul.f32 %v3524, %v3582
      %v3602 = vmul.f32 %v3527, %v3582
      %v3603 = vmul.f32 %v3532, %v3582
      %v3604 = vmul.f32 %v3535, %v3582
      %v3605 = vmul.f32 %v3540, %v3582
      %v3606 = vmul.f32 %v3543, %v3582
      %v3607 = vmul.f32 %v3548, %v3582
      %v3608 = vmul.f32 %v3551, %v3582
      %v3609 = vmul.f32 %v3556, %v3582
      %v3610 = vmul.f32 %v3559, %v3582
      %v3611 = vmul.f32 %v3564, %v3582
      %v3612 = vmul.f32 %v3567, %v3582
      %v3613 = vmul.f32 %v3572, %v3582
      %v3614 = vmul.f32 %v3575, %v3582
      %v3615 = vld [vmem:[%s5 + $0x1] sm:$0x1]
      %v3616 = vlaneseq
      %v3617 = vshrl.u32 %v3616, 7
      %v3618 = vsub.s32 0, %v3617
      %v3619 = vrot.slane %v3615, %v3618
      %v3620 = vadd.f32 %v3583, %v3619
      %v3621 = vadd.f32 %v3584, %v3619
      %v3622 = vadd.f32 %v3585, %v3619
      %v3623 = vadd.f32 %v3586, %v3619
      %v3624 = vadd.f32 %v3587, %v3619
      %v3625 = vadd.f32 %v3588, %v3619
      %v3626 = vadd.f32 %v3589, %v3619
      %v3627 = vadd.f32 %v3590, %v3619
      %v3628 = vadd.f32 %v3591, %v3619
      %v3629 = vadd.f32 %v3592, %v3619
      %v3630 = vadd.f32 %v3593, %v3619
      %v3631 = vadd.f32 %v3594, %v3619
      %v3632 = vadd.f32 %v3595, %v3619
      %v3633 = vadd.f32 %v3596, %v3619
      %v3634 = vadd.f32 %v3597, %v3619
      %v3635 = vadd.f32 %v3598, %v3619
      %v3636 = vadd.f32 %v3599, %v3619
      %v3637 = vadd.f32 %v3600, %v3619
      %v3638 = vadd.f32 %v3601, %v3619
      %v3639 = vadd.f32 %v3602, %v3619
      %v3640 = vadd.f32 %v3603, %v3619
      %v3641 = vadd.f32 %v3604, %v3619
      %v3642 = vadd.f32 %v3605, %v3619
      %v3643 = vadd.f32 %v3606, %v3619
      %v3644 = vadd.f32 %v3607, %v3619
      %v3645 = vadd.f32 %v3608, %v3619
      %v3646 = vadd.f32 %v3609, %v3619
      %v3647 = vadd.f32 %v3610, %v3619
      %v3648 = vadd.f32 %v3611, %v3619
      %v3649 = vadd.f32 %v3612, %v3619
      %v3650 = vadd.f32 %v3613, %v3619
      %v3651 = vadd.f32 %v3614, %v3619
      %v3652 = vmax.f32 %v3620, 0.0
      %v3653 = vmax.f32 %v3621, 0.0
      %v3654 = vmax.f32 %v3622, 0.0
      %v3655 = vmax.f32 %v3623, 0.0
      %v3656 = vmax.f32 %v3624, 0.0
      %v3657 = vmax.f32 %v3625, 0.0
      %v3658 = vmax.f32 %v3626, 0.0
      %v3659 = vmax.f32 %v3627, 0.0
      %v3660 = vmax.f32 %v3628, 0.0
      %v3661 = vmax.f32 %v3629, 0.0
      %v3662 = vmax.f32 %v3630, 0.0
      %v3663 = vmax.f32 %v3631, 0.0
      %v3664 = vmax.f32 %v3632, 0.0
      %v3665 = vmax.f32 %v3633, 0.0
      %v3666 = vmax.f32 %v3634, 0.0
      %v3667 = vmax.f32 %v3635, 0.0
      %v3668 = vmax.f32 %v3636, 0.0
      %v3669 = vmax.f32 %v3637, 0.0
      %v3670 = vmax.f32 %v3638, 0.0
      %v3671 = vmax.f32 %v3639, 0.0
      %v3672 = vmax.f32 %v3640, 0.0
      %v3673 = vmax.f32 %v3641, 0.0
      %v3674 = vmax.f32 %v3642, 0.0
      %v3675 = vmax.f32 %v3643, 0.0
      %v3676 = vmax.f32 %v3644, 0.0
      %v3677 = vmax.f32 %v3645, 0.0
      %v3678 = vmax.f32 %v3646, 0.0
      %v3679 = vmax.f32 %v3647, 0.0
      %v3680 = vmax.f32 %v3648, 0.0
      %v3681 = vmax.f32 %v3649, 0.0
      %v3682 = vmax.f32 %v3650, 0.0
      %v3683 = vmax.f32 %v3651, 0.0
      %v3684 = vpack.c.bf16 %v3653, %v3652
      %v3685 = vpack.c.bf16 %v3655, %v3654
      %v3686 = vpack.c.bf16 %v3657, %v3656
      %v3687 = vpack.c.bf16 %v3659, %v3658
      %v3688 = vpack.c.bf16 %v3661, %v3660
      %v3689 = vpack.c.bf16 %v3663, %v3662
      %v3690 = vpack.c.bf16 %v3665, %v3664
      %v3691 = vpack.c.bf16 %v3667, %v3666
      %v3692 = vpack.c.bf16 %v3669, %v3668
      %v3693 = vpack.c.bf16 %v3671, %v3670
      %v3694 = vpack.c.bf16 %v3673, %v3672
      %v3695 = vpack.c.bf16 %v3675, %v3674
      %v3696 = vpack.c.bf16 %v3677, %v3676
      %v3697 = vpack.c.bf16 %v3679, %v3678
      %v3698 = vpack.c.bf16 %v3681, %v3680
      %v3699 = vpack.c.bf16 %v3683, %v3682
      %v3700 = vld [vmem:[%s3] sm:$0x3]
      %v3702 = vsel %vm716, %v3684, 0
      %v3705 = vsel %vm716, %v3685, 0
      %v3708 = vsel %vm716, %v3686, 0
      %v3711 = vsel %vm716, %v3687, 0
      %v3714 = vsel %vm716, %v3688, 0
      %v3717 = vsel %vm716, %v3689, 0
      %v3720 = vsel %vm716, %v3690, 0
      %v3723 = vsel %vm716, %v3691, 0
      %v3726 = vsel %vm716, %v3692, 0
      %v3729 = vsel %vm716, %v3693, 0
      %v3732 = vsel %vm716, %v3694, 0
      %v3735 = vsel %vm716, %v3695, 0
      %v3738 = vsel %vm716, %v3696, 0
      %v3741 = vsel %vm716, %v3697, 0
      %v3744 = vsel %vm716, %v3698, 0
      %v3747 = vsel %vm716, %v3699, 0
      %v3750 = vsel %vm3413, %v3700, 0
      %3752 = vmatprep.subr.bf16.mxu0 0
      %3753 = vmatpush1.bf16.msra.mxu0 %v3750
      %3754 = vmatprep.subr.bf16.mxu0 0
      %3755 = vmatpush1.bf16.msra.mxu0 0
      %3756 = vmatprep.subr.bf16.mxu0 0
      %3757 = vmatpush1.bf16.msra.mxu0 0
      %3758 = vmatprep.subr.bf16.mxu0 0
      %3759 = vmatpush1.bf16.msra.mxu0 0
      %3760 = vmatprep.subr.bf16.mxu0 0
      %3761 = vmatpush1.bf16.msra.mxu0 0
      %3762 = vmatprep.subr.bf16.mxu0 0
      %3763 = vmatpush1.bf16.msra.mxu0 0
      %3764 = vmatprep.subr.bf16.mxu0 0
      %3765 = vmatpush1.bf16.msra.mxu0 0
      %3766 = vmatprep.subr.bf16.mxu0 0
      %3767 = vmatpush1.bf16.msra.mxu0 0
      %3768 = vmatprep.subr.bf16.mxu0 0
      %3769 = vmatpush1.bf16.msra.mxu0 0
      %3770 = vmatprep.subr.bf16.mxu0 0
      %3771 = vmatpush1.bf16.msra.mxu0 0
      %3772 = vmatprep.subr.bf16.mxu0 0
      %3773 = vmatpush1.bf16.msra.mxu0 0
      %3774 = vmatprep.subr.bf16.mxu0 0
      %3775 = vmatpush1.bf16.msra.mxu0 0
      %3776 = vmatprep.subr.bf16.mxu0 0
      %3777 = vmatpush1.bf16.msra.mxu0 0
      %3778 = vmatprep.subr.bf16.mxu0 0
      %3779 = vmatpush1.bf16.msra.mxu0 0
      %3780 = vmatprep.subr.bf16.mxu0 0
      %3781 = vmatpush1.bf16.msra.mxu0 0
      %3782 = vmatprep.subr.bf16.mxu0 0
      %3783 = vmatpush1.bf16.msra.mxu0 0
      %3784 = vmatprep.mubr.bf16.mxu0 0
      %3785 = vmatmul.mubr.bf16.gmra.mrb[0].mxu0 %v3702
      %v3786 = vpop.f32.mrb[0].mxu0
      %v3787 = vadd.f32 0.0, %v3786
      %v3788 = vpop.f32.mrb[0].mxu0
      %v3789 = vpop.f32.mrb[0].mxu0
      %v3790 = vadd.f32 0.0, %v3789
      %v3791 = vpop.f32.mrb[0].mxu0
      %3792 = vmatprep.mubr.bf16.mxu0 0
      %3793 = vmatmul.mubr.bf16.gmra.mrb[0].mxu0 %v3705
      %v3794 = vpop.f32.mrb[0].mxu0
      %v3795 = vadd.f32 0.0, %v3794
      %v3796 = vpop.f32.mrb[0].mxu0
      %v3797 = vpop.f32.mrb[0].mxu0
      %v3798 = vadd.f32 0.0, %v3797
      %v3799 = vpop.f32.mrb[0].mxu0
      %3800 = vmatprep.mubr.bf16.mxu0 0
      %3801 = vmatmul.mubr.bf16.gmra.mrb[0].mxu0 %v3708
      %v3802 = vpop.f32.mrb[0].mxu0
      %v3803 = vadd.f32 0.0, %v3802
      %v3804 = vpop.f32.mrb[0].mxu0
      %v3805 = vpop.f32.mrb[0].mxu0
      %v3806 = vadd.f32 0.0, %v3805
      %v3807 = vpop.f32.mrb[0].mxu0
      %3808 = vmatprep.mubr.bf16.mxu0 0
      %3809 = vmatmul.mubr.bf16.gmra.mrb[0].mxu0 %v3711
      %v3810 = vpop.f32.mrb[0].mxu0
      %v3811 = vadd.f32 0.0, %v3810
      %v3812 = vpop.f32.mrb[0].mxu0
      %v3813 = vpop.f32.mrb[0].mxu0
      %v3814 = vadd.f32 0.0, %v3813
      %v3815 = vpop.f32.mrb[0].mxu0
      %3816 = vmatprep.mubr.bf16.mxu0 0
      %3817 = vmatmul.mubr.bf16.gmra.mrb[0].mxu0 %v3714
      %v3818 = vpop.f32.mrb[0].mxu0
      %v3819 = vadd.f32 0.0, %v3818
      %v3820 = vpop.f32.mrb[0].mxu0
      %v3821 = vpop.f32.mrb[0].mxu0
      %v3822 = vadd.f32 0.0, %v3821
      %v3823 = vpop.f32.mrb[0].mxu0
      %3824 = vmatprep.mubr.bf16.mxu0 0
      %3825 = vmatmul.mubr.bf16.gmra.mrb[0].mxu0 %v3717
      %v3826 = vpop.f32.mrb[0].mxu0
      %v3827 = vadd.f32 0.0, %v3826
      %v3828 = vpop.f32.mrb[0].mxu0
      %v3829 = vpop.f32.mrb[0].mxu0
      %v3830 = vadd.f32 0.0, %v3829
      %v3831 = vpop.f32.mrb[0].mxu0
      %3832 = vmatprep.mubr.bf16.mxu0 0
      %3833 = vmatmul.mubr.bf16.gmra.mrb[0].mxu0 %v3720
      %v3834 = vpop.f32.mrb[0].mxu0
      %v3835 = vadd.f32 0.0, %v3834
      %v3836 = vpop.f32.mrb[0].mxu0
      %v3837 = vpop.f32.mrb[0].mxu0
      %v3838 = vadd.f32 0.0, %v3837
      %v3839 = vpop.f32.mrb[0].mxu0
      %3840 = vmatprep.mubr.bf16.mxu0 0
      %3841 = vmatmul.mubr.bf16.gmra.mrb[0].mxu0 %v3723
      %v3842 = vpop.f32.mrb[0].mxu0
      %v3843 = vadd.f32 0.0, %v3842
      %v3844 = vpop.f32.mrb[0].mxu0
      %v3845 = vpop.f32.mrb[0].mxu0
      %v3846 = vadd.f32 0.0, %v3845
      %v3847 = vpop.f32.mrb[0].mxu0
      %3848 = vmatprep.mubr.bf16.mxu0 0
      %3849 = vmatmul.mubr.bf16.gmra.mrb[0].mxu0 %v3726
      %v3850 = vpop.f32.mrb[0].mxu0
      %v3851 = vadd.f32 0.0, %v3850
      %v3852 = vpop.f32.mrb[0].mxu0
      %v3853 = vpop.f32.mrb[0].mxu0
      %v3854 = vadd.f32 0.0, %v3853
      %v3855 = vpop.f32.mrb[0].mxu0
      %3856 = vmatprep.mubr.bf16.mxu0 0
      %3857 = vmatmul.mubr.bf16.gmra.mrb[0].mxu0 %v3729
      %v3858 = vpop.f32.mrb[0].mxu0
      %v3859 = vadd.f32 0.0, %v3858
      %v3860 = vpop.f32.mrb[0].mxu0
      %v3861 = vpop.f32.mrb[0].mxu0
      %v3862 = vadd.f32 0.0, %v3861
      %v3863 = vpop.f32.mrb[0].mxu0
      %3864 = vmatprep.mubr.bf16.mxu0 0
      %3865 = vmatmul.mubr.bf16.gmra.mrb[0].mxu0 %v3732
      %v3866 = vpop.f32.mrb[0].mxu0
      %v3867 = vadd.f32 0.0, %v3866
      %v3868 = vpop.f32.mrb[0].mxu0
      %v3869 = vpop.f32.mrb[0].mxu0
      %v3870 = vadd.f32 0.0, %v3869
      %v3871 = vpop.f32.mrb[0].mxu0
      %3872 = vmatprep.mubr.bf16.mxu0 0
      %3873 = vmatmul.mubr.bf16.gmra.mrb[0].mxu0 %v3735
      %v3874 = vpop.f32.mrb[0].mxu0
      %v3875 = vadd.f32 0.0, %v3874
      %v3876 = vpop.f32.mrb[0].mxu0
      %v3877 = vpop.f32.mrb[0].mxu0
      %v3878 = vadd.f32 0.0, %v3877
      %v3879 = vpop.f32.mrb[0].mxu0
      %3880 = vmatprep.mubr.bf16.mxu0 0
      %3881 = vmatmul.mubr.bf16.gmra.mrb[0].mxu0 %v3738
      %v3882 = vpop.f32.mrb[0].mxu0
      %v3883 = vadd.f32 0.0, %v3882
      %v3884 = vpop.f32.mrb[0].mxu0
      %v3885 = vpop.f32.mrb[0].mxu0
      %v3886 = vadd.f32 0.0, %v3885
      %v3887 = vpop.f32.mrb[0].mxu0
      %3888 = vmatprep.mubr.bf16.mxu0 0
      %3889 = vmatmul.mubr.bf16.gmra.mrb[0].mxu0 %v3741
      %v3890 = vpop.f32.mrb[0].mxu0
      %v3891 = vadd.f32 0.0, %v3890
      %v3892 = vpop.f32.mrb[0].mxu0
      %v3893 = vpop.f32.mrb[0].mxu0
      %v3894 = vadd.f32 0.0, %v3893
      %v3895 = vpop.f32.mrb[0].mxu0
      %3896 = vmatprep.mubr.bf16.mxu0 0
      %3897 = vmatmul.mubr.bf16.gmra.mrb[0].mxu0 %v3744
      %v3898 = vpop.f32.mrb[0].mxu0
      %v3899 = vadd.f32 0.0, %v3898
      %v3900 = vpop.f32.mrb[0].mxu0
      %v3901 = vpop.f32.mrb[0].mxu0
      %v3902 = vadd.f32 0.0, %v3901
      %v3903 = vpop.f32.mrb[0].mxu0
      %3904 = vmatprep.mubr.bf16.mxu0 0
      %3905 = vmatmul.mubr.bf16.gmra.mrb[0].mxu0 %v3747
      %v3906 = vpop.f32.mrb[0].mxu0
      %v3907 = vadd.f32 0.0, %v3906
      %v3908 = vpop.f32.mrb[0].mxu0
      %v3909 = vpop.f32.mrb[0].mxu0
      %v3910 = vadd.f32 0.0, %v3909
      %v3911 = vpop.f32.mrb[0].mxu0
      %3912 = vdwg.mxu0
      %v3913 = vld [vmem:[%s6] sm:$0x1]
      %v3914 = vlaneseq
      %v3915 = vshrl.u32 %v3914, 7
      %v3916 = vsub.s32 0, %v3915
      %v3917 = vrot.slane %v3913, %v3916
      %v3918 = vmul.f32 %v3787, %v3917
      %v3919 = vmul.f32 %v3790, %v3917
      %v3920 = vmul.f32 %v3795, %v3917
      %v3921 = vmul.f32 %v3798, %v3917
      %v3922 = vmul.f32 %v3803, %v3917
      %v3923 = vmul.f32 %v3806, %v3917
      %v3924 = vmul.f32 %v3811, %v3917
      %v3925 = vmul.f32 %v3814, %v3917
      %v3926 = vmul.f32 %v3819, %v3917
      %v3927 = vmul.f32 %v3822, %v3917
      %v3928 = vmul.f32 %v3827, %v3917
      %v3929 = vmul.f32 %v3830, %v3917
      %v3930 = vmul.f32 %v3835, %v3917
      %v3931 = vmul.f32 %v3838, %v3917
      %v3932 = vmul.f32 %v3843, %v3917
      %v3933 = vmul.f32 %v3846, %v3917
      %v3934 = vmul.f32 %v3851, %v3917
      %v3935 = vmul.f32 %v3854, %v3917
      %v3936 = vmul.f32 %v3859, %v3917
      %v3937 = vmul.f32 %v3862, %v3917
      %v3938 = vmul.f32 %v3867, %v3917
      %v3939 = vmul.f32 %v3870, %v3917
      %v3940 = vmul.f32 %v3875, %v3917
      %v3941 = vmul.f32 %v3878, %v3917
      %v3942 = vmul.f32 %v3883, %v3917
      %v3943 = vmul.f32 %v3886, %v3917
      %v3944 = vmul.f32 %v3891, %v3917
      %v3945 = vmul.f32 %v3894, %v3917
      %v3946 = vmul.f32 %v3899, %v3917
      %v3947 = vmul.f32 %v3902, %v3917
      %v3948 = vmul.f32 %v3907, %v3917
      %v3949 = vmul.f32 %v3910, %v3917
      %v3950 = vld [vmem:[%s6 + $0x1] sm:$0x1]
      %v3951 = vlaneseq
      %v3952 = vshrl.u32 %v3951, 7
      %v3953 = vsub.s32 0, %v3952
      %v3954 = vrot.slane %v3950, %v3953
      %v3955 = vadd.f32 %v3918, %v3954
      %v3956 = vadd.f32 %v3919, %v3954
      %v3957 = vadd.f32 %v3920, %v3954
      %v3958 = vadd.f32 %v3921, %v3954
      %v3959 = vadd.f32 %v3922, %v3954
      %v3960 = vadd.f32 %v3923, %v3954
      %v3961 = vadd.f32 %v3924, %v3954
      %v3962 = vadd.f32 %v3925, %v3954
      %v3963 = vadd.f32 %v3926, %v3954
      %v3964 = vadd.f32 %v3927, %v3954
      %v3965 = vadd.f32 %v3928, %v3954
      %v3966 = vadd.f32 %v3929, %v3954
      %v3967 = vadd.f32 %v3930, %v3954
      %v3968 = vadd.f32 %v3931, %v3954
      %v3969 = vadd.f32 %v3932, %v3954
      %v3970 = vadd.f32 %v3933, %v3954
      %v3971 = vadd.f32 %v3934, %v3954
      %v3972 = vadd.f32 %v3935, %v3954
      %v3973 = vadd.f32 %v3936, %v3954
      %v3974 = vadd.f32 %v3937, %v3954
      %v3975 = vadd.f32 %v3938, %v3954
      %v3976 = vadd.f32 %v3939, %v3954
      %v3977 = vadd.f32 %v3940, %v3954
      %v3978 = vadd.f32 %v3941, %v3954
      %v3979 = vadd.f32 %v3942, %v3954
      %v3980 = vadd.f32 %v3943, %v3954
      %v3981 = vadd.f32 %v3944, %v3954
      %v3982 = vadd.f32 %v3945, %v3954
      %v3983 = vadd.f32 %v3946, %v3954
      %v3984 = vadd.f32 %v3947, %v3954
      %v3985 = vadd.f32 %v3948, %v3954
      %v3986 = vadd.f32 %v3949, %v3954
      %v3987 = vld [vmem:[%s273] sm:$0xf]
      %v3988 = vld [vmem:[%s273 + $0x4] sm:$0xf]
      %v3989 = vld [vmem:[%s273 + $0x8] sm:$0xf]
      %v3990 = vld [vmem:[%s273 + $0xc] sm:$0xf]
      %v3991 = vld [vmem:[%s273 + $0x10] sm:$0xf]
      %v3992 = vld [vmem:[%s273 + $0x14] sm:$0xf]
      %v3993 = vld [vmem:[%s273 + $0x18] sm:$0xf]
      %v3994 = vld [vmem:[%s273 + $0x1c] sm:$0xf]
      %v3995 = vld [vmem:[%s273 + $0x20] sm:$0xf]
      %v3996 = vld [vmem:[%s273 + $0x24] sm:$0xf]
      %v3997 = vld [vmem:[%s273 + $0x28] sm:$0xf]
      %v3998 = vld [vmem:[%s273 + $0x2c] sm:$0xf]
      %v3999 = vld [vmem:[%s273 + $0x30] sm:$0xf]
      %v4000 = vld [vmem:[%s273 + $0x34] sm:$0xf]
      %v4001 = vld [vmem:[%s273 + $0x38] sm:$0xf]
      %v4002 = vld [vmem:[%s273 + $0x3c] sm:$0xf]
      %v4003 = vld [vmem:[%s273 + $0x40] sm:$0xf]
      %v4004 = vld [vmem:[%s273 + $0x44] sm:$0xf]
      %v4005 = vld [vmem:[%s273 + $0x48] sm:$0xf]
      %v4006 = vld [vmem:[%s273 + $0x4c] sm:$0xf]
      %v4007 = vld [vmem:[%s273 + $0x50] sm:$0xf]
      %v4008 = vld [vmem:[%s273 + $0x54] sm:$0xf]
      %v4009 = vld [vmem:[%s273 + $0x58] sm:$0xf]
      %v4010 = vld [vmem:[%s273 + $0x5c] sm:$0xf]
      %v4011 = vld [vmem:[%s273 + $0x60] sm:$0xf]
      %v4012 = vld [vmem:[%s273 + $0x64] sm:$0xf]
      %v4013 = vld [vmem:[%s273 + $0x68] sm:$0xf]
      %v4014 = vld [vmem:[%s273 + $0x6c] sm:$0xf]
      %v4015 = vld [vmem:[%s273 + $0x70] sm:$0xf]
      %v4016 = vld [vmem:[%s273 + $0x74] sm:$0xf]
      %v4017 = vld [vmem:[%s273 + $0x78] sm:$0xf]
      %v4018 = vld [vmem:[%s273 + $0x7c] sm:$0xf]
      %v4019 = vunpack.c.l.bf16 %v3987
      %v4020 = vunpack.c.l.bf16 %v3988
      %v4021 = vunpack.c.l.bf16 %v3989
      %v4022 = vunpack.c.l.bf16 %v3990
      %v4023 = vunpack.c.l.bf16 %v3991
      %v4024 = vunpack.c.l.bf16 %v3992
      %v4025 = vunpack.c.l.bf16 %v3993
      %v4026 = vunpack.c.l.bf16 %v3994
      %v4027 = vunpack.c.l.bf16 %v3995
      %v4028 = vunpack.c.l.bf16 %v3996
      %v4029 = vunpack.c.l.bf16 %v3997
      %v4030 = vunpack.c.l.bf16 %v3998
      %v4031 = vunpack.c.l.bf16 %v3999
      %v4032 = vunpack.c.l.bf16 %v4000
      %v4033 = vunpack.c.l.bf16 %v4001
      %v4034 = vunpack.c.l.bf16 %v4002
      %v4035 = vunpack.c.l.bf16 %v4003
      %v4036 = vunpack.c.l.bf16 %v4004
      %v4037 = vunpack.c.l.bf16 %v4005
      %v4038 = vunpack.c.l.bf16 %v4006
      %v4039 = vunpack.c.l.bf16 %v4007
      %v4040 = vunpack.c.l.bf16 %v4008
      %v4041 = vunpack.c.l.bf16 %v4009
      %v4042 = vunpack.c.l.bf16 %v4010
      %v4043 = vunpack.c.l.bf16 %v4011
      %v4044 = vunpack.c.l.bf16 %v4012
      %v4045 = vunpack.c.l.bf16 %v4013
      %v4046 = vunpack.c.l.bf16 %v4014
      %v4047 = vunpack.c.l.bf16 %v4015
      %v4048 = vunpack.c.l.bf16 %v4016
      %v4049 = vunpack.c.l.bf16 %v4017
      %v4050 = vunpack.c.l.bf16 %v4018
      %v4051 = vadd.f32 %v3955, %v4019
      %v4052 = vadd.f32 %v3956, %v4020
      %v4053 = vadd.f32 %v3957, %v4021
      %v4054 = vadd.f32 %v3958, %v4022
      %v4055 = vadd.f32 %v3959, %v4023
      %v4056 = vadd.f32 %v3960, %v4024
      %v4057 = vadd.f32 %v3961, %v4025
      %v4058 = vadd.f32 %v3962, %v4026
      %v4059 = vadd.f32 %v3963, %v4027
      %v4060 = vadd.f32 %v3964, %v4028
      %v4061 = vadd.f32 %v3965, %v4029
      %v4062 = vadd.f32 %v3966, %v4030
      %v4063 = vadd.f32 %v3967, %v4031
      %v4064 = vadd.f32 %v3968, %v4032
      %v4065 = vadd.f32 %v3969, %v4033
      %v4066 = vadd.f32 %v3970, %v4034
      %v4067 = vadd.f32 %v3971, %v4035
      %v4068 = vadd.f32 %v3972, %v4036
      %v4069 = vadd.f32 %v3973, %v4037
      %v4070 = vadd.f32 %v3974, %v4038
      %v4071 = vadd.f32 %v3975, %v4039
      %v4072 = vadd.f32 %v3976, %v4040
      %v4073 = vadd.f32 %v3977, %v4041
      %v4074 = vadd.f32 %v3978, %v4042
      %v4075 = vadd.f32 %v3979, %v4043
      %v4076 = vadd.f32 %v3980, %v4044
      %v4077 = vadd.f32 %v3981, %v4045
      %v4078 = vadd.f32 %v3982, %v4046
      %v4079 = vadd.f32 %v3983, %v4047
      %v4080 = vadd.f32 %v3984, %v4048
      %v4081 = vadd.f32 %v3985, %v4049
      %v4082 = vadd.f32 %v3986, %v4050
      %v4083 = vmax.f32 %v4051, 0.0
      %v4084 = vmax.f32 %v4052, 0.0
      %v4085 = vmax.f32 %v4053, 0.0
      %v4086 = vmax.f32 %v4054, 0.0
      %v4087 = vmax.f32 %v4055, 0.0
      %v4088 = vmax.f32 %v4056, 0.0
      %v4089 = vmax.f32 %v4057, 0.0
      %v4090 = vmax.f32 %v4058, 0.0
      %v4091 = vmax.f32 %v4059, 0.0
      %v4092 = vmax.f32 %v4060, 0.0
      %v4093 = vmax.f32 %v4061, 0.0
      %v4094 = vmax.f32 %v4062, 0.0
      %v4095 = vmax.f32 %v4063, 0.0
      %v4096 = vmax.f32 %v4064, 0.0
      %v4097 = vmax.f32 %v4065, 0.0
      %v4098 = vmax.f32 %v4066, 0.0
      %v4099 = vmax.f32 %v4067, 0.0
      %v4100 = vmax.f32 %v4068, 0.0
      %v4101 = vmax.f32 %v4069, 0.0
      %v4102 = vmax.f32 %v4070, 0.0
      %v4103 = vmax.f32 %v4071, 0.0
      %v4104 = vmax.f32 %v4072, 0.0
      %v4105 = vmax.f32 %v4073, 0.0
      %v4106 = vmax.f32 %v4074, 0.0
      %v4107 = vmax.f32 %v4075, 0.0
      %v4108 = vmax.f32 %v4076, 0.0
      %v4109 = vmax.f32 %v4077, 0.0
      %v4110 = vmax.f32 %v4078, 0.0
      %v4111 = vmax.f32 %v4079, 0.0
      %v4112 = vmax.f32 %v4080, 0.0
      %v4113 = vmax.f32 %v4081, 0.0
      %v4114 = vmax.f32 %v4082, 0.0
      %v4115 = vpack.c.bf16 %v4084, %v4083
      %v4116 = vpack.c.bf16 %v4086, %v4085
      %v4117 = vpack.c.bf16 %v4088, %v4087
      %v4118 = vpack.c.bf16 %v4090, %v4089
      %v4119 = vpack.c.bf16 %v4092, %v4091
      %v4120 = vpack.c.bf16 %v4094, %v4093
      %v4121 = vpack.c.bf16 %v4096, %v4095
      %v4122 = vpack.c.bf16 %v4098, %v4097
      %v4123 = vpack.c.bf16 %v4100, %v4099
      %v4124 = vpack.c.bf16 %v4102, %v4101
      %v4125 = vpack.c.bf16 %v4104, %v4103
      %v4126 = vpack.c.bf16 %v4106, %v4105
      %v4127 = vpack.c.bf16 %v4108, %v4107
      %v4128 = vpack.c.bf16 %v4110, %v4109
      %v4129 = vpack.c.bf16 %v4112, %v4111
      %v4130 = vpack.c.bf16 %v4114, %v4113
      %v4147 = vunpack.c.l.b16 %v4115
      %v4148 = vunpack.c.h.b16 %v4115
      %v4149 = vunpack.c.l.b16 %v4116
      %v4150 = vunpack.c.h.b16 %v4116
      %v4151 = vunpack.c.l.b16 %v4117
      %v4152 = vunpack.c.h.b16 %v4117
      %v4153 = vunpack.c.l.b16 %v4118
      %v4154 = vunpack.c.h.b16 %v4118
      %v4155 = vunpack.c.l.b16 %v4119
      %v4156 = vunpack.c.h.b16 %v4119
      %v4157 = vunpack.c.l.b16 %v4120
      %v4158 = vunpack.c.h.b16 %v4120
      %v4159 = vunpack.c.l.b16 %v4121
      %v4160 = vunpack.c.h.b16 %v4121
      %v4161 = vunpack.c.l.b16 %v4122
      %v4162 = vunpack.c.h.b16 %v4122
      %v4163 = vunpack.c.l.b16 %v4123
      %v4164 = vunpack.c.h.b16 %v4123
      %v4165 = vunpack.c.l.b16 %v4124
      %v4166 = vunpack.c.h.b16 %v4124
      %v4167 = vunpack.c.l.b16 %v4125
      %v4168 = vunpack.c.h.b16 %v4125
      %v4169 = vunpack.c.l.b16 %v4126
      %v4170 = vunpack.c.h.b16 %v4126
      %v4171 = vunpack.c.l.b16 %v4127
      %v4172 = vunpack.c.h.b16 %v4127
      %v4173 = vunpack.c.l.b16 %v4128
      %v4174 = vunpack.c.h.b16 %v4128
      %v4175 = vunpack.c.l.b16 %v4129
      %v4176 = vunpack.c.h.b16 %v4129
      %v4177 = vunpack.c.l.b16 %v4130
      %v4178 = vunpack.c.h.b16 %v4130
      %v4179 = vpack.c.b16 %v4147, %v4147
      %v4180 = vpack.c.b16 %v4148, %v4148
      %v4181 = vpack.c.b16 %v4149, %v4149
      %v4182 = vpack.c.b16 %v4150, %v4150
      %v4183 = vpack.c.b16 %v4151, %v4151
      %v4184 = vpack.c.b16 %v4152, %v4152
      %v4185 = vpack.c.b16 %v4153, %v4153
      %v4186 = vpack.c.b16 %v4154, %v4154
      %v4187 = vpack.c.b16 %v4155, %v4155
      %v4188 = vpack.c.b16 %v4156, %v4156
      %v4189 = vpack.c.b16 %v4157, %v4157
      %v4190 = vpack.c.b16 %v4158, %v4158
      %v4191 = vpack.c.b16 %v4159, %v4159
      %v4192 = vpack.c.b16 %v4160, %v4160
      %v4193 = vpack.c.b16 %v4161, %v4161
      %v4194 = vpack.c.b16 %v4162, %v4162
      %v4195 = vpack.c.b16 %v4163, %v4163
      %v4196 = vpack.c.b16 %v4164, %v4164
      %v4197 = vpack.c.b16 %v4165, %v4165
      %v4198 = vpack.c.b16 %v4166, %v4166
      %v4199 = vpack.c.b16 %v4167, %v4167
      %v4200 = vpack.c.b16 %v4168, %v4168
      %v4201 = vpack.c.b16 %v4169, %v4169
      %v4202 = vpack.c.b16 %v4170, %v4170
      %v4203 = vpack.c.b16 %v4171, %v4171
      %v4204 = vpack.c.b16 %v4172, %v4172
      %v4205 = vpack.c.b16 %v4173, %v4173
      %v4206 = vpack.c.b16 %v4174, %v4174
      %v4207 = vpack.c.b16 %v4175, %v4175
      %v4208 = vpack.c.b16 %v4176, %v4176
      %v4209 = vpack.c.b16 %v4177, %v4177
      %v4210 = vpack.c.b16 %v4178, %v4178
      %vm4243 = vcmask 125952
      %4244 = vst.msk [vmem:[%s278] sm:$0xf] %vm4243, %v4179
      %4245 = vst.msk [vmem:[%s278 + $0x4] sm:$0xf] %vm4243, %v4180
      %4246 = vst.msk [vmem:[%s278 + $0x8] sm:$0xf] %vm4243, %v4181
      %4247 = vst.msk [vmem:[%s278 + $0xc] sm:$0xf] %vm4243, %v4182
      %4248 = vst.msk [vmem:[%s278 + $0x10] sm:$0xf] %vm4243, %v4183
      %4249 = vst.msk [vmem:[%s278 + $0x14] sm:$0xf] %vm4243, %v4184
      %4250 = vst.msk [vmem:[%s278 + $0x18] sm:$0xf] %vm4243, %v4185
      %4251 = vst.msk [vmem:[%s278 + $0x1c] sm:$0xf] %vm4243, %v4186
      %4252 = vst.msk [vmem:[%s278 + $0x20] sm:$0xf] %vm4243, %v4187
      %4253 = vst.msk [vmem:[%s278 + $0x24] sm:$0xf] %vm4243, %v4188
      %4254 = vst.msk [vmem:[%s278 + $0x28] sm:$0xf] %vm4243, %v4189
      %4255 = vst.msk [vmem:[%s278 + $0x2c] sm:$0xf] %vm4243, %v4190
      %4256 = vst.msk [vmem:[%s278 + $0x30] sm:$0xf] %vm4243, %v4191
      %4257 = vst.msk [vmem:[%s278 + $0x34] sm:$0xf] %vm4243, %v4192
      %4258 = vst.msk [vmem:[%s278 + $0x38] sm:$0xf] %vm4243, %v4193
      %4259 = vst.msk [vmem:[%s278 + $0x3c] sm:$0xf] %vm4243, %v4194
      %4260 = vst.msk [vmem:[%s278 + $0x40] sm:$0xf] %vm4243, %v4195
      %4261 = vst.msk [vmem:[%s278 + $0x44] sm:$0xf] %vm4243, %v4196
      %4262 = vst.msk [vmem:[%s278 + $0x48] sm:$0xf] %vm4243, %v4197
      %4263 = vst.msk [vmem:[%s278 + $0x4c] sm:$0xf] %vm4243, %v4198
      %4264 = vst.msk [vmem:[%s278 + $0x50] sm:$0xf] %vm4243, %v4199
      %4265 = vst.msk [vmem:[%s278 + $0x54] sm:$0xf] %vm4243, %v4200
      %4266 = vst.msk [vmem:[%s278 + $0x58] sm:$0xf] %vm4243, %v4201
      %4267 = vst.msk [vmem:[%s278 + $0x5c] sm:$0xf] %vm4243, %v4202
      %4268 = vst.msk [vmem:[%s278 + $0x60] sm:$0xf] %vm4243, %v4203
      %4269 = vst.msk [vmem:[%s278 + $0x64] sm:$0xf] %vm4243, %v4204
      %4270 = vst.msk [vmem:[%s278 + $0x68] sm:$0xf] %vm4243, %v4205
      %4271 = vst.msk [vmem:[%s278 + $0x6c] sm:$0xf] %vm4243, %v4206
      %4272 = vst.msk [vmem:[%s278 + $0x70] sm:$0xf] %vm4243, %v4207
      %4273 = vst.msk [vmem:[%s278 + $0x74] sm:$0xf] %vm4243, %v4208
      %4274 = vst.msk [vmem:[%s278 + $0x78] sm:$0xf] %vm4243, %v4209
      %4275 = vst.msk [vmem:[%s278 + $0x7c] sm:$0xf] %vm4243, %v4210
      %p4276 = scmp.lt.s32.totalorder %s18, 1
      %s4277 = scalar_select %p4276, %s18, 1
      %s4278 = smul.addr %s4277, 32
      %s4279 = smul.addr %s4278, 4
      %s4280 = scalar_lea.vmem %s7, %s4279
      // Predicated region
      $region49: #{tpu_custom_call.1} parent=47 // pred_check
        %p4281 = pneg %p188
      $region50: #{tpu_custom_call.1} parent=47 // pred_check_branch
        %4283 = sbr.rel (%p4281) target = $region52
      $region51: #{tpu_custom_call.1} parent=47 // pred_region
        _
      $region52: #{tpu_custom_call.1} parent=47 // pred_fallthru
        _
    $region48: #{tpu_custom_call.1} parent=5 // pred_fallthru
      _
    %p4284 = scmp.le.s32.totalorder 2, %s13
    // Predicated region
    $region53: #{tpu_custom_call.1} parent=5 // pred_check
      %p4285 = pneg %p4284
    $region54: #{tpu_custom_call.1} parent=5 // pred_check_branch
      %4287 = sbr.rel (%p4285) target = $region56
    $region55: #{tpu_custom_call.1} parent=5 // pred_region
      %s4288 = ssub.s32 %s13, 2
      // Predicated region
      $region57: #{tpu_custom_call.1} parent=55 // pred_check
        %p4289 = pneg %p194
      $region58: #{tpu_custom_call.1} parent=55 // pred_check_branch
        %4291 = sbr.rel (%p4289) target = $region60
      $region59: #{tpu_custom_call.1} parent=55 // pred_region
        %p4292 = scmp.lt.s32.totalorder %s19, 1
        %s4293 = scalar_select %p4292, %s19, 1
        %s4294 = smul.addr %s4293, 32
        %s4295 = smul.addr %s4294, 4
        %s4296 = scalar_lea.vmem %s7, %s4295
      $region60: #{tpu_custom_call.1} parent=55 // pred_fallthru
        _
    $region56: #{tpu_custom_call.1} parent=5 // pred_fallthru
      _
  $region6: #{tpu_custom_call.1} parent=0 // loop_footer
    %s17 = sadd.s32 1, %s13
  $region7: #{tpu_custom_call.1} parent=0 // loop_footer_branch
    %12 = sbr.rel target = $region3
  $region8: #{tpu_custom_call.1} parent=0 // loop_exit
    _

</llo_original>
